<compile_context>
chip_gen: v7x
topology: tpu7x:2x2x1
jax: 0.10.0
libtpu: 0.0.40
codegen_flags: <defaults>
</compile_context>

<pallas_src>
import functools

import jax
import jax.numpy as jnp
from jax.experimental import pallas as pl
from jax.experimental.pallas import tpu as pltpu

NUM_CLASSES = 10
CONV_FILTERS = 16
LANE = 128          # lane-dense padded width for the classifier head / output


# ---------------------------------------------------------------------------
# Pallas kernels
# ---------------------------------------------------------------------------
def _expert_core(patches_ref, conv_w_ref, conv_b_ref, fc_w_ref, fc_b_ref, tb):
    """conv-as-matmul + ReLU + global-avg-pool + linear head for one batch tile."""
    hw = patches_ref.shape[0] // tb
    f = conv_w_ref.shape[1]
    # (tb*HW, 9C) bf16 @ (9C, F) bf16 -> (tb*HW, F), f32 accumulation on MXU.
    h = jnp.dot(patches_ref[...], conv_w_ref[...],
                preferred_element_type=jnp.float32)
    h = jnp.maximum(h + conv_b_ref[...], 0.0)                      # bias + ReLU
    # Global average pool as a cross-sublane mean (XLU) — no pooling matmul.
    pooled = jnp.mean(h.reshape(tb, hw, f), axis=1)                # (tb, F)
    # Classifier head padded to 128 lanes -> unmasked, lane-dense store.
    return (jnp.dot(pooled, fc_w_ref[...],
                    preferred_element_type=jnp.float32)
            + fc_b_ref[...])                                       # (tb, 128)


def expert_kernel(patches_ref, conv_w_ref, conv_b_ref, fc_w_ref, fc_b_ref,
                  out_ref):
    out_ref[...] = _expert_core(patches_ref, conv_w_ref, conv_b_ref,
                                fc_w_ref, fc_b_ref, tb=out_ref.shape[0])


def expert_mix_kernel(gate_ref, patches_ref, conv_w_ref, conv_b_ref,
                      fc_w_ref, fc_b_ref, other_ref, out_ref):
    """Second expert with the MOE mix fused into its finalize.

    out = w * other_expert_score + (1 - w) * this_expert_score,
    with the gate scalar read from SMEM.
    """
    score = _expert_core(patches_ref, conv_w_ref, conv_b_ref,
                         fc_w_ref, fc_b_ref, tb=out_ref.shape[0])
    w = gate_ref[0, 0]
    out_ref[...] = w * other_ref[...] + (1.0 - w) * score


# ---------------------------------------------------------------------------
# pallas_call wrappers
# ---------------------------------------------------------------------------
def _weight_specs(kdim, f):
    # Weights/bias stay VMEM-resident across all batch tiles (constant maps).
    return [
        pl.BlockSpec((kdim, f), lambda i: (0, 0)),     # conv_w (bf16)
        pl.BlockSpec((1, f), lambda i: (0, 0)),        # conv_b (f32)
        pl.BlockSpec((f, LANE), lambda i: (0, 0)),     # fc_w, lane-padded
        pl.BlockSpec((1, LANE), lambda i: (0, 0)),     # fc_b, lane-padded
    ]


def _compiler_params():
    return pltpu.CompilerParams(
        dimension_semantics=("parallel",),             # independent batch tiles
        vmem_limit_bytes=32 * 1024 * 1024,             # safe on v5e/v6e/v7x
    )


def _cost(b_pad, hw, kdim, f):
    flops = 2 * b_pad * hw * kdim * f + 2 * b_pad * f * LANE
    bytes_accessed = (b_pad * hw * kdim * 2            # bf16 patches
                      + kdim * f * 2                   # bf16 conv_w
                      + (f + 2) * LANE * 4             # fc_w / fc_b / conv_b
                      + 2 * b_pad * LANE * 4)          # scores in/out
    return pl.CostEstimate(flops=flops, transcendentals=0,
                           bytes_accessed=bytes_accessed)


def expert_forward(patches, conv_w, conv_b, fc_w_pad, fc_b_pad, *, tb, hw):
    rows, kdim = patches.shape
    b_pad = rows // hw
    f = conv_w.shape[1]
    return pl.pallas_call(
        expert_kernel,
        out_shape=jax.ShapeDtypeStruct((b_pad, LANE), jnp.float32),
        grid=(b_pad // tb,),
        in_specs=[pl.BlockSpec((tb * hw, kdim), lambda i: (i, 0))]
                 + _weight_specs(kdim, f),
        out_specs=pl.BlockSpec((tb, LANE), lambda i: (i, 0)),
        compiler_params=_compiler_params(),
        cost_estimate=_cost(b_pad, hw, kdim, f),
    )(patches, conv_w, conv_b, fc_w_pad, fc_b_pad)


def expert_mix_forward(gate, patches, conv_w, conv_b, fc_w_pad, fc_b_pad,
                       other_scores, *, tb, hw):
    rows, kdim = patches.shape
    b_pad = rows // hw
    f = conv_w.shape[1]
    return pl.pallas_call(
        expert_mix_kernel,
        out_shape=jax.ShapeDtypeStruct((b_pad, LANE), jnp.float32),
        grid=(b_pad // tb,),
        in_specs=[pl.BlockSpec(memory_space=pltpu.MemorySpace.SMEM)]   # gate
                 + [pl.BlockSpec((tb * hw, kdim), lambda i: (i, 0))]
                 + _weight_specs(kdim, f)
                 + [pl.BlockSpec((tb, LANE), lambda i: (i, 0))],        # other score
        out_specs=pl.BlockSpec((tb, LANE), lambda i: (i, 0)),
        compiler_params=_compiler_params(),
        cost_estimate=_cost(b_pad, hw, kdim, f),
    )(gate, patches, conv_w, conv_b, fc_w_pad, fc_b_pad, other_scores)


# ---------------------------------------------------------------------------
# Glue (im2col, parameter init/prep, gate MLP, NCHW handling)
# ---------------------------------------------------------------------------
def im2col_3x3_same(x_nhwc):
    """3x3 SAME im2col: (B, H, W, C) -> (B*H*W, 9*C)."""
    b, h, w, c = x_nhwc.shape
    xp = jnp.pad(x_nhwc, ((0, 0), (1, 1), (1, 1), (0, 0)))
    cols = []
    for di in range(3):
        for dj in range(3):
            cols.append(xp[:, di:di + h, dj:dj + w, :])
    p = jnp.stack(cols, axis=3)                      # (B, H, W, 9, C)
    return p.reshape(b * h * w, 9 * c)


def init_expert_params(key, c_in):
    k1, k2, k3, k4 = jax.random.split(key, 4)
    kdim = 9 * c_in
    return {
        "conv_w": 0.1 * jax.random.normal(k1, (kdim, CONV_FILTERS), jnp.float32),
        "conv_b": 0.1 * jax.random.normal(k2, (1, CONV_FILTERS), jnp.float32),
        "fc_w": 0.1 * jax.random.normal(k3, (CONV_FILTERS, NUM_CLASSES), jnp.float32),
        "fc_b": 0.1 * jax.random.normal(k4, (1, NUM_CLASSES), jnp.float32),
    }


def init_gate_params(key):
    k1, k2, k3, k4 = jax.random.split(key, 4)
    return {
        "w1": 0.5 * jax.random.normal(k1, (1, 8), jnp.float32),
        "b1": 0.5 * jax.random.normal(k2, (1, 8), jnp.float32),
        "w2": 0.5 * jax.random.normal(k3, (8, 1), jnp.float32),
        "b2": 0.5 * jax.random.normal(k4, (1, 1), jnp.float32),
    }


def _prep_expert(p):
    """bf16 conv weights for the MXU + classifier head padded to 128 lanes."""
    f = p["conv_w"].shape[1]
    fc_w_pad = jnp.zeros((f, LANE), jnp.float32).at[:, :NUM_CLASSES].set(p["fc_w"])
    fc_b_pad = jnp.zeros((1, LANE), jnp.float32).at[:, :NUM_CLASSES].set(p["fc_b"])
    return p["conv_w"].astype(jnp.bfloat16), p["conv_b"], fc_w_pad, fc_b_pad


def gate_forward(params, num_channels):
    # nn.Sequential(Linear(1,8), Sigmoid, Linear(8,1), Sigmoid) on [[C]].
    # Tiny scalar MLP (17 params) -> plain-JAX glue; its (1,1) output is fed
    # to the CIFAR kernel through SMEM.
    g_in = jnp.array([[float(num_channels)]], dtype=jnp.float32)
    h = jax.nn.sigmoid(g_in @ params["w1"] + params["b1"])
    return jax.nn.sigmoid(h @ params["w2"] + params["b2"])          # (1, 1)


def get_cifar_image(x_nchw):
    """Replicates MOE._get_cifar_image for NCHW input."""
    b, c, h, w = x_nchw.shape
    if c != 3:
        z = jnp.zeros((b, 3, 32, 32), dtype=jnp.float32)
        patch = x_nchw[:, 0, :, :]
        z = z.at[:, 0, :28, :28].set(patch[:, :28, :28])
        z = z.at[:, 1, :28, :28].set(patch[:, :28, :28])
        z = z.at[:, 2, :28, :28].set(patch[:, :28, :28])
        return z
    return x_nchw


def _pick_tile(b, target=8):
    """Whole batch if small; otherwise 8-row tiles (tb % 8 == 0)."""
    return b if b <= target else target


@functools.partial(jax.jit, static_argnames=("num_channels",))
def moe_forward(params, x_nchw, num_channels):
    b = x_nchw.shape[0]
    tb = _pick_tile(b)
    b_pad = -(-b // tb) * tb

    def pad_batch(img_nhwc):
        return jnp.pad(img_nhwc, ((0, b_pad - b), (0, 0), (0, 0), (0, 0)))

    # gate on the (static) channel count, exactly as torch.tensor([[x.shape[1]]])
    weights = gate_forward(params["gate"], num_channels)             # (1, 1)

    # --- MNIST expert on x[:, :1, :28, :28] ---------------------------------
    x_mnist = jnp.transpose(x_nchw[:, :1, :28, :28], (0, 2, 3, 1))   # NHWC
    mnist_patches = im2col_3x3_same(pad_batch(x_mnist)).astype(jnp.bfloat16)
    conv_w, conv_b, fc_w_pad, fc_b_pad = _prep_expert(params["mnist"])
    mnist_scores = expert_forward(mnist_patches, conv_w, conv_b,
                                  fc_w_pad, fc_b_pad,
                                  tb=tb, hw=28 * 28)                 # (b_pad, 128)

    # --- CIFAR expert (+ fused gate mix) on the 3x32x32 image ----------------
    x_cifar = jnp.transpose(get_cifar_image(x_nchw), (0, 2, 3, 1))
    cifar_patches = im2col_3x3_same(pad_batch(x_cifar)).astype(jnp.bfloat16)
    conv_w, conv_b, fc_w_pad, fc_b_pad = _prep_expert(params["cifar"])
    mixed = expert_mix_forward(weights, cifar_patches, conv_w, conv_b,
                               fc_w_pad, fc_b_pad, mnist_scores,
                               tb=tb, hw=32 * 32)                    # (b_pad, 128)

    # slice the lane-padded / batch-padded slab back to the logical scores
    return mixed[:b, :NUM_CLASSES], weights


if __name__ == "__main__":
    root = jax.random.PRNGKey(0)
    k_gate, k_mnist, k_cifar, k_x = jax.random.split(root, 4)

    params = {
        "gate": init_gate_params(k_gate),
        "mnist": init_expert_params(k_mnist, c_in=1),
        "cifar": init_expert_params(k_cifar, c_in=3),
    }

    # MNIST-style input, NCHW as in PyTorch: (batch=2, channels=1, 28, 28)
    x = jax.random.normal(k_x, (2, 1, 28, 28), dtype=jnp.float32)

    score, weights = moe_forward(params, x, num_channels=x.shape[1])
    jax.block_until_ready(score)
    jax.block_until_ready(weights)

    assert score.shape == (2, NUM_CLASSES)
    assert weights.shape == (1, 1)
    assert bool(jnp.all(jnp.isfinite(score)))
    print("KERNEL_OK")
</pallas_src>

<mosaic_0001>
module attributes {stable_mosaic.version = 11 : i64} {
  func.func @expert_kernel(%arg0: i32, %arg1: memref<1568x9xbf16, #tpu.memory_space<vmem>>, %arg2: memref<9x16xbf16, #tpu.memory_space<vmem>>, %arg3: memref<1x16xf32, #tpu.memory_space<vmem>>, %arg4: memref<16x128xf32, #tpu.memory_space<vmem>>, %arg5: memref<1x128xf32, #tpu.memory_space<vmem>>, %arg6: memref<2x128xf32, #tpu.memory_space<vmem>>) attributes {dimension_semantics = [#tpu.dimension_semantics<parallel>], iteration_bounds = array<i64: 1>, scalar_prefetch = 0 : i64, scratch_operands = 0 : i64, tpu.core_type = #tpu.core_type<tc>, window_params = [{transform_indices = @transform_0, window_bounds = array<i64: 1568, 9>}, {pipeline_mode = #tpu.pipeline_mode<synchronous>, transform_indices = @transform_1, window_bounds = array<i64: 9, 16>}, {pipeline_mode = #tpu.pipeline_mode<synchronous>, transform_indices = @transform_2, window_bounds = array<i64: 1, 16>}, {pipeline_mode = #tpu.pipeline_mode<synchronous>, transform_indices = @transform_3, window_bounds = array<i64: 16, 128>}, {pipeline_mode = #tpu.pipeline_mode<synchronous>, transform_indices = @transform_4, window_bounds = array<i64: 1, 128>}, {transform_indices = @transform_5, window_bounds = array<i64: 2, 128>}]} {
    %c0 = arith.constant 0 : index
    %c0_0 = arith.constant 0 : index
    %0 = vector.load %arg1[%c0, %c0_0] : memref<1568x9xbf16, #tpu.memory_space<vmem>>, vector<1568x9xbf16>
    %c0_1 = arith.constant 0 : index
    %c0_2 = arith.constant 0 : index
    %1 = vector.load %arg2[%c0_1, %c0_2] : memref<9x16xbf16, #tpu.memory_space<vmem>>, vector<9x16xbf16>
    %cst = arith.constant dense<0.000000e+00> : vector<1568x16xf32>
    %2 = tpu.matmul %0, %1, %cst {dimension_numbers = #tpu.dot_dimension_numbers<[1], [0], [0], [1], [0, 0, 1, 1], [], []>} : vector<1568x9xbf16>, vector<9x16xbf16>, vector<1568x16xf32> -> vector<1568x16xf32>
    %c0_3 = arith.constant 0 : index
    %c0_4 = arith.constant 0 : index
    %3 = vector.load %arg3[%c0_3, %c0_4] : memref<1x16xf32, #tpu.memory_space<vmem>>, vector<1x16xf32>
    %4 = vector.broadcast %3 : vector<1x16xf32> to vector<1568x16xf32>
    %5 = arith.addf %2, %4 : vector<1568x16xf32>
    %cst_5 = arith.constant 0.000000e+00 : f32
    %6 = vector.broadcast %cst_5 : f32 to vector<1568x16xf32>
    %7 = arith.maximumf %5, %6 : vector<1568x16xf32>
    %8 = vector.shape_cast %7 : vector<1568x16xf32> to vector<2x784x16xf32>
    %cst_6 = arith.constant dense<0.000000e+00> : vector<2x16xf32>
    %9 = vector.multi_reduction <add>, %8, %cst_6 [1] : vector<2x784x16xf32> to vector<2x16xf32>
    %cst_7 = arith.constant 7.840000e+02 : f32
    %10 = vector.broadcast %cst_7 : f32 to vector<2x16xf32>
    %11 = arith.divf %9, %10 : vector<2x16xf32>
    %c0_8 = arith.constant 0 : index
    %c0_9 = arith.constant 0 : index
    %12 = vector.load %arg4[%c0_8, %c0_9] : memref<16x128xf32, #tpu.memory_space<vmem>>, vector<16x128xf32>
    %cst_10 = arith.constant dense<0.000000e+00> : vector<2x128xf32>
    %13 = tpu.matmul %11, %12, %cst_10 {dimension_numbers = #tpu.dot_dimension_numbers<[1], [0], [0], [1], [0, 0, 1, 1], [], []>} : vector<2x16xf32>, vector<16x128xf32>, vector<2x128xf32> -> vector<2x128xf32>
    %c0_11 = arith.constant 0 : index
    %c0_12 = arith.constant 0 : index
    %14 = vector.load %arg5[%c0_11, %c0_12] : memref<1x128xf32, #tpu.memory_space<vmem>>, vector<1x128xf32>
    %15 = vector.broadcast %14 : vector<1x128xf32> to vector<2x128xf32>
    %16 = arith.addf %13, %15 : vector<2x128xf32>
    %c0_13 = arith.constant 0 : index
    %c0_14 = arith.constant 0 : index
    %17 = vector.load %arg6[%c0_13, %c0_14] : memref<2x128xf32, #tpu.memory_space<vmem>>, vector<2x128xf32>
    tpu.vector_store %arg6[%c0_13, %c0_14], %16 {strides = array<i32>} : memref<2x128xf32, #tpu.memory_space<vmem>>, vector<2x128xf32>,
    return
  }
  func.func @transform_0(%arg0: i32) -> (i32, i32) {
    %c0_i32 = arith.constant 0 : i32
    %c0_i32_0 = arith.constant 0 : i32
    return %arg0, %c0_i32 : i32, i32
  }
  func.func @transform_1(%arg0: i32) -> (i32, i32) {
    %c0_i32 = arith.constant 0 : i32
    %c0_i32_0 = arith.constant 0 : i32
    %c0_i32_1 = arith.constant 0 : i32
    return %c0_i32, %c0_i32_0 : i32, i32
  }
  func.func @transform_2(%arg0: i32) -> (i32, i32) {
    %c0_i32 = arith.constant 0 : i32
    %c0_i32_0 = arith.constant 0 : i32
    %c0_i32_1 = arith.constant 0 : i32
    return %c0_i32, %c0_i32_0 : i32, i32
  }
  func.func @transform_3(%arg0: i32) -> (i32, i32) {
    %c0_i32 = arith.constant 0 : i32
    %c0_i32_0 = arith.constant 0 : i32
    %c0_i32_1 = arith.constant 0 : i32
    return %c0_i32, %c0_i32_0 : i32, i32
  }
  func.func @transform_4(%arg0: i32) -> (i32, i32) {
    %c0_i32 = arith.constant 0 : i32
    %c0_i32_0 = arith.constant 0 : i32
    %c0_i32_1 = arith.constant 0 : i32
    return %c0_i32, %c0_i32_0 : i32, i32
  }
  func.func @transform_5(%arg0: i32) -> (i32, i32) {
    %c0_i32 = arith.constant 0 : i32
    %c0_i32_0 = arith.constant 0 : i32
    return %arg0, %c0_i32 : i32, i32
  }
}

module attributes {stable_mosaic.version = 11 : i64} {
  func.func @expert_mix_kernel(%arg0: i32, %arg1: memref<1x1xf32, #tpu.memory_space<smem>>, %arg2: memref<2048x27xbf16, #tpu.memory_space<vmem>>, %arg3: memref<27x16xbf16, #tpu.memory_space<vmem>>, %arg4: memref<1x16xf32, #tpu.memory_space<vmem>>, %arg5: memref<16x128xf32, #tpu.memory_space<vmem>>, %arg6: memref<1x128xf32, #tpu.memory_space<vmem>>, %arg7: memref<2x128xf32, #tpu.memory_space<vmem>>, %arg8: memref<2x128xf32, #tpu.memory_space<vmem>>) attributes {dimension_semantics = [#tpu.dimension_semantics<parallel>], iteration_bounds = array<i64: 1>, scalar_prefetch = 0 : i64, scratch_operands = 0 : i64, tpu.core_type = #tpu.core_type<tc>, window_params = [{transform_indices = @transform_0, window_bounds = array<i64: 1, 1>}, {transform_indices = @transform_1, window_bounds = array<i64: 2048, 27>}, {pipeline_mode = #tpu.pipeline_mode<synchronous>, transform_indices = @transform_2, window_bounds = array<i64: 27, 16>}, {pipeline_mode = #tpu.pipeline_mode<synchronous>, transform_indices = @transform_3, window_bounds = array<i64: 1, 16>}, {pipeline_mode = #tpu.pipeline_mode<synchronous>, transform_indices = @transform_4, window_bounds = array<i64: 16, 128>}, {pipeline_mode = #tpu.pipeline_mode<synchronous>, transform_indices = @transform_5, window_bounds = array<i64: 1, 128>}, {transform_indices = @transform_6, window_bounds = array<i64: 2, 128>}, {transform_indices = @transform_7, window_bounds = array<i64: 2, 128>}]} {
    %c0 = arith.constant 0 : index
    %c0_0 = arith.constant 0 : index
    %0 = vector.load %arg2[%c0, %c0_0] : memref<2048x27xbf16, #tpu.memory_space<vmem>>, vector<2048x27xbf16>
    %c0_1 = arith.constant 0 : index
    %c0_2 = arith.constant 0 : index
    %1 = vector.load %arg3[%c0_1, %c0_2] : memref<27x16xbf16, #tpu.memory_space<vmem>>, vector<27x16xbf16>
    %cst = arith.constant dense<0.000000e+00> : vector<2048x16xf32>
    %2 = tpu.matmul %0, %1, %cst {dimension_numbers = #tpu.dot_dimension_numbers<[1], [0], [0], [1], [0, 0, 1, 1], [], []>} : vector<2048x27xbf16>, vector<27x16xbf16>, vector<2048x16xf32> -> vector<2048x16xf32>
    %c0_3 = arith.constant 0 : index
    %c0_4 = arith.constant 0 : index
    %3 = vector.load %arg4[%c0_3, %c0_4] : memref<1x16xf32, #tpu.memory_space<vmem>>, vector<1x16xf32>
    %4 = vector.broadcast %3 : vector<1x16xf32> to vector<2048x16xf32>
    %5 = arith.addf %2, %4 : vector<2048x16xf32>
    %cst_5 = arith.constant 0.000000e+00 : f32
    %6 = vector.broadcast %cst_5 : f32 to vector<2048x16xf32>
    %7 = arith.maximumf %5, %6 : vector<2048x16xf32>
    %8 = vector.shape_cast %7 : vector<2048x16xf32> to vector<2x1024x16xf32>
    %cst_6 = arith.constant dense<0.000000e+00> : vector<2x16xf32>
    %9 = vector.multi_reduction <add>, %8, %cst_6 [1] : vector<2x1024x16xf32> to vector<2x16xf32>
    %cst_7 = arith.constant 1.024000e+03 : f32
    %10 = vector.broadcast %cst_7 : f32 to vector<2x16xf32>
    %11 = arith.divf %9, %10 : vector<2x16xf32>
    %c0_8 = arith.constant 0 : index
    %c0_9 = arith.constant 0 : index
    %12 = vector.load %arg5[%c0_8, %c0_9] : memref<16x128xf32, #tpu.memory_space<vmem>>, vector<16x128xf32>
    %cst_10 = arith.constant dense<0.000000e+00> : vector<2x128xf32>
    %13 = tpu.matmul %11, %12, %cst_10 {dimension_numbers = #tpu.dot_dimension_numbers<[1], [0], [0], [1], [0, 0, 1, 1], [], []>} : vector<2x16xf32>, vector<16x128xf32>, vector<2x128xf32> -> vector<2x128xf32>
    %c0_11 = arith.constant 0 : index
    %c0_12 = arith.constant 0 : index
    %14 = vector.load %arg6[%c0_11, %c0_12] : memref<1x128xf32, #tpu.memory_space<vmem>>, vector<1x128xf32>
    %15 = vector.broadcast %14 : vector<1x128xf32> to vector<2x128xf32>
    %16 = arith.addf %13, %15 : vector<2x128xf32>
    %c0_13 = arith.constant 0 : index
    %c0_14 = arith.constant 0 : index
    %17 = memref.load %arg1[%c0_13, %c0_14] : memref<1x1xf32, #tpu.memory_space<smem>>
    %c0_15 = arith.constant 0 : index
    %c0_16 = arith.constant 0 : index
    %18 = vector.load %arg7[%c0_15, %c0_16] : memref<2x128xf32, #tpu.memory_space<vmem>>, vector<2x128xf32>
    %19 = vector.broadcast %17 : f32 to vector<2x128xf32>
    %20 = arith.mulf %19, %18 : vector<2x128xf32>
    %cst_17 = arith.constant 1.000000e+00 : f32
    %21 = arith.subf %cst_17, %17 : f32
    %22 = vector.broadcast %21 : f32 to vector<2x128xf32>
    %23 = arith.mulf %22, %16 : vector<2x128xf32>
    %24 = arith.addf %20, %23 : vector<2x128xf32>
    %c0_18 = arith.constant 0 : index
    %c0_19 = arith.constant 0 : index
    %25 = vector.load %arg8[%c0_18, %c0_19] : memref<2x128xf32, #tpu.memory_space<vmem>>, vector<2x128xf32>
    tpu.vector_store %arg8[%c0_18, %c0_19], %24 {strides = array<i32>} : memref<2x128xf32, #tpu.memory_space<vmem>>, vector<2x128xf32>,
    return
  }
  func.func @transform_0(%arg0: i32) -> (i32, i32) {
    %c0_i32 = arith.constant 0 : i32
    %c0_i32_0 = arith.constant 0 : i32
    %c0_i32_1 = arith.constant 0 : i32
    return %c0_i32, %c0_i32_0 : i32, i32
  }
  func.func @transform_1(%arg0: i32) -> (i32, i32) {
    %c0_i32 = arith.constant 0 : i32
    %c0_i32_0 = arith.constant 0 : i32
    return %arg0, %c0_i32 : i32, i32
  }
  func.func @transform_2(%arg0: i32) -> (i32, i32) {
    %c0_i32 = arith.constant 0 : i32
    %c0_i32_0 = arith.constant 0 : i32
    %c0_i32_1 = arith.constant 0 : i32
    return %c0_i32, %c0_i32_0 : i32, i32
  }
  func.func @transform_3(%arg0: i32) -> (i32, i32) {
    %c0_i32 = arith.constant 0 : i32
    %c0_i32_0 = arith.constant 0 : i32
    %c0_i32_1 = arith.constant 0 : i32
    return %c0_i32, %c0_i32_0 : i32, i32
  }
  func.func @transform_4(%arg0: i32) -> (i32, i32) {
    %c0_i32 = arith.constant 0 : i32
    %c0_i32_0 = arith.constant 0 : i32
    %c0_i32_1 = arith.constant 0 : i32
    return %c0_i32, %c0_i32_0 : i32, i32
  }
  func.func @transform_5(%arg0: i32) -> (i32, i32) {
    %c0_i32 = arith.constant 0 : i32
    %c0_i32_0 = arith.constant 0 : i32
    %c0_i32_1 = arith.constant 0 : i32
    return %c0_i32, %c0_i32_0 : i32, i32
  }
  func.func @transform_6(%arg0: i32) -> (i32, i32) {
    %c0_i32 = arith.constant 0 : i32
    %c0_i32_0 = arith.constant 0 : i32
    return %arg0, %c0_i32 : i32, i32
  }
  func.func @transform_7(%arg0: i32) -> (i32, i32) {
    %c0_i32 = arith.constant 0 : i32
    %c0_i32_0 = arith.constant 0 : i32
    return %arg0, %c0_i32 : i32, i32
  }
}

</mosaic_0001>

<llo_original>
// kernel: moe_forward.2
$region0: #{moe_forward.2}
  #allocation0 [shape = 'u32[]', space=smem, size = 0x4, offset = 0x4, fixed_abs, tag = 'smem constant byte address 0x4 - core index']
  #allocation1 [shape = 'u32[144,128]{1,0:T(1,128)}', space=vmem, size = 0x12000, scoped, tag = 'internal scratch']
  %s0 = inlined_call_operand.vmem [shape: bf16[1568,9], index: 0, kind: input, shape index: {}]
  %s1 = inlined_call_operand.vmem [shape: bf16[9,16], index: 1, kind: input, shape index: {}]
  %s2 = inlined_call_operand.vmem [shape: f32[1,16], index: 2, kind: input, shape index: {}]
  %s3 = inlined_call_operand.vmem [shape: f32[16,128], index: 3, kind: input, shape index: {}]
  %s4 = inlined_call_operand.vmem [shape: f32[1,128], index: 4, kind: input, shape index: {}]
  %s5 = inlined_call_operand.vmem [shape: f32[2,128], index: 5, kind: output, shape index: {}]
  %s6 = sld [smem:[#allocation0]]
  $region30: #{moe_forward.2} parent=0
    _
  %s8 = ssub.s32 1, %s6
  %s9 = scalar_select 0, %s8, %s6
  // Predicated region
  $region2: #{moe_forward.2} parent=0 // pred_check
    _
  $region3: #{moe_forward.2} parent=0 // pred_check_branch
    %11 = sbr.rel (0) target = $region5
  $region4: #{moe_forward.2} parent=0 // pred_region
    _
  $region5: #{moe_forward.2} parent=0 // pred_fallthru
    _
  // Predicated region
  $region6: #{moe_forward.2} parent=0 // pred_check
    _
  $region7: #{moe_forward.2} parent=0 // pred_check_branch
    %13 = sbr.rel (0) target = $region9
  $region8: #{moe_forward.2} parent=0 // pred_region
    _
  $region9: #{moe_forward.2} parent=0 // pred_fallthru
    _
  // Predicated region
  $region10: #{moe_forward.2} parent=0 // pred_check
    _
  $region11: #{moe_forward.2} parent=0 // pred_check_branch
    %15 = sbr.rel (0) target = $region13
  $region12: #{moe_forward.2} parent=0 // pred_region
    _
  $region13: #{moe_forward.2} parent=0 // pred_fallthru
    _
  // Predicated region
  $region14: #{moe_forward.2} parent=0 // pred_check
    _
  $region15: #{moe_forward.2} parent=0 // pred_check_branch
    %17 = sbr.rel (0) target = $region17
  $region16: #{moe_forward.2} parent=0 // pred_region
    _
  $region17: #{moe_forward.2} parent=0 // pred_fallthru
    _
  // Predicated region
  $region18: #{moe_forward.2} parent=0 // pred_check
    _
  $region19: #{moe_forward.2} parent=0 // pred_check_branch
    %19 = sbr.rel (0) target = $region21
  $region20: #{moe_forward.2} parent=0 // pred_region
    _
  $region21: #{moe_forward.2} parent=0 // pred_fallthru
    _
  %v21 = vld [vmem:[%s0] sm:$0xf]
  %v22 = vld [vmem:[%s0 + $0x4] sm:$0xf]
  %v23 = vld [vmem:[%s0 + $0x8] sm:$0xf]
  %v24 = vld [vmem:[%s0 + $0xc] sm:$0xf]
  %v25 = vld [vmem:[%s0 + $0x10] sm:$0xf]
  %v26 = vld [vmem:[%s0 + $0x14] sm:$0xf]
  %v27 = vld [vmem:[%s0 + $0x18] sm:$0xf]
  %v28 = vld [vmem:[%s0 + $0x1c] sm:$0xf]
  %v29 = vld [vmem:[%s0 + $0x20] sm:$0xf]
  %v30 = vld [vmem:[%s0 + $0x24] sm:$0xf]
  %v31 = vld [vmem:[%s0 + $0x28] sm:$0xf]
  %v32 = vld [vmem:[%s0 + $0x2c] sm:$0xf]
  %v33 = vld [vmem:[%s0 + $0x30] sm:$0xf]
  %v34 = vld [vmem:[%s0 + $0x34] sm:$0xf]
  %v35 = vld [vmem:[%s0 + $0x38] sm:$0xf]
  %v36 = vld [vmem:[%s0 + $0x3c] sm:$0xf]
  %v37 = vld [vmem:[%s0 + $0x40] sm:$0xf]
  %v38 = vld [vmem:[%s0 + $0x44] sm:$0xf]
  %v39 = vld [vmem:[%s0 + $0x48] sm:$0xf]
  %v40 = vld [vmem:[%s0 + $0x4c] sm:$0xf]
  %v41 = vld [vmem:[%s0 + $0x50] sm:$0xf]
  %v42 = vld [vmem:[%s0 + $0x54] sm:$0xf]
  %v43 = vld [vmem:[%s0 + $0x58] sm:$0xf]
  %v44 = vld [vmem:[%s0 + $0x5c] sm:$0xf]
  %v45 = vld [vmem:[%s0 + $0x60] sm:$0xf]
  %v46 = vld [vmem:[%s0 + $0x64] sm:$0xf]
  %v47 = vld [vmem:[%s0 + $0x68] sm:$0xf]
  %v48 = vld [vmem:[%s0 + $0x6c] sm:$0xf]
  %v49 = vld [vmem:[%s0 + $0x70] sm:$0xf]
  %v50 = vld [vmem:[%s0 + $0x74] sm:$0xf]
  %v51 = vld [vmem:[%s0 + $0x78] sm:$0xf]
  %v52 = vld [vmem:[%s0 + $0x7c] sm:$0xf]
  %v53 = vld [vmem:[%s0 + $0x80] sm:$0xf]
  %v54 = vld [vmem:[%s0 + $0x84] sm:$0xf]
  %v55 = vld [vmem:[%s0 + $0x88] sm:$0xf]
  %v56 = vld [vmem:[%s0 + $0x8c] sm:$0xf]
  %v57 = vld [vmem:[%s0 + $0x90] sm:$0xf]
  %v58 = vld [vmem:[%s0 + $0x94] sm:$0xf]
  %v59 = vld [vmem:[%s0 + $0x98] sm:$0xf]
  %v60 = vld [vmem:[%s0 + $0x9c] sm:$0xf]
  %v61 = vld [vmem:[%s0 + $0xa0] sm:$0xf]
  %v62 = vld [vmem:[%s0 + $0xa4] sm:$0xf]
  %v63 = vld [vmem:[%s0 + $0xa8] sm:$0xf]
  %v64 = vld [vmem:[%s0 + $0xac] sm:$0xf]
  %v65 = vld [vmem:[%s0 + $0xb0] sm:$0xf]
  %v66 = vld [vmem:[%s0 + $0xb4] sm:$0xf]
  %v67 = vld [vmem:[%s0 + $0xb8] sm:$0xf]
  %v68 = vld [vmem:[%s0 + $0xbc] sm:$0xf]
  %v69 = vld [vmem:[%s0 + $0xc0] sm:$0xf]
  %v70 = vld [vmem:[%s0 + $0xc4] sm:$0xf]
  %v71 = vld [vmem:[%s0 + $0xc8] sm:$0xf]
  %v72 = vld [vmem:[%s0 + $0xcc] sm:$0xf]
  %v73 = vld [vmem:[%s0 + $0xd0] sm:$0xf]
  %v74 = vld [vmem:[%s0 + $0xd4] sm:$0xf]
  %v75 = vld [vmem:[%s0 + $0xd8] sm:$0xf]
  %v76 = vld [vmem:[%s0 + $0xdc] sm:$0xf]
  %v77 = vld [vmem:[%s0 + $0xe0] sm:$0xf]
  %v78 = vld [vmem:[%s0 + $0xe4] sm:$0xf]
  %v79 = vld [vmem:[%s0 + $0xe8] sm:$0xf]
  %v80 = vld [vmem:[%s0 + $0xec] sm:$0xf]
  %v81 = vld [vmem:[%s0 + $0xf0] sm:$0xf]
  %v82 = vld [vmem:[%s0 + $0xf4] sm:$0xf]
  %v83 = vld [vmem:[%s0 + $0xf8] sm:$0xf]
  %v84 = vld [vmem:[%s0 + $0xfc] sm:$0xf]
  %v85 = vld [vmem:[%s0 + $0x100] sm:$0xf]
  %v86 = vld [vmem:[%s0 + $0x104] sm:$0xf]
  %v87 = vld [vmem:[%s0 + $0x108] sm:$0xf]
  %v88 = vld [vmem:[%s0 + $0x10c] sm:$0xf]
  %v89 = vld [vmem:[%s0 + $0x110] sm:$0xf]
  %v90 = vld [vmem:[%s0 + $0x114] sm:$0xf]
  %v91 = vld [vmem:[%s0 + $0x118] sm:$0xf]
  %v92 = vld [vmem:[%s0 + $0x11c] sm:$0xf]
  %v93 = vld [vmem:[%s0 + $0x120] sm:$0xf]
  %v94 = vld [vmem:[%s0 + $0x124] sm:$0xf]
  %v95 = vld [vmem:[%s0 + $0x128] sm:$0xf]
  %v96 = vld [vmem:[%s0 + $0x12c] sm:$0xf]
  %v97 = vld [vmem:[%s0 + $0x130] sm:$0xf]
  %v98 = vld [vmem:[%s0 + $0x134] sm:$0xf]
  %v99 = vld [vmem:[%s0 + $0x138] sm:$0xf]
  %v100 = vld [vmem:[%s0 + $0x13c] sm:$0xf]
  %v101 = vld [vmem:[%s0 + $0x140] sm:$0xf]
  %v102 = vld [vmem:[%s0 + $0x144] sm:$0xf]
  %v103 = vld [vmem:[%s0 + $0x148] sm:$0xf]
  %v104 = vld [vmem:[%s0 + $0x14c] sm:$0xf]
  %v105 = vld [vmem:[%s0 + $0x150] sm:$0xf]
  %v106 = vld [vmem:[%s0 + $0x154] sm:$0xf]
  %v107 = vld [vmem:[%s0 + $0x158] sm:$0xf]
  %v108 = vld [vmem:[%s0 + $0x15c] sm:$0xf]
  %v109 = vld [vmem:[%s0 + $0x160] sm:$0xf]
  %v110 = vld [vmem:[%s0 + $0x164] sm:$0xf]
  %v111 = vld [vmem:[%s0 + $0x168] sm:$0xf]
  %v112 = vld [vmem:[%s0 + $0x16c] sm:$0xf]
  %v113 = vld [vmem:[%s0 + $0x170] sm:$0xf]
  %v114 = vld [vmem:[%s0 + $0x174] sm:$0xf]
  %v115 = vld [vmem:[%s0 + $0x178] sm:$0xf]
  %v116 = vld [vmem:[%s0 + $0x17c] sm:$0xf]
  %v117 = vld [vmem:[%s0 + $0x180] sm:$0xf]
  %v118 = vld [vmem:[%s0 + $0x184] sm:$0xf]
  %v119 = vld [vmem:[%s0 + $0x188] sm:$0xf]
  %v120 = vld [vmem:[%s0 + $0x18c] sm:$0xf]
  %v121 = vld [vmem:[%s0 + $0x190] sm:$0xf]
  %v122 = vld [vmem:[%s0 + $0x194] sm:$0xf]
  %v123 = vld [vmem:[%s0 + $0x198] sm:$0xf]
  %v124 = vld [vmem:[%s0 + $0x19c] sm:$0xf]
  %v125 = vld [vmem:[%s0 + $0x1a0] sm:$0xf]
  %v126 = vld [vmem:[%s0 + $0x1a4] sm:$0xf]
  %v127 = vld [vmem:[%s0 + $0x1a8] sm:$0xf]
  %v128 = vld [vmem:[%s0 + $0x1ac] sm:$0xf]
  %v129 = vld [vmem:[%s0 + $0x1b0] sm:$0xf]
  %v130 = vld [vmem:[%s0 + $0x1b4] sm:$0xf]
  %v131 = vld [vmem:[%s0 + $0x1b8] sm:$0xf]
  %v132 = vld [vmem:[%s0 + $0x1bc] sm:$0xf]
  %v133 = vld [vmem:[%s0 + $0x1c0] sm:$0xf]
  %v134 = vld [vmem:[%s0 + $0x1c4] sm:$0xf]
  %v135 = vld [vmem:[%s0 + $0x1c8] sm:$0xf]
  %v136 = vld [vmem:[%s0 + $0x1cc] sm:$0xf]
  %v137 = vld [vmem:[%s0 + $0x1d0] sm:$0xf]
  %v138 = vld [vmem:[%s0 + $0x1d4] sm:$0xf]
  %v139 = vld [vmem:[%s0 + $0x1d8] sm:$0xf]
  %v140 = vld [vmem:[%s0 + $0x1dc] sm:$0xf]
  %v141 = vld [vmem:[%s0 + $0x1e0] sm:$0xf]
  %v142 = vld [vmem:[%s0 + $0x1e4] sm:$0xf]
  %v143 = vld [vmem:[%s0 + $0x1e8] sm:$0xf]
  %v144 = vld [vmem:[%s0 + $0x1ec] sm:$0xf]
  %v145 = vld [vmem:[%s0 + $0x1f0] sm:$0xf]
  %v146 = vld [vmem:[%s0 + $0x1f4] sm:$0xf]
  %v147 = vld [vmem:[%s0 + $0x1f8] sm:$0xf]
  %v148 = vld [vmem:[%s0 + $0x1fc] sm:$0xf]
  %v149 = vld [vmem:[%s0 + $0x200] sm:$0xf]
  %v150 = vld [vmem:[%s0 + $0x204] sm:$0xf]
  %v151 = vld [vmem:[%s0 + $0x208] sm:$0xf]
  %v152 = vld [vmem:[%s0 + $0x20c] sm:$0xf]
  %v153 = vld [vmem:[%s0 + $0x210] sm:$0xf]
  %v154 = vld [vmem:[%s0 + $0x214] sm:$0xf]
  %v155 = vld [vmem:[%s0 + $0x218] sm:$0xf]
  %v156 = vld [vmem:[%s0 + $0x21c] sm:$0xf]
  %v157 = vld [vmem:[%s0 + $0x220] sm:$0xf]
  %v158 = vld [vmem:[%s0 + $0x224] sm:$0xf]
  %v159 = vld [vmem:[%s0 + $0x228] sm:$0xf]
  %v160 = vld [vmem:[%s0 + $0x22c] sm:$0xf]
  %v161 = vld [vmem:[%s0 + $0x230] sm:$0xf]
  %v162 = vld [vmem:[%s0 + $0x234] sm:$0xf]
  %v163 = vld [vmem:[%s0 + $0x238] sm:$0xf]
  %v164 = vld [vmem:[%s0 + $0x23c] sm:$0xf]
  %v165 = vld [vmem:[%s0 + $0x240] sm:$0xf]
  %v166 = vld [vmem:[%s0 + $0x244] sm:$0xf]
  %v167 = vld [vmem:[%s0 + $0x248] sm:$0xf]
  %v168 = vld [vmem:[%s0 + $0x24c] sm:$0xf]
  %v169 = vld [vmem:[%s0 + $0x250] sm:$0xf]
  %v170 = vld [vmem:[%s0 + $0x254] sm:$0xf]
  %v171 = vld [vmem:[%s0 + $0x258] sm:$0xf]
  %v172 = vld [vmem:[%s0 + $0x25c] sm:$0xf]
  %v173 = vld [vmem:[%s0 + $0x260] sm:$0xf]
  %v174 = vld [vmem:[%s0 + $0x264] sm:$0xf]
  %v175 = vld [vmem:[%s0 + $0x268] sm:$0xf]
  %v176 = vld [vmem:[%s0 + $0x26c] sm:$0xf]
  %v177 = vld [vmem:[%s0 + $0x270] sm:$0xf]
  %v178 = vld [vmem:[%s0 + $0x274] sm:$0xf]
  %v179 = vld [vmem:[%s0 + $0x278] sm:$0xf]
  %v180 = vld [vmem:[%s0 + $0x27c] sm:$0xf]
  %v181 = vld [vmem:[%s0 + $0x280] sm:$0xf]
  %v182 = vld [vmem:[%s0 + $0x284] sm:$0xf]
  %v183 = vld [vmem:[%s0 + $0x288] sm:$0xf]
  %v184 = vld [vmem:[%s0 + $0x28c] sm:$0xf]
  %v185 = vld [vmem:[%s0 + $0x290] sm:$0xf]
  %v186 = vld [vmem:[%s0 + $0x294] sm:$0xf]
  %v187 = vld [vmem:[%s0 + $0x298] sm:$0xf]
  %v188 = vld [vmem:[%s0 + $0x29c] sm:$0xf]
  %v189 = vld [vmem:[%s0 + $0x2a0] sm:$0xf]
  %v190 = vld [vmem:[%s0 + $0x2a4] sm:$0xf]
  %v191 = vld [vmem:[%s0 + $0x2a8] sm:$0xf]
  %v192 = vld [vmem:[%s0 + $0x2ac] sm:$0xf]
  %v193 = vld [vmem:[%s0 + $0x2b0] sm:$0xf]
  %v194 = vld [vmem:[%s0 + $0x2b4] sm:$0xf]
  %v195 = vld [vmem:[%s0 + $0x2b8] sm:$0xf]
  %v196 = vld [vmem:[%s0 + $0x2bc] sm:$0xf]
  %v197 = vld [vmem:[%s0 + $0x2c0] sm:$0xf]
  %v198 = vld [vmem:[%s0 + $0x2c4] sm:$0xf]
  %v199 = vld [vmem:[%s0 + $0x2c8] sm:$0xf]
  %v200 = vld [vmem:[%s0 + $0x2cc] sm:$0xf]
  %v201 = vld [vmem:[%s0 + $0x2d0] sm:$0xf]
  %v202 = vld [vmem:[%s0 + $0x2d4] sm:$0xf]
  %v203 = vld [vmem:[%s0 + $0x2d8] sm:$0xf]
  %v204 = vld [vmem:[%s0 + $0x2dc] sm:$0xf]
  %v205 = vld [vmem:[%s0 + $0x2e0] sm:$0xf]
  %v206 = vld [vmem:[%s0 + $0x2e4] sm:$0xf]
  %v207 = vld [vmem:[%s0 + $0x2e8] sm:$0xf]
  %v208 = vld [vmem:[%s0 + $0x2ec] sm:$0xf]
  %v209 = vld [vmem:[%s0 + $0x2f0] sm:$0xf]
  %v210 = vld [vmem:[%s0 + $0x2f4] sm:$0xf]
  %v211 = vld [vmem:[%s0 + $0x2f8] sm:$0xf]
  %v212 = vld [vmem:[%s0 + $0x2fc] sm:$0xf]
  %v213 = vld [vmem:[%s0 + $0x300] sm:$0xf]
  %v214 = vld [vmem:[%s0 + $0x304] sm:$0xf]
  %v215 = vld [vmem:[%s0 + $0x308] sm:$0xf]
  %v216 = vld [vmem:[%s0 + $0x30c] sm:$0xf]
  %v217 = vld [vmem:[%s1] sm:$0xf]
  %v218 = vld [vmem:[%s1 + $0x4] sm:$0x1]
  %v219 = vld [vmem:[%s2] sm:$0x1]
  %v221 = vlaneseq
  %v222 = vshrl.u32 %v221, 7
  %v223 = vsub.s32 0, %v222
  %v224 = vrot.slane %v219, %v223
  %v422 = vunpack.c.l.b16 %v21
  %v423 = vunpack.c.l.b16 %v22
  %v424 = vunpack.c.l.b16 %v23
  %v425 = vunpack.c.l.b16 %v24
  %v426 = vunpack.c.l.b16 %v25
  %v427 = vunpack.c.l.b16 %v26
  %v428 = vunpack.c.l.b16 %v27
  %v429 = vunpack.c.l.b16 %v28
  %v430 = vunpack.c.l.b16 %v29
  %v431 = vunpack.c.l.b16 %v30
  %v432 = vunpack.c.l.b16 %v31
  %v433 = vunpack.c.l.b16 %v32
  %v434 = vunpack.c.l.b16 %v33
  %v435 = vunpack.c.l.b16 %v34
  %v436 = vunpack.c.l.b16 %v35
  %v437 = vunpack.c.l.b16 %v36
  %v438 = vunpack.c.l.b16 %v37
  %v439 = vunpack.c.l.b16 %v38
  %v440 = vunpack.c.l.b16 %v39
  %v441 = vunpack.c.l.b16 %v40
  %v442 = vunpack.c.l.b16 %v41
  %v443 = vunpack.c.l.b16 %v42
  %v444 = vunpack.c.l.b16 %v43
  %v445 = vunpack.c.l.b16 %v44
  %v446 = vunpack.c.l.b16 %v45
  %v447 = vunpack.c.l.b16 %v46
  %v448 = vunpack.c.l.b16 %v47
  %v449 = vunpack.c.l.b16 %v48
  %v450 = vunpack.c.l.b16 %v49
  %v451 = vunpack.c.l.b16 %v50
  %v452 = vunpack.c.l.b16 %v51
  %v453 = vunpack.c.l.b16 %v52
  %v454 = vunpack.c.l.b16 %v53
  %v455 = vunpack.c.l.b16 %v54
  %v456 = vunpack.c.l.b16 %v55
  %v457 = vunpack.c.l.b16 %v56
  %v458 = vunpack.c.l.b16 %v57
  %v459 = vunpack.c.l.b16 %v58
  %v460 = vunpack.c.l.b16 %v59
  %v461 = vunpack.c.l.b16 %v60
  %v462 = vunpack.c.l.b16 %v61
  %v463 = vunpack.c.l.b16 %v62
  %v464 = vunpack.c.l.b16 %v63
  %v465 = vunpack.c.l.b16 %v64
  %v466 = vunpack.c.l.b16 %v65
  %v467 = vunpack.c.l.b16 %v66
  %v468 = vunpack.c.l.b16 %v67
  %v469 = vunpack.c.l.b16 %v68
  %v470 = vunpack.c.l.b16 %v69
  %v471 = vunpack.c.l.b16 %v70
  %v472 = vunpack.c.l.b16 %v71
  %v473 = vunpack.c.l.b16 %v72
  %v474 = vunpack.c.l.b16 %v73
  %v475 = vunpack.c.l.b16 %v74
  %v476 = vunpack.c.l.b16 %v75
  %v477 = vunpack.c.l.b16 %v76
  %v478 = vunpack.c.l.b16 %v77
  %v479 = vunpack.c.l.b16 %v78
  %v480 = vunpack.c.l.b16 %v79
  %v481 = vunpack.c.l.b16 %v80
  %v482 = vunpack.c.l.b16 %v81
  %v483 = vunpack.c.l.b16 %v82
  %v484 = vunpack.c.l.b16 %v83
  %v485 = vunpack.c.l.b16 %v84
  %v486 = vunpack.c.l.b16 %v85
  %v487 = vunpack.c.l.b16 %v86
  %v488 = vunpack.c.l.b16 %v87
  %v489 = vunpack.c.l.b16 %v88
  %v490 = vunpack.c.l.b16 %v89
  %v491 = vunpack.c.l.b16 %v90
  %v492 = vunpack.c.l.b16 %v91
  %v493 = vunpack.c.l.b16 %v92
  %v494 = vunpack.c.l.b16 %v93
  %v495 = vunpack.c.l.b16 %v94
  %v496 = vunpack.c.l.b16 %v95
  %v497 = vunpack.c.l.b16 %v96
  %v498 = vunpack.c.l.b16 %v97
  %v499 = vunpack.c.l.b16 %v98
  %v500 = vunpack.c.l.b16 %v99
  %v501 = vunpack.c.l.b16 %v100
  %v502 = vunpack.c.l.b16 %v101
  %v503 = vunpack.c.l.b16 %v102
  %v504 = vunpack.c.l.b16 %v103
  %v505 = vunpack.c.l.b16 %v104
  %v506 = vunpack.c.l.b16 %v105
  %v507 = vunpack.c.l.b16 %v106
  %v508 = vunpack.c.l.b16 %v107
  %v509 = vunpack.c.l.b16 %v108
  %v510 = vunpack.c.l.b16 %v109
  %v511 = vunpack.c.l.b16 %v110
  %v512 = vunpack.c.l.b16 %v111
  %v513 = vunpack.c.l.b16 %v112
  %v514 = vunpack.c.l.b16 %v113
  %v515 = vunpack.c.l.b16 %v114
  %v516 = vunpack.c.l.b16 %v115
  %v517 = vunpack.c.l.b16 %v116
  %v518 = vunpack.c.l.b16 %v117
  %v519 = vunpack.c.l.b16 %v118
  %v520 = vunpack.c.l.b16 %v119
  %v521 = vunpack.c.l.b16 %v120
  %v522 = vunpack.c.l.b16 %v121
  %v523 = vunpack.c.l.b16 %v122
  %v524 = vunpack.c.l.b16 %v123
  %v525 = vunpack.c.l.b16 %v124
  %v526 = vunpack.c.l.b16 %v125
  %v527 = vunpack.c.l.b16 %v126
  %v528 = vunpack.c.l.b16 %v127
  %v529 = vunpack.c.l.b16 %v128
  %v530 = vunpack.c.l.b16 %v129
  %v531 = vunpack.c.l.b16 %v130
  %v532 = vunpack.c.l.b16 %v131
  %v533 = vunpack.c.l.b16 %v132
  %v534 = vunpack.c.l.b16 %v133
  %v535 = vunpack.c.l.b16 %v134
  %v536 = vunpack.c.l.b16 %v135
  %v537 = vunpack.c.l.b16 %v136
  %v538 = vunpack.c.l.b16 %v137
  %v539 = vunpack.c.l.b16 %v138
  %v540 = vunpack.c.l.b16 %v139
  %v541 = vunpack.c.l.b16 %v140
  %v542 = vunpack.c.l.b16 %v141
  %v543 = vunpack.c.l.b16 %v142
  %v544 = vunpack.c.l.b16 %v143
  %v545 = vunpack.c.l.b16 %v144
  %v546 = vunpack.c.l.b16 %v145
  %v547 = vunpack.c.l.b16 %v146
  %v548 = vunpack.c.l.b16 %v147
  %v549 = vunpack.c.l.b16 %v148
  %v550 = vunpack.c.l.b16 %v149
  %v551 = vunpack.c.l.b16 %v150
  %v552 = vunpack.c.l.b16 %v151
  %v553 = vunpack.c.l.b16 %v152
  %v554 = vunpack.c.l.b16 %v153
  %v555 = vunpack.c.l.b16 %v154
  %v556 = vunpack.c.l.b16 %v155
  %v557 = vunpack.c.l.b16 %v156
  %v558 = vunpack.c.l.b16 %v157
  %v559 = vunpack.c.l.b16 %v158
  %v560 = vunpack.c.l.b16 %v159
  %v561 = vunpack.c.l.b16 %v160
  %v562 = vunpack.c.l.b16 %v161
  %v563 = vunpack.c.l.b16 %v162
  %v564 = vunpack.c.l.b16 %v163
  %v565 = vunpack.c.l.b16 %v164
  %v566 = vunpack.c.l.b16 %v165
  %v567 = vunpack.c.l.b16 %v166
  %v568 = vunpack.c.l.b16 %v167
  %v569 = vunpack.c.l.b16 %v168
  %v570 = vunpack.c.l.b16 %v169
  %v571 = vunpack.c.l.b16 %v170
  %v572 = vunpack.c.l.b16 %v171
  %v573 = vunpack.c.l.b16 %v172
  %v574 = vunpack.c.l.b16 %v173
  %v575 = vunpack.c.l.b16 %v174
  %v576 = vunpack.c.l.b16 %v175
  %v577 = vunpack.c.l.b16 %v176
  %v578 = vunpack.c.l.b16 %v177
  %v579 = vunpack.c.l.b16 %v178
  %v580 = vunpack.c.l.b16 %v179
  %v581 = vunpack.c.l.b16 %v180
  %v582 = vunpack.c.l.b16 %v181
  %v583 = vunpack.c.l.b16 %v182
  %v584 = vunpack.c.l.b16 %v183
  %v585 = vunpack.c.l.b16 %v184
  %v586 = vunpack.c.l.b16 %v185
  %v587 = vunpack.c.l.b16 %v186
  %v588 = vunpack.c.l.b16 %v187
  %v589 = vunpack.c.l.b16 %v188
  %v590 = vunpack.c.l.b16 %v189
  %v591 = vunpack.c.l.b16 %v190
  %v592 = vunpack.c.l.b16 %v191
  %v593 = vunpack.c.l.b16 %v192
  %v594 = vunpack.c.l.b16 %v193
  %v595 = vunpack.c.l.b16 %v194
  %v596 = vunpack.c.l.b16 %v195
  %v597 = vunpack.c.l.b16 %v196
  %v598 = vunpack.c.l.b16 %v197
  %v599 = vunpack.c.l.b16 %v198
  %v600 = vunpack.c.l.b16 %v199
  %v601 = vunpack.c.l.b16 %v200
  %v602 = vunpack.c.l.b16 %v201
  %v603 = vunpack.c.l.b16 %v202
  %v604 = vunpack.c.l.b16 %v203
  %v605 = vunpack.c.l.b16 %v204
  %v606 = vunpack.c.l.b16 %v205
  %v607 = vunpack.c.l.b16 %v206
  %v608 = vunpack.c.l.b16 %v207
  %v609 = vunpack.c.l.b16 %v208
  %v610 = vunpack.c.l.b16 %v209
  %v611 = vunpack.c.l.b16 %v210
  %v612 = vunpack.c.l.b16 %v211
  %v613 = vunpack.c.l.b16 %v212
  %v614 = vunpack.c.l.b16 %v213
  %v615 = vunpack.c.l.b16 %v214
  %v616 = vunpack.c.l.b16 %v215
  %v617 = vunpack.c.l.b16 %v216
  %v618 = vpack.c.b16 %v423, %v422
  %v619 = vpack.c.b16 %v425, %v424
  %v620 = vpack.c.b16 %v427, %v426
  %v621 = vpack.c.b16 %v429, %v428
  %v622 = vpack.c.b16 %v431, %v430
  %v623 = vpack.c.b16 %v433, %v432
  %v624 = vpack.c.b16 %v435, %v434
  %v625 = vpack.c.b16 %v437, %v436
  %v626 = vpack.c.b16 %v439, %v438
  %v627 = vpack.c.b16 %v441, %v440
  %v628 = vpack.c.b16 %v443, %v442
  %v629 = vpack.c.b16 %v445, %v444
  %v630 = vpack.c.b16 %v447, %v446
  %v631 = vpack.c.b16 %v449, %v448
  %v632 = vpack.c.b16 %v451, %v450
  %v633 = vpack.c.b16 %v453, %v452
  %v634 = vpack.c.b16 %v455, %v454
  %v635 = vpack.c.b16 %v457, %v456
  %v636 = vpack.c.b16 %v459, %v458
  %v637 = vpack.c.b16 %v461, %v460
  %v638 = vpack.c.b16 %v463, %v462
  %v639 = vpack.c.b16 %v465, %v464
  %v640 = vpack.c.b16 %v467, %v466
  %v641 = vpack.c.b16 %v469, %v468
  %v642 = vpack.c.b16 %v471, %v470
  %v643 = vpack.c.b16 %v473, %v472
  %v644 = vpack.c.b16 %v475, %v474
  %v645 = vpack.c.b16 %v477, %v476
  %v646 = vpack.c.b16 %v479, %v478
  %v647 = vpack.c.b16 %v481, %v480
  %v648 = vpack.c.b16 %v483, %v482
  %v649 = vpack.c.b16 %v485, %v484
  %v650 = vpack.c.b16 %v487, %v486
  %v651 = vpack.c.b16 %v489, %v488
  %v652 = vpack.c.b16 %v491, %v490
  %v653 = vpack.c.b16 %v493, %v492
  %v654 = vpack.c.b16 %v495, %v494
  %v655 = vpack.c.b16 %v497, %v496
  %v656 = vpack.c.b16 %v499, %v498
  %v657 = vpack.c.b16 %v501, %v500
  %v658 = vpack.c.b16 %v503, %v502
  %v659 = vpack.c.b16 %v505, %v504
  %v660 = vpack.c.b16 %v507, %v506
  %v661 = vpack.c.b16 %v509, %v508
  %v662 = vpack.c.b16 %v511, %v510
  %v663 = vpack.c.b16 %v513, %v512
  %v664 = vpack.c.b16 %v515, %v514
  %v665 = vpack.c.b16 %v517, %v516
  %v666 = vpack.c.b16 %v519, %v518
  %v667 = vpack.c.b16 %v521, %v520
  %v668 = vpack.c.b16 %v523, %v522
  %v669 = vpack.c.b16 %v525, %v524
  %v670 = vpack.c.b16 %v527, %v526
  %v671 = vpack.c.b16 %v529, %v528
  %v672 = vpack.c.b16 %v531, %v530
  %v673 = vpack.c.b16 %v533, %v532
  %v674 = vpack.c.b16 %v535, %v534
  %v675 = vpack.c.b16 %v537, %v536
  %v676 = vpack.c.b16 %v539, %v538
  %v677 = vpack.c.b16 %v541, %v540
  %v678 = vpack.c.b16 %v543, %v542
  %v679 = vpack.c.b16 %v545, %v544
  %v680 = vpack.c.b16 %v547, %v546
  %v681 = vpack.c.b16 %v549, %v548
  %v682 = vpack.c.b16 %v551, %v550
  %v683 = vpack.c.b16 %v553, %v552
  %v684 = vpack.c.b16 %v555, %v554
  %v685 = vpack.c.b16 %v557, %v556
  %v686 = vpack.c.b16 %v559, %v558
  %v687 = vpack.c.b16 %v561, %v560
  %v688 = vpack.c.b16 %v563, %v562
  %v689 = vpack.c.b16 %v565, %v564
  %v690 = vpack.c.b16 %v567, %v566
  %v691 = vpack.c.b16 %v569, %v568
  %v692 = vpack.c.b16 %v571, %v570
  %v693 = vpack.c.b16 %v573, %v572
  %v694 = vpack.c.b16 %v575, %v574
  %v695 = vpack.c.b16 %v577, %v576
  %v696 = vpack.c.b16 %v579, %v578
  %v697 = vpack.c.b16 %v581, %v580
  %v698 = vpack.c.b16 %v583, %v582
  %v699 = vpack.c.b16 %v585, %v584
  %v700 = vpack.c.b16 %v587, %v586
  %v701 = vpack.c.b16 %v589, %v588
  %v702 = vpack.c.b16 %v591, %v590
  %v703 = vpack.c.b16 %v593, %v592
  %v704 = vpack.c.b16 %v595, %v594
  %v705 = vpack.c.b16 %v597, %v596
  %v706 = vpack.c.b16 %v599, %v598
  %v707 = vpack.c.b16 %v601, %v600
  %v708 = vpack.c.b16 %v603, %v602
  %v709 = vpack.c.b16 %v605, %v604
  %v710 = vpack.c.b16 %v607, %v606
  %v711 = vpack.c.b16 %v609, %v608
  %v712 = vpack.c.b16 %v611, %v610
  %v713 = vpack.c.b16 %v613, %v612
  %v714 = vpack.c.b16 %v615, %v614
  %v715 = vpack.c.b16 %v617, %v616
  %v718 = vunpack.c.l.b16 %v217
  %v719 = vunpack.c.l.b16 %v218
  %v720 = vpack.c.b16 %v719, %v718
  %vm721 = vcmask 72704
  %v723 = vsel %vm721, %v618, 0
  %v726 = vsel %vm721, %v619, 0
  %v729 = vsel %vm721, %v620, 0
  %v732 = vsel %vm721, %v621, 0
  %v735 = vsel %vm721, %v622, 0
  %v738 = vsel %vm721, %v623, 0
  %v741 = vsel %vm721, %v624, 0
  %v744 = vsel %vm721, %v625, 0
  %v747 = vsel %vm721, %v626, 0
  %v750 = vsel %vm721, %v627, 0
  %v753 = vsel %vm721, %v628, 0
  %v756 = vsel %vm721, %v629, 0
  %v759 = vsel %vm721, %v630, 0
  %v762 = vsel %vm721, %v631, 0
  %v765 = vsel %vm721, %v632, 0
  %v768 = vsel %vm721, %v633, 0
  %v771 = vsel %vm721, %v634, 0
  %v774 = vsel %vm721, %v635, 0
  %v777 = vsel %vm721, %v636, 0
  %v780 = vsel %vm721, %v637, 0
  %v783 = vsel %vm721, %v638, 0
  %v786 = vsel %vm721, %v639, 0
  %v789 = vsel %vm721, %v640, 0
  %v792 = vsel %vm721, %v641, 0
  %v795 = vsel %vm721, %v642, 0
  %v798 = vsel %vm721, %v643, 0
  %v801 = vsel %vm721, %v644, 0
  %v804 = vsel %vm721, %v645, 0
  %v807 = vsel %vm721, %v646, 0
  %v810 = vsel %vm721, %v647, 0
  %v813 = vsel %vm721, %v648, 0
  %v816 = vsel %vm721, %v649, 0
  %v819 = vsel %vm721, %v650, 0
  %v822 = vsel %vm721, %v651, 0
  %v825 = vsel %vm721, %v652, 0
  %v828 = vsel %vm721, %v653, 0
  %v831 = vsel %vm721, %v654, 0
  %v834 = vsel %vm721, %v655, 0
  %v837 = vsel %vm721, %v656, 0
  %v840 = vsel %vm721, %v657, 0
  %v843 = vsel %vm721, %v658, 0
  %v846 = vsel %vm721, %v659, 0
  %v849 = vsel %vm721, %v660, 0
  %v852 = vsel %vm721, %v661, 0
  %v855 = vsel %vm721, %v662, 0
  %v858 = vsel %vm721, %v663, 0
  %v861 = vsel %vm721, %v664, 0
  %v864 = vsel %vm721, %v665, 0
  %v867 = vsel %vm721, %v666, 0
  %v870 = vsel %vm721, %v667, 0
  %v873 = vsel %vm721, %v668, 0
  %v876 = vsel %vm721, %v669, 0
  %v879 = vsel %vm721, %v670, 0
  %v882 = vsel %vm721, %v671, 0
  %v885 = vsel %vm721, %v672, 0
  %v888 = vsel %vm721, %v673, 0
  %v891 = vsel %vm721, %v674, 0
  %v894 = vsel %vm721, %v675, 0
  %v897 = vsel %vm721, %v676, 0
  %v900 = vsel %vm721, %v677, 0
  %v903 = vsel %vm721, %v678, 0
  %v906 = vsel %vm721, %v679, 0
  %v909 = vsel %vm721, %v680, 0
  %v912 = vsel %vm721, %v681, 0
  %v915 = vsel %vm721, %v682, 0
  %v918 = vsel %vm721, %v683, 0
  %v921 = vsel %vm721, %v684, 0
  %v924 = vsel %vm721, %v685, 0
  %v927 = vsel %vm721, %v686, 0
  %v930 = vsel %vm721, %v687, 0
  %v933 = vsel %vm721, %v688, 0
  %v936 = vsel %vm721, %v689, 0
  %v939 = vsel %vm721, %v690, 0
  %v942 = vsel %vm721, %v691, 0
  %v945 = vsel %vm721, %v692, 0
  %v948 = vsel %vm721, %v693, 0
  %v951 = vsel %vm721, %v694, 0
  %v954 = vsel %vm721, %v695, 0
  %v957 = vsel %vm721, %v696, 0
  %v960 = vsel %vm721, %v697, 0
  %v963 = vsel %vm721, %v698, 0
  %v966 = vsel %vm721, %v699, 0
  %v969 = vsel %vm721, %v700, 0
  %v972 = vsel %vm721, %v701, 0
  %v975 = vsel %vm721, %v702, 0
  %v978 = vsel %vm721, %v703, 0
  %v981 = vsel %vm721, %v704, 0
  %v984 = vsel %vm721, %v705, 0
  %v987 = vsel %vm721, %v706, 0
  %v990 = vsel %vm721, %v707, 0
  %v993 = vsel %vm721, %v708, 0
  %v996 = vsel %vm721, %v709, 0
  %v999 = vsel %vm721, %v710, 0
  %v1002 = vsel %vm721, %v711, 0
  %v1005 = vsel %vm721, %v712, 0
  %v1008 = vsel %vm721, %v713, 0
  %v1011 = vsel %vm721, %v714, 0
  %v1014 = vsel %vm721, %v715, 0
  %vm1016 = vcmask 1043456
  %vm1017 = vcmask 1044480
  %v1018 = vsel %vm1016, 4294967295, 65535
  %v1019 = vsel %vm1017, %v1018, 0
  %v1021 = vand.u32 %v720, %v1019
  %1023 = vmatprep.subr.bf16.mxu0 0
  %1024 = vmatpush1.bf16.msra.mxu0 %v1021
  %1025 = vmatprep.subr.bf16.mxu0 0
  %1026 = vmatpush1.bf16.msra.mxu0 0
  %1027 = vmatprep.subr.bf16.mxu0 0
  %1028 = vmatpush1.bf16.msra.mxu0 0
  %1029 = vmatprep.subr.bf16.mxu0 0
  %1030 = vmatpush1.bf16.msra.mxu0 0
  %1031 = vmatprep.subr.bf16.mxu0 0
  %1032 = vmatpush1.bf16.msra.mxu0 0
  %1033 = vmatprep.subr.bf16.mxu0 0
  %1034 = vmatpush1.bf16.msra.mxu0 0
  %1035 = vmatprep.subr.bf16.mxu0 0
  %1036 = vmatpush1.bf16.msra.mxu0 0
  %1037 = vmatprep.subr.bf16.mxu0 0
  %1038 = vmatpush1.bf16.msra.mxu0 0
  %1039 = vmatprep.subr.bf16.mxu0 0
  %1040 = vmatpush1.bf16.msra.mxu0 0
  %1041 = vmatprep.subr.bf16.mxu0 0
  %1042 = vmatpush1.bf16.msra.mxu0 0
  %1043 = vmatprep.subr.bf16.mxu0 0
  %1044 = vmatpush1.bf16.msra.mxu0 0
  %1045 = vmatprep.subr.bf16.mxu0 0
  %1046 = vmatpush1.bf16.msra.mxu0 0
  %1047 = vmatprep.subr.bf16.mxu0 0
  %1048 = vmatpush1.bf16.msra.mxu0 0
  %1049 = vmatprep.subr.bf16.mxu0 0
  %1050 = vmatpush1.bf16.msra.mxu0 0
  %1051 = vmatprep.subr.bf16.mxu0 0
  %1052 = vmatpush1.bf16.msra.mxu0 0
  %1053 = vmatprep.subr.bf16.mxu0 0
  %1054 = vmatpush1.bf16.msra.mxu0 0
  %1055 = vmatprep.mubr.bf16.mxu0 0
  %1056 = vmatmul.mubr.bf16.gmra.mrb[0].mxu0 %v723
  %v1057 = vpop.f32.mrb[0].mxu0
  %v1058 = vadd.f32 %v224, %v1057
  %v1059 = vpop.f32.mrb[0].mxu0
  %v1060 = vpop.f32.mrb[0].mxu0
  %v1061 = vadd.f32 %v224, %v1060
  %v1062 = vpop.f32.mrb[0].mxu0
  %1063 = vmatprep.mubr.bf16.mxu0 0
  %1064 = vmatmul.mubr.bf16.gmra.mrb[0].mxu0 %v726
  %v1065 = vpop.f32.mrb[0].mxu0
  %v1066 = vadd.f32 %v224, %v1065
  %v1067 = vpop.f32.mrb[0].mxu0
  %v1068 = vpop.f32.mrb[0].mxu0
  %v1069 = vadd.f32 %v224, %v1068
  %v1070 = vpop.f32.mrb[0].mxu0
  %1071 = vmatprep.mubr.bf16.mxu0 0
  %1072 = vmatmul.mubr.bf16.gmra.mrb[0].mxu0 %v729
  %v1073 = vpop.f32.mrb[0].mxu0
  %v1074 = vadd.f32 %v224, %v1073
  %v1075 = vpop.f32.mrb[0].mxu0
  %v1076 = vpop.f32.mrb[0].mxu0
  %v1077 = vadd.f32 %v224, %v1076
  %v1078 = vpop.f32.mrb[0].mxu0
  %1079 = vmatprep.mubr.bf16.mxu0 0
  %1080 = vmatmul.mubr.bf16.gmra.mrb[0].mxu0 %v732
  %v1081 = vpop.f32.mrb[0].mxu0
  %v1082 = vadd.f32 %v224, %v1081
  %v1083 = vpop.f32.mrb[0].mxu0
  %v1084 = vpop.f32.mrb[0].mxu0
  %v1085 = vadd.f32 %v224, %v1084
  %v1086 = vpop.f32.mrb[0].mxu0
  %1087 = vmatprep.mubr.bf16.mxu0 0
  %1088 = vmatmul.mubr.bf16.gmra.mrb[0].mxu0 %v735
  %v1089 = vpop.f32.mrb[0].mxu0
  %v1090 = vadd.f32 %v224, %v1089
  %v1091 = vpop.f32.mrb[0].mxu0
  %v1092 = vpop.f32.mrb[0].mxu0
  %v1093 = vadd.f32 %v224, %v1092
  %v1094 = vpop.f32.mrb[0].mxu0
  %1095 = vmatprep.mubr.bf16.mxu0 0
  %1096 = vmatmul.mubr.bf16.gmra.mrb[0].mxu0 %v738
  %v1097 = vpop.f32.mrb[0].mxu0
  %v1098 = vadd.f32 %v224, %v1097
  %v1099 = vpop.f32.mrb[0].mxu0
  %v1100 = vpop.f32.mrb[0].mxu0
  %v1101 = vadd.f32 %v224, %v1100
  %v1102 = vpop.f32.mrb[0].mxu0
  %1103 = vmatprep.mubr.bf16.mxu0 0
  %1104 = vmatmul.mubr.bf16.gmra.mrb[0].mxu0 %v741
  %v1105 = vpop.f32.mrb[0].mxu0
  %v1106 = vadd.f32 %v224, %v1105
  %v1107 = vpop.f32.mrb[0].mxu0
  %v1108 = vpop.f32.mrb[0].mxu0
  %v1109 = vadd.f32 %v224, %v1108
  %v1110 = vpop.f32.mrb[0].mxu0
  %1111 = vmatprep.mubr.bf16.mxu0 0
  %1112 = vmatmul.mubr.bf16.gmra.mrb[0].mxu0 %v744
  %v1113 = vpop.f32.mrb[0].mxu0
  %v1114 = vadd.f32 %v224, %v1113
  %v1115 = vpop.f32.mrb[0].mxu0
  %v1116 = vpop.f32.mrb[0].mxu0
  %v1117 = vadd.f32 %v224, %v1116
  %v1118 = vpop.f32.mrb[0].mxu0
  %1119 = vmatprep.mubr.bf16.mxu0 0
  %1120 = vmatmul.mubr.bf16.gmra.mrb[0].mxu0 %v747
  %v1121 = vpop.f32.mrb[0].mxu0
  %v1122 = vadd.f32 %v224, %v1121
  %v1123 = vpop.f32.mrb[0].mxu0
  %v1124 = vpop.f32.mrb[0].mxu0
  %v1125 = vadd.f32 %v224, %v1124
  %v1126 = vpop.f32.mrb[0].mxu0
  %1127 = vmatprep.mubr.bf16.mxu0 0
  %1128 = vmatmul.mubr.bf16.gmra.mrb[0].mxu0 %v750
  %v1129 = vpop.f32.mrb[0].mxu0
  %v1130 = vadd.f32 %v224, %v1129
  %v1131 = vpop.f32.mrb[0].mxu0
  %v1132 = vpop.f32.mrb[0].mxu0
  %v1133 = vadd.f32 %v224, %v1132
  %v1134 = vpop.f32.mrb[0].mxu0
  %1135 = vmatprep.mubr.bf16.mxu0 0
  %1136 = vmatmul.mubr.bf16.gmra.mrb[0].mxu0 %v753
  %v1137 = vpop.f32.mrb[0].mxu0
  %v1138 = vadd.f32 %v224, %v1137
  %v1139 = vpop.f32.mrb[0].mxu0
  %v1140 = vpop.f32.mrb[0].mxu0
  %v1141 = vadd.f32 %v224, %v1140
  %v1142 = vpop.f32.mrb[0].mxu0
  %1143 = vmatprep.mubr.bf16.mxu0 0
  %1144 = vmatmul.mubr.bf16.gmra.mrb[0].mxu0 %v756
  %v1145 = vpop.f32.mrb[0].mxu0
  %v1146 = vadd.f32 %v224, %v1145
  %v1147 = vpop.f32.mrb[0].mxu0
  %v1148 = vpop.f32.mrb[0].mxu0
  %v1149 = vadd.f32 %v224, %v1148
  %v1150 = vpop.f32.mrb[0].mxu0
  %1151 = vmatprep.mubr.bf16.mxu0 0
  %1152 = vmatmul.mubr.bf16.gmra.mrb[0].mxu0 %v759
  %v1153 = vpop.f32.mrb[0].mxu0
  %v1154 = vadd.f32 %v224, %v1153
  %v1155 = vpop.f32.mrb[0].mxu0
  %v1156 = vpop.f32.mrb[0].mxu0
  %v1157 = vadd.f32 %v224, %v1156
  %v1158 = vpop.f32.mrb[0].mxu0
  %1159 = vmatprep.mubr.bf16.mxu0 0
  %1160 = vmatmul.mubr.bf16.gmra.mrb[0].mxu0 %v762
  %v1161 = vpop.f32.mrb[0].mxu0
  %v1162 = vadd.f32 %v224, %v1161
  %v1163 = vpop.f32.mrb[0].mxu0
  %v1164 = vpop.f32.mrb[0].mxu0
  %v1165 = vadd.f32 %v224, %v1164
  %v1166 = vpop.f32.mrb[0].mxu0
  %1167 = vmatprep.mubr.bf16.mxu0 0
  %1168 = vmatmul.mubr.bf16.gmra.mrb[0].mxu0 %v765
  %v1169 = vpop.f32.mrb[0].mxu0
  %v1170 = vadd.f32 %v224, %v1169
  %v1171 = vpop.f32.mrb[0].mxu0
  %v1172 = vpop.f32.mrb[0].mxu0
  %v1173 = vadd.f32 %v224, %v1172
  %v1174 = vpop.f32.mrb[0].mxu0
  %1175 = vmatprep.mubr.bf16.mxu0 0
  %1176 = vmatmul.mubr.bf16.gmra.mrb[0].mxu0 %v768
  %v1177 = vpop.f32.mrb[0].mxu0
  %v1178 = vadd.f32 %v224, %v1177
  %v1179 = vpop.f32.mrb[0].mxu0
  %v1180 = vpop.f32.mrb[0].mxu0
  %v1181 = vadd.f32 %v224, %v1180
  %v1182 = vpop.f32.mrb[0].mxu0
  %1183 = vmatprep.mubr.bf16.mxu0 0
  %1184 = vmatmul.mubr.bf16.gmra.mrb[0].mxu0 %v771
  %v1185 = vpop.f32.mrb[0].mxu0
  %v1186 = vadd.f32 %v224, %v1185
  %v1187 = vpop.f32.mrb[0].mxu0
  %v1188 = vpop.f32.mrb[0].mxu0
  %v1189 = vadd.f32 %v224, %v1188
  %v1190 = vpop.f32.mrb[0].mxu0
  %1191 = vmatprep.mubr.bf16.mxu0 0
  %1192 = vmatmul.mubr.bf16.gmra.mrb[0].mxu0 %v774
  %v1193 = vpop.f32.mrb[0].mxu0
  %v1194 = vadd.f32 %v224, %v1193
  %v1195 = vpop.f32.mrb[0].mxu0
  %v1196 = vpop.f32.mrb[0].mxu0
  %v1197 = vadd.f32 %v224, %v1196
  %v1198 = vpop.f32.mrb[0].mxu0
  %1199 = vmatprep.mubr.bf16.mxu0 0
  %1200 = vmatmul.mubr.bf16.gmra.mrb[0].mxu0 %v777
  %v1201 = vpop.f32.mrb[0].mxu0
  %v1202 = vadd.f32 %v224, %v1201
  %v1203 = vpop.f32.mrb[0].mxu0
  %v1204 = vpop.f32.mrb[0].mxu0
  %v1205 = vadd.f32 %v224, %v1204
  %v1206 = vpop.f32.mrb[0].mxu0
  %1207 = vmatprep.mubr.bf16.mxu0 0
  %1208 = vmatmul.mubr.bf16.gmra.mrb[0].mxu0 %v780
  %v1209 = vpop.f32.mrb[0].mxu0
  %v1210 = vadd.f32 %v224, %v1209
  %v1211 = vpop.f32.mrb[0].mxu0
  %v1212 = vpop.f32.mrb[0].mxu0
  %v1213 = vadd.f32 %v224, %v1212
  %v1214 = vpop.f32.mrb[0].mxu0
  %1215 = vmatprep.mubr.bf16.mxu0 0
  %1216 = vmatmul.mubr.bf16.gmra.mrb[0].mxu0 %v783
  %v1217 = vpop.f32.mrb[0].mxu0
  %v1218 = vadd.f32 %v224, %v1217
  %v1219 = vpop.f32.mrb[0].mxu0
  %v1220 = vpop.f32.mrb[0].mxu0
  %v1221 = vadd.f32 %v224, %v1220
  %v1222 = vpop.f32.mrb[0].mxu0
  %1223 = vmatprep.mubr.bf16.mxu0 0
  %1224 = vmatmul.mubr.bf16.gmra.mrb[0].mxu0 %v786
  %v1225 = vpop.f32.mrb[0].mxu0
  %v1226 = vadd.f32 %v224, %v1225
  %v1227 = vpop.f32.mrb[0].mxu0
  %v1228 = vpop.f32.mrb[0].mxu0
  %v1229 = vadd.f32 %v224, %v1228
  %v1230 = vpop.f32.mrb[0].mxu0
  %1231 = vmatprep.mubr.bf16.mxu0 0
  %1232 = vmatmul.mubr.bf16.gmra.mrb[0].mxu0 %v789
  %v1233 = vpop.f32.mrb[0].mxu0
  %v1234 = vadd.f32 %v224, %v1233
  %v1235 = vpop.f32.mrb[0].mxu0
  %v1236 = vpop.f32.mrb[0].mxu0
  %v1237 = vadd.f32 %v224, %v1236
  %v1238 = vpop.f32.mrb[0].mxu0
  %1239 = vmatprep.mubr.bf16.mxu0 0
  %1240 = vmatmul.mubr.bf16.gmra.mrb[0].mxu0 %v792
  %v1241 = vpop.f32.mrb[0].mxu0
  %v1242 = vadd.f32 %v224, %v1241
  %v1243 = vpop.f32.mrb[0].mxu0
  %v1244 = vpop.f32.mrb[0].mxu0
  %v1245 = vadd.f32 %v224, %v1244
  %v1246 = vpop.f32.mrb[0].mxu0
  %1247 = vmatprep.mubr.bf16.mxu0 0
  %1248 = vmatmul.mubr.bf16.gmra.mrb[0].mxu0 %v795
  %v1249 = vpop.f32.mrb[0].mxu0
  %v1250 = vadd.f32 %v224, %v1249
  %v1251 = vpop.f32.mrb[0].mxu0
  %v1252 = vpop.f32.mrb[0].mxu0
  %v1253 = vadd.f32 %v224, %v1252
  %v1254 = vpop.f32.mrb[0].mxu0
  %1255 = vmatprep.mubr.bf16.mxu0 0
  %1256 = vmatmul.mubr.bf16.gmra.mrb[0].mxu0 %v798
  %v1257 = vpop.f32.mrb[0].mxu0
  %v1258 = vadd.f32 %v224, %v1257
  %v1259 = vpop.f32.mrb[0].mxu0
  %v1260 = vpop.f32.mrb[0].mxu0
  %v1261 = vadd.f32 %v224, %v1260
  %v1262 = vpop.f32.mrb[0].mxu0
  %1263 = vmatprep.mubr.bf16.mxu0 0
  %1264 = vmatmul.mubr.bf16.gmra.mrb[0].mxu0 %v801
  %v1265 = vpop.f32.mrb[0].mxu0
  %v1266 = vadd.f32 %v224, %v1265
  %v1267 = vpop.f32.mrb[0].mxu0
  %v1268 = vpop.f32.mrb[0].mxu0
  %v1269 = vadd.f32 %v224, %v1268
  %v1270 = vpop.f32.mrb[0].mxu0
  %1271 = vmatprep.mubr.bf16.mxu0 0
  %1272 = vmatmul.mubr.bf16.gmra.mrb[0].mxu0 %v804
  %v1273 = vpop.f32.mrb[0].mxu0
  %v1274 = vadd.f32 %v224, %v1273
  %v1275 = vpop.f32.mrb[0].mxu0
  %v1276 = vpop.f32.mrb[0].mxu0
  %v1277 = vadd.f32 %v224, %v1276
  %v1278 = vpop.f32.mrb[0].mxu0
  %1279 = vmatprep.mubr.bf16.mxu0 0
  %1280 = vmatmul.mubr.bf16.gmra.mrb[0].mxu0 %v807
  %v1281 = vpop.f32.mrb[0].mxu0
  %v1282 = vadd.f32 %v224, %v1281
  %v1283 = vpop.f32.mrb[0].mxu0
  %v1284 = vpop.f32.mrb[0].mxu0
  %v1285 = vadd.f32 %v224, %v1284
  %v1286 = vpop.f32.mrb[0].mxu0
  %1287 = vmatprep.mubr.bf16.mxu0 0
  %1288 = vmatmul.mubr.bf16.gmra.mrb[0].mxu0 %v810
  %v1289 = vpop.f32.mrb[0].mxu0
  %v1290 = vadd.f32 %v224, %v1289
  %v1291 = vpop.f32.mrb[0].mxu0
  %v1292 = vpop.f32.mrb[0].mxu0
  %v1293 = vadd.f32 %v224, %v1292
  %v1294 = vpop.f32.mrb[0].mxu0
  %1295 = vmatprep.mubr.bf16.mxu0 0
  %1296 = vmatmul.mubr.bf16.gmra.mrb[0].mxu0 %v813
  %v1297 = vpop.f32.mrb[0].mxu0
  %v1298 = vadd.f32 %v224, %v1297
  %v1299 = vpop.f32.mrb[0].mxu0
  %v1300 = vpop.f32.mrb[0].mxu0
  %v1301 = vadd.f32 %v224, %v1300
  %v1302 = vpop.f32.mrb[0].mxu0
  %1303 = vmatprep.mubr.bf16.mxu0 0
  %1304 = vmatmul.mubr.bf16.gmra.mrb[0].mxu0 %v816
  %v1305 = vpop.f32.mrb[0].mxu0
  %v1306 = vadd.f32 %v224, %v1305
  %v1307 = vpop.f32.mrb[0].mxu0
  %v1308 = vpop.f32.mrb[0].mxu0
  %v1309 = vadd.f32 %v224, %v1308
  %v1310 = vpop.f32.mrb[0].mxu0
  %1311 = vmatprep.mubr.bf16.mxu0 0
  %1312 = vmatmul.mubr.bf16.gmra.mrb[0].mxu0 %v819
  %v1313 = vpop.f32.mrb[0].mxu0
  %v1314 = vadd.f32 %v224, %v1313
  %v1315 = vpop.f32.mrb[0].mxu0
  %v1316 = vpop.f32.mrb[0].mxu0
  %v1317 = vadd.f32 %v224, %v1316
  %v1318 = vpop.f32.mrb[0].mxu0
  %1319 = vmatprep.mubr.bf16.mxu0 0
  %1320 = vmatmul.mubr.bf16.gmra.mrb[0].mxu0 %v822
  %v1321 = vpop.f32.mrb[0].mxu0
  %v1322 = vadd.f32 %v224, %v1321
  %v1323 = vpop.f32.mrb[0].mxu0
  %v1324 = vpop.f32.mrb[0].mxu0
  %v1325 = vadd.f32 %v224, %v1324
  %v1326 = vpop.f32.mrb[0].mxu0
  %1327 = vmatprep.mubr.bf16.mxu0 0
  %1328 = vmatmul.mubr.bf16.gmra.mrb[0].mxu0 %v825
  %v1329 = vpop.f32.mrb[0].mxu0
  %v1330 = vadd.f32 %v224, %v1329
  %v1331 = vpop.f32.mrb[0].mxu0
  %v1332 = vpop.f32.mrb[0].mxu0
  %v1333 = vadd.f32 %v224, %v1332
  %v1334 = vpop.f32.mrb[0].mxu0
  %1335 = vmatprep.mubr.bf16.mxu0 0
  %1336 = vmatmul.mubr.bf16.gmra.mrb[0].mxu0 %v828
  %v1337 = vpop.f32.mrb[0].mxu0
  %v1338 = vadd.f32 %v224, %v1337
  %v1339 = vpop.f32.mrb[0].mxu0
  %v1340 = vpop.f32.mrb[0].mxu0
  %v1341 = vadd.f32 %v224, %v1340
  %v1342 = vpop.f32.mrb[0].mxu0
  %1343 = vmatprep.mubr.bf16.mxu0 0
  %1344 = vmatmul.mubr.bf16.gmra.mrb[0].mxu0 %v831
  %v1345 = vpop.f32.mrb[0].mxu0
  %v1346 = vadd.f32 %v224, %v1345
  %v1347 = vpop.f32.mrb[0].mxu0
  %v1348 = vpop.f32.mrb[0].mxu0
  %v1349 = vadd.f32 %v224, %v1348
  %v1350 = vpop.f32.mrb[0].mxu0
  %1351 = vmatprep.mubr.bf16.mxu0 0
  %1352 = vmatmul.mubr.bf16.gmra.mrb[0].mxu0 %v834
  %v1353 = vpop.f32.mrb[0].mxu0
  %v1354 = vadd.f32 %v224, %v1353
  %v1355 = vpop.f32.mrb[0].mxu0
  %v1356 = vpop.f32.mrb[0].mxu0
  %v1357 = vadd.f32 %v224, %v1356
  %v1358 = vpop.f32.mrb[0].mxu0
  %1359 = vmatprep.mubr.bf16.mxu0 0
  %1360 = vmatmul.mubr.bf16.gmra.mrb[0].mxu0 %v837
  %v1361 = vpop.f32.mrb[0].mxu0
  %v1362 = vadd.f32 %v224, %v1361
  %v1363 = vpop.f32.mrb[0].mxu0
  %v1364 = vpop.f32.mrb[0].mxu0
  %v1365 = vadd.f32 %v224, %v1364
  %v1366 = vpop.f32.mrb[0].mxu0
  %1367 = vmatprep.mubr.bf16.mxu0 0
  %1368 = vmatmul.mubr.bf16.gmra.mrb[0].mxu0 %v840
  %v1369 = vpop.f32.mrb[0].mxu0
  %v1370 = vadd.f32 %v224, %v1369
  %v1371 = vpop.f32.mrb[0].mxu0
  %v1372 = vpop.f32.mrb[0].mxu0
  %v1373 = vadd.f32 %v224, %v1372
  %v1374 = vpop.f32.mrb[0].mxu0
  %1375 = vmatprep.mubr.bf16.mxu0 0
  %1376 = vmatmul.mubr.bf16.gmra.mrb[0].mxu0 %v843
  %v1377 = vpop.f32.mrb[0].mxu0
  %v1378 = vadd.f32 %v224, %v1377
  %v1379 = vpop.f32.mrb[0].mxu0
  %v1380 = vpop.f32.mrb[0].mxu0
  %v1381 = vadd.f32 %v224, %v1380
  %v1382 = vpop.f32.mrb[0].mxu0
  %1383 = vmatprep.mubr.bf16.mxu0 0
  %1384 = vmatmul.mubr.bf16.gmra.mrb[0].mxu0 %v846
  %v1385 = vpop.f32.mrb[0].mxu0
  %v1386 = vadd.f32 %v224, %v1385
  %v1387 = vpop.f32.mrb[0].mxu0
  %v1388 = vpop.f32.mrb[0].mxu0
  %v1389 = vadd.f32 %v224, %v1388
  %v1390 = vpop.f32.mrb[0].mxu0
  %1391 = vmatprep.mubr.bf16.mxu0 0
  %1392 = vmatmul.mubr.bf16.gmra.mrb[0].mxu0 %v849
  %v1393 = vpop.f32.mrb[0].mxu0
  %v1394 = vadd.f32 %v224, %v1393
  %v1395 = vpop.f32.mrb[0].mxu0
  %v1396 = vpop.f32.mrb[0].mxu0
  %v1397 = vadd.f32 %v224, %v1396
  %v1398 = vpop.f32.mrb[0].mxu0
  %1399 = vmatprep.mubr.bf16.mxu0 0
  %1400 = vmatmul.mubr.bf16.gmra.mrb[0].mxu0 %v852
  %v1401 = vpop.f32.mrb[0].mxu0
  %v1402 = vadd.f32 %v224, %v1401
  %v1403 = vpop.f32.mrb[0].mxu0
  %v1404 = vpop.f32.mrb[0].mxu0
  %v1405 = vadd.f32 %v224, %v1404
  %v1406 = vpop.f32.mrb[0].mxu0
  %1407 = vmatprep.mubr.bf16.mxu0 0
  %1408 = vmatmul.mubr.bf16.gmra.mrb[0].mxu0 %v855
  %v1409 = vpop.f32.mrb[0].mxu0
  %v1410 = vadd.f32 %v224, %v1409
  %v1411 = vpop.f32.mrb[0].mxu0
  %v1412 = vpop.f32.mrb[0].mxu0
  %v1413 = vadd.f32 %v224, %v1412
  %v1414 = vpop.f32.mrb[0].mxu0
  %1415 = vmatprep.mubr.bf16.mxu0 0
  %1416 = vmatmul.mubr.bf16.gmra.mrb[0].mxu0 %v858
  %v1417 = vpop.f32.mrb[0].mxu0
  %v1418 = vadd.f32 %v224, %v1417
  %v1419 = vpop.f32.mrb[0].mxu0
  %v1420 = vpop.f32.mrb[0].mxu0
  %v1421 = vadd.f32 %v224, %v1420
  %v1422 = vpop.f32.mrb[0].mxu0
  %1423 = vmatprep.mubr.bf16.mxu0 0
  %1424 = vmatmul.mubr.bf16.gmra.mrb[0].mxu0 %v861
  %v1425 = vpop.f32.mrb[0].mxu0
  %v1426 = vadd.f32 %v224, %v1425
  %v1427 = vpop.f32.mrb[0].mxu0
  %v1428 = vpop.f32.mrb[0].mxu0
  %v1429 = vadd.f32 %v224, %v1428
  %v1430 = vpop.f32.mrb[0].mxu0
  %1431 = vmatprep.mubr.bf16.mxu0 0
  %1432 = vmatmul.mubr.bf16.gmra.mrb[0].mxu0 %v864
  %v1433 = vpop.f32.mrb[0].mxu0
  %v1434 = vadd.f32 %v224, %v1433
  %v1435 = vpop.f32.mrb[0].mxu0
  %v1436 = vpop.f32.mrb[0].mxu0
  %v1437 = vadd.f32 %v224, %v1436
  %v1438 = vpop.f32.mrb[0].mxu0
  %1439 = vmatprep.mubr.bf16.mxu0 0
  %1440 = vmatmul.mubr.bf16.gmra.mrb[0].mxu0 %v867
  %v1441 = vpop.f32.mrb[0].mxu0
  %v1442 = vadd.f32 %v224, %v1441
  %v1443 = vpop.f32.mrb[0].mxu0
  %v1444 = vpop.f32.mrb[0].mxu0
  %v1445 = vadd.f32 %v224, %v1444
  %v1446 = vpop.f32.mrb[0].mxu0
  %1447 = vmatprep.mubr.bf16.mxu0 0
  %1448 = vmatmul.mubr.bf16.gmra.mrb[0].mxu0 %v870
  %v1449 = vpop.f32.mrb[0].mxu0
  %v1450 = vadd.f32 %v224, %v1449
  %v1451 = vpop.f32.mrb[0].mxu0
  %v1452 = vpop.f32.mrb[0].mxu0
  %v1453 = vadd.f32 %v224, %v1452
  %v1454 = vpop.f32.mrb[0].mxu0
  %1455 = vmatprep.mubr.bf16.mxu0 0
  %1456 = vmatmul.mubr.bf16.gmra.mrb[0].mxu0 %v873
  %v1457 = vpop.f32.mrb[0].mxu0
  %v1458 = vadd.f32 %v224, %v1457
  %v1459 = vpop.f32.mrb[0].mxu0
  %v1460 = vpop.f32.mrb[0].mxu0
  %v1461 = vadd.f32 %v224, %v1460
  %v1462 = vpop.f32.mrb[0].mxu0
  %1463 = vmatprep.mubr.bf16.mxu0 0
  %1464 = vmatmul.mubr.bf16.gmra.mrb[0].mxu0 %v876
  %v1465 = vpop.f32.mrb[0].mxu0
  %v1466 = vadd.f32 %v224, %v1465
  %v1467 = vpop.f32.mrb[0].mxu0
  %v1468 = vpop.f32.mrb[0].mxu0
  %v1469 = vadd.f32 %v224, %v1468
  %v1470 = vpop.f32.mrb[0].mxu0
  %1471 = vmatprep.mubr.bf16.mxu0 0
  %1472 = vmatmul.mubr.bf16.gmra.mrb[0].mxu0 %v879
  %v1473 = vpop.f32.mrb[0].mxu0
  %v1474 = vadd.f32 %v224, %v1473
  %v1475 = vpop.f32.mrb[0].mxu0
  %v1476 = vpop.f32.mrb[0].mxu0
  %v1477 = vadd.f32 %v224, %v1476
  %v1478 = vpop.f32.mrb[0].mxu0
  %1479 = vmatprep.mubr.bf16.mxu0 0
  %1480 = vmatmul.mubr.bf16.gmra.mrb[0].mxu0 %v882
  %v1481 = vpop.f32.mrb[0].mxu0
  %v1482 = vadd.f32 %v224, %v1481
  %v1483 = vpop.f32.mrb[0].mxu0
  %v1484 = vpop.f32.mrb[0].mxu0
  %v1485 = vadd.f32 %v224, %v1484
  %v1486 = vpop.f32.mrb[0].mxu0
  %1487 = vmatprep.mubr.bf16.mxu0 0
  %1488 = vmatmul.mubr.bf16.gmra.mrb[0].mxu0 %v885
  %v1489 = vpop.f32.mrb[0].mxu0
  %v1490 = vadd.f32 %v224, %v1489
  %v1491 = vpop.f32.mrb[0].mxu0
  %v1492 = vpop.f32.mrb[0].mxu0
  %v1493 = vadd.f32 %v224, %v1492
  %v1494 = vpop.f32.mrb[0].mxu0
  %1495 = vmatprep.mubr.bf16.mxu0 0
  %1496 = vmatmul.mubr.bf16.gmra.mrb[0].mxu0 %v888
  %v1497 = vpop.f32.mrb[0].mxu0
  %v1498 = vadd.f32 %v224, %v1497
  %v1499 = vpop.f32.mrb[0].mxu0
  %v1500 = vpop.f32.mrb[0].mxu0
  %v1501 = vadd.f32 %v224, %v1500
  %v1502 = vpop.f32.mrb[0].mxu0
  %1503 = vmatprep.mubr.bf16.mxu0 0
  %1504 = vmatmul.mubr.bf16.gmra.mrb[0].mxu0 %v891
  %v1505 = vpop.f32.mrb[0].mxu0
  %v1506 = vadd.f32 %v224, %v1505
  %v1507 = vpop.f32.mrb[0].mxu0
  %v1508 = vpop.f32.mrb[0].mxu0
  %v1509 = vadd.f32 %v224, %v1508
  %v1510 = vpop.f32.mrb[0].mxu0
  %1511 = vmatprep.mubr.bf16.mxu0 0
  %1512 = vmatmul.mubr.bf16.gmra.mrb[0].mxu0 %v894
  %v1513 = vpop.f32.mrb[0].mxu0
  %v1514 = vadd.f32 %v224, %v1513
  %v1515 = vpop.f32.mrb[0].mxu0
  %v1516 = vpop.f32.mrb[0].mxu0
  %v1517 = vadd.f32 %v224, %v1516
  %v1518 = vpop.f32.mrb[0].mxu0
  %1519 = vmatprep.mubr.bf16.mxu0 0
  %1520 = vmatmul.mubr.bf16.gmra.mrb[0].mxu0 %v897
  %v1521 = vpop.f32.mrb[0].mxu0
  %v1522 = vadd.f32 %v224, %v1521
  %v1523 = vpop.f32.mrb[0].mxu0
  %v1524 = vpop.f32.mrb[0].mxu0
  %v1525 = vadd.f32 %v224, %v1524
  %v1526 = vpop.f32.mrb[0].mxu0
  %1527 = vmatprep.mubr.bf16.mxu0 0
  %1528 = vmatmul.mubr.bf16.gmra.mrb[0].mxu0 %v900
  %v1529 = vpop.f32.mrb[0].mxu0
  %v1530 = vadd.f32 %v224, %v1529
  %v1531 = vpop.f32.mrb[0].mxu0
  %v1532 = vpop.f32.mrb[0].mxu0
  %v1533 = vadd.f32 %v224, %v1532
  %v1534 = vpop.f32.mrb[0].mxu0
  %1535 = vmatprep.mubr.bf16.mxu0 0
  %1536 = vmatmul.mubr.bf16.gmra.mrb[0].mxu0 %v903
  %v1537 = vpop.f32.mrb[0].mxu0
  %v1538 = vadd.f32 %v224, %v1537
  %v1539 = vpop.f32.mrb[0].mxu0
  %v1540 = vpop.f32.mrb[0].mxu0
  %v1541 = vadd.f32 %v224, %v1540
  %v1542 = vpop.f32.mrb[0].mxu0
  %1543 = vmatprep.mubr.bf16.mxu0 0
  %1544 = vmatmul.mubr.bf16.gmra.mrb[0].mxu0 %v906
  %v1545 = vpop.f32.mrb[0].mxu0
  %v1546 = vadd.f32 %v224, %v1545
  %v1547 = vpop.f32.mrb[0].mxu0
  %v1548 = vpop.f32.mrb[0].mxu0
  %v1549 = vadd.f32 %v224, %v1548
  %v1550 = vpop.f32.mrb[0].mxu0
  %1551 = vmatprep.mubr.bf16.mxu0 0
  %1552 = vmatmul.mubr.bf16.gmra.mrb[0].mxu0 %v909
  %v1553 = vpop.f32.mrb[0].mxu0
  %v1554 = vadd.f32 %v224, %v1553
  %v1555 = vpop.f32.mrb[0].mxu0
  %v1556 = vpop.f32.mrb[0].mxu0
  %v1557 = vadd.f32 %v224, %v1556
  %v1558 = vpop.f32.mrb[0].mxu0
  %1559 = vmatprep.mubr.bf16.mxu0 0
  %1560 = vmatmul.mubr.bf16.gmra.mrb[0].mxu0 %v912
  %v1561 = vpop.f32.mrb[0].mxu0
  %v1562 = vadd.f32 %v224, %v1561
  %v1563 = vpop.f32.mrb[0].mxu0
  %v1564 = vpop.f32.mrb[0].mxu0
  %v1565 = vadd.f32 %v224, %v1564
  %v1566 = vpop.f32.mrb[0].mxu0
  %1567 = vmatprep.mubr.bf16.mxu0 0
  %1568 = vmatmul.mubr.bf16.gmra.mrb[0].mxu0 %v915
  %v1569 = vpop.f32.mrb[0].mxu0
  %v1570 = vadd.f32 %v224, %v1569
  %v1571 = vpop.f32.mrb[0].mxu0
  %v1572 = vpop.f32.mrb[0].mxu0
  %v1573 = vadd.f32 %v224, %v1572
  %v1574 = vpop.f32.mrb[0].mxu0
  %1575 = vmatprep.mubr.bf16.mxu0 0
  %1576 = vmatmul.mubr.bf16.gmra.mrb[0].mxu0 %v918
  %v1577 = vpop.f32.mrb[0].mxu0
  %v1578 = vadd.f32 %v224, %v1577
  %v1579 = vpop.f32.mrb[0].mxu0
  %v1580 = vpop.f32.mrb[0].mxu0
  %v1581 = vadd.f32 %v224, %v1580
  %v1582 = vpop.f32.mrb[0].mxu0
  %1583 = vmatprep.mubr.bf16.mxu0 0
  %1584 = vmatmul.mubr.bf16.gmra.mrb[0].mxu0 %v921
  %v1585 = vpop.f32.mrb[0].mxu0
  %v1586 = vadd.f32 %v224, %v1585
  %v1587 = vpop.f32.mrb[0].mxu0
  %v1588 = vpop.f32.mrb[0].mxu0
  %v1589 = vadd.f32 %v224, %v1588
  %v1590 = vpop.f32.mrb[0].mxu0
  %1591 = vmatprep.mubr.bf16.mxu0 0
  %1592 = vmatmul.mubr.bf16.gmra.mrb[0].mxu0 %v924
  %v1593 = vpop.f32.mrb[0].mxu0
  %v1594 = vadd.f32 %v224, %v1593
  %v1595 = vpop.f32.mrb[0].mxu0
  %v1596 = vpop.f32.mrb[0].mxu0
  %v1597 = vadd.f32 %v224, %v1596
  %v1598 = vpop.f32.mrb[0].mxu0
  %1599 = vmatprep.mubr.bf16.mxu0 0
  %1600 = vmatmul.mubr.bf16.gmra.mrb[0].mxu0 %v927
  %v1601 = vpop.f32.mrb[0].mxu0
  %v1602 = vadd.f32 %v224, %v1601
  %v1603 = vpop.f32.mrb[0].mxu0
  %v1604 = vpop.f32.mrb[0].mxu0
  %v1605 = vadd.f32 %v224, %v1604
  %v1606 = vpop.f32.mrb[0].mxu0
  %1607 = vmatprep.mubr.bf16.mxu0 0
  %1608 = vmatmul.mubr.bf16.gmra.mrb[0].mxu0 %v930
  %v1609 = vpop.f32.mrb[0].mxu0
  %v1610 = vadd.f32 %v224, %v1609
  %v1611 = vpop.f32.mrb[0].mxu0
  %v1612 = vpop.f32.mrb[0].mxu0
  %v1613 = vadd.f32 %v224, %v1612
  %v1614 = vpop.f32.mrb[0].mxu0
  %1615 = vmatprep.mubr.bf16.mxu0 0
  %1616 = vmatmul.mubr.bf16.gmra.mrb[0].mxu0 %v933
  %v1617 = vpop.f32.mrb[0].mxu0
  %v1618 = vadd.f32 %v224, %v1617
  %v1619 = vpop.f32.mrb[0].mxu0
  %v1620 = vpop.f32.mrb[0].mxu0
  %v1621 = vadd.f32 %v224, %v1620
  %v1622 = vpop.f32.mrb[0].mxu0
  %1623 = vmatprep.mubr.bf16.mxu0 0
  %1624 = vmatmul.mubr.bf16.gmra.mrb[0].mxu0 %v936
  %v1625 = vpop.f32.mrb[0].mxu0
  %v1626 = vadd.f32 %v224, %v1625
  %v1627 = vpop.f32.mrb[0].mxu0
  %v1628 = vpop.f32.mrb[0].mxu0
  %v1629 = vadd.f32 %v224, %v1628
  %v1630 = vpop.f32.mrb[0].mxu0
  %1631 = vmatprep.mubr.bf16.mxu0 0
  %1632 = vmatmul.mubr.bf16.gmra.mrb[0].mxu0 %v939
  %v1633 = vpop.f32.mrb[0].mxu0
  %v1634 = vadd.f32 %v224, %v1633
  %v1635 = vpop.f32.mrb[0].mxu0
  %v1636 = vpop.f32.mrb[0].mxu0
  %v1637 = vadd.f32 %v224, %v1636
  %v1638 = vpop.f32.mrb[0].mxu0
  %1639 = vmatprep.mubr.bf16.mxu0 0
  %1640 = vmatmul.mubr.bf16.gmra.mrb[0].mxu0 %v942
  %v1641 = vpop.f32.mrb[0].mxu0
  %v1642 = vadd.f32 %v224, %v1641
  %v1643 = vpop.f32.mrb[0].mxu0
  %v1644 = vpop.f32.mrb[0].mxu0
  %v1645 = vadd.f32 %v224, %v1644
  %v1646 = vpop.f32.mrb[0].mxu0
  %1647 = vmatprep.mubr.bf16.mxu0 0
  %1648 = vmatmul.mubr.bf16.gmra.mrb[0].mxu0 %v945
  %v1649 = vpop.f32.mrb[0].mxu0
  %v1650 = vadd.f32 %v224, %v1649
  %v1651 = vpop.f32.mrb[0].mxu0
  %v1652 = vpop.f32.mrb[0].mxu0
  %v1653 = vadd.f32 %v224, %v1652
  %v1654 = vpop.f32.mrb[0].mxu0
  %1655 = vmatprep.mubr.bf16.mxu0 0
  %1656 = vmatmul.mubr.bf16.gmra.mrb[0].mxu0 %v948
  %v1657 = vpop.f32.mrb[0].mxu0
  %v1658 = vadd.f32 %v224, %v1657
  %v1659 = vpop.f32.mrb[0].mxu0
  %v1660 = vpop.f32.mrb[0].mxu0
  %v1661 = vadd.f32 %v224, %v1660
  %v1662 = vpop.f32.mrb[0].mxu0
  %1663 = vmatprep.mubr.bf16.mxu0 0
  %1664 = vmatmul.mubr.bf16.gmra.mrb[0].mxu0 %v951
  %v1665 = vpop.f32.mrb[0].mxu0
  %v1666 = vadd.f32 %v224, %v1665
  %v1667 = vpop.f32.mrb[0].mxu0
  %v1668 = vpop.f32.mrb[0].mxu0
  %v1669 = vadd.f32 %v224, %v1668
  %v1670 = vpop.f32.mrb[0].mxu0
  %1671 = vmatprep.mubr.bf16.mxu0 0
  %1672 = vmatmul.mubr.bf16.gmra.mrb[0].mxu0 %v954
  %v1673 = vpop.f32.mrb[0].mxu0
  %v1674 = vadd.f32 %v224, %v1673
  %v1675 = vpop.f32.mrb[0].mxu0
  %v1676 = vpop.f32.mrb[0].mxu0
  %v1677 = vadd.f32 %v224, %v1676
  %v1678 = vpop.f32.mrb[0].mxu0
  %1679 = vmatprep.mubr.bf16.mxu0 0
  %1680 = vmatmul.mubr.bf16.gmra.mrb[0].mxu0 %v957
  %v1681 = vpop.f32.mrb[0].mxu0
  %v1682 = vadd.f32 %v224, %v1681
  %v1683 = vpop.f32.mrb[0].mxu0
  %v1684 = vpop.f32.mrb[0].mxu0
  %v1685 = vadd.f32 %v224, %v1684
  %v1686 = vpop.f32.mrb[0].mxu0
  %1687 = vmatprep.mubr.bf16.mxu0 0
  %1688 = vmatmul.mubr.bf16.gmra.mrb[0].mxu0 %v960
  %v1689 = vpop.f32.mrb[0].mxu0
  %v1690 = vadd.f32 %v224, %v1689
  %v1691 = vpop.f32.mrb[0].mxu0
  %v1692 = vpop.f32.mrb[0].mxu0
  %v1693 = vadd.f32 %v224, %v1692
  %v1694 = vpop.f32.mrb[0].mxu0
  %1695 = vmatprep.mubr.bf16.mxu0 0
  %1696 = vmatmul.mubr.bf16.gmra.mrb[0].mxu0 %v963
  %v1697 = vpop.f32.mrb[0].mxu0
  %v1698 = vadd.f32 %v224, %v1697
  %v1699 = vpop.f32.mrb[0].mxu0
  %v1700 = vpop.f32.mrb[0].mxu0
  %v1701 = vadd.f32 %v224, %v1700
  %v1702 = vpop.f32.mrb[0].mxu0
  %1703 = vmatprep.mubr.bf16.mxu0 0
  %1704 = vmatmul.mubr.bf16.gmra.mrb[0].mxu0 %v966
  %v1705 = vpop.f32.mrb[0].mxu0
  %v1706 = vadd.f32 %v224, %v1705
  %v1707 = vpop.f32.mrb[0].mxu0
  %v1708 = vpop.f32.mrb[0].mxu0
  %v1709 = vadd.f32 %v224, %v1708
  %v1710 = vpop.f32.mrb[0].mxu0
  %1711 = vmatprep.mubr.bf16.mxu0 0
  %1712 = vmatmul.mubr.bf16.gmra.mrb[0].mxu0 %v969
  %v1713 = vpop.f32.mrb[0].mxu0
  %v1714 = vadd.f32 %v224, %v1713
  %v1715 = vpop.f32.mrb[0].mxu0
  %v1716 = vpop.f32.mrb[0].mxu0
  %v1717 = vadd.f32 %v224, %v1716
  %v1718 = vpop.f32.mrb[0].mxu0
  %1719 = vmatprep.mubr.bf16.mxu0 0
  %1720 = vmatmul.mubr.bf16.gmra.mrb[0].mxu0 %v972
  %v1721 = vpop.f32.mrb[0].mxu0
  %v1722 = vadd.f32 %v224, %v1721
  %v1723 = vpop.f32.mrb[0].mxu0
  %v1724 = vpop.f32.mrb[0].mxu0
  %v1725 = vadd.f32 %v224, %v1724
  %v1726 = vpop.f32.mrb[0].mxu0
  %1727 = vmatprep.mubr.bf16.mxu0 0
  %1728 = vmatmul.mubr.bf16.gmra.mrb[0].mxu0 %v975
  %v1729 = vpop.f32.mrb[0].mxu0
  %v1730 = vadd.f32 %v224, %v1729
  %v1731 = vpop.f32.mrb[0].mxu0
  %v1732 = vpop.f32.mrb[0].mxu0
  %v1733 = vadd.f32 %v224, %v1732
  %v1734 = vpop.f32.mrb[0].mxu0
  %1735 = vmatprep.mubr.bf16.mxu0 0
  %1736 = vmatmul.mubr.bf16.gmra.mrb[0].mxu0 %v978
  %v1737 = vpop.f32.mrb[0].mxu0
  %v1738 = vadd.f32 %v224, %v1737
  %v1739 = vpop.f32.mrb[0].mxu0
  %v1740 = vpop.f32.mrb[0].mxu0
  %v1741 = vadd.f32 %v224, %v1740
  %v1742 = vpop.f32.mrb[0].mxu0
  %1743 = vmatprep.mubr.bf16.mxu0 0
  %1744 = vmatmul.mubr.bf16.gmra.mrb[0].mxu0 %v981
  %v1745 = vpop.f32.mrb[0].mxu0
  %v1746 = vadd.f32 %v224, %v1745
  %v1747 = vpop.f32.mrb[0].mxu0
  %v1748 = vpop.f32.mrb[0].mxu0
  %v1749 = vadd.f32 %v224, %v1748
  %v1750 = vpop.f32.mrb[0].mxu0
  %1751 = vmatprep.mubr.bf16.mxu0 0
  %1752 = vmatmul.mubr.bf16.gmra.mrb[0].mxu0 %v984
  %v1753 = vpop.f32.mrb[0].mxu0
  %v1754 = vadd.f32 %v224, %v1753
  %v1755 = vpop.f32.mrb[0].mxu0
  %v1756 = vpop.f32.mrb[0].mxu0
  %v1757 = vadd.f32 %v224, %v1756
  %v1758 = vpop.f32.mrb[0].mxu0
  %1759 = vmatprep.mubr.bf16.mxu0 0
  %1760 = vmatmul.mubr.bf16.gmra.mrb[0].mxu0 %v987
  %v1761 = vpop.f32.mrb[0].mxu0
  %v1762 = vadd.f32 %v224, %v1761
  %v1763 = vpop.f32.mrb[0].mxu0
  %v1764 = vpop.f32.mrb[0].mxu0
  %v1765 = vadd.f32 %v224, %v1764
  %v1766 = vpop.f32.mrb[0].mxu0
  %1767 = vmatprep.mubr.bf16.mxu0 0
  %1768 = vmatmul.mubr.bf16.gmra.mrb[0].mxu0 %v990
  %v1769 = vpop.f32.mrb[0].mxu0
  %v1770 = vadd.f32 %v224, %v1769
  %v1771 = vpop.f32.mrb[0].mxu0
  %v1772 = vpop.f32.mrb[0].mxu0
  %v1773 = vadd.f32 %v224, %v1772
  %v1774 = vpop.f32.mrb[0].mxu0
  %1775 = vmatprep.mubr.bf16.mxu0 0
  %1776 = vmatmul.mubr.bf16.gmra.mrb[0].mxu0 %v993
  %v1777 = vpop.f32.mrb[0].mxu0
  %v1778 = vadd.f32 %v224, %v1777
  %v1779 = vpop.f32.mrb[0].mxu0
  %v1780 = vpop.f32.mrb[0].mxu0
  %v1781 = vadd.f32 %v224, %v1780
  %v1782 = vpop.f32.mrb[0].mxu0
  %1783 = vmatprep.mubr.bf16.mxu0 0
  %1784 = vmatmul.mubr.bf16.gmra.mrb[0].mxu0 %v996
  %v1785 = vpop.f32.mrb[0].mxu0
  %v1786 = vadd.f32 %v224, %v1785
  %v1787 = vpop.f32.mrb[0].mxu0
  %v1788 = vpop.f32.mrb[0].mxu0
  %v1789 = vadd.f32 %v224, %v1788
  %v1790 = vpop.f32.mrb[0].mxu0
  %1791 = vmatprep.mubr.bf16.mxu0 0
  %1792 = vmatmul.mubr.bf16.gmra.mrb[0].mxu0 %v999
  %v1793 = vpop.f32.mrb[0].mxu0
  %v1794 = vadd.f32 %v224, %v1793
  %v1795 = vpop.f32.mrb[0].mxu0
  %v1796 = vpop.f32.mrb[0].mxu0
  %v1797 = vadd.f32 %v224, %v1796
  %v1798 = vpop.f32.mrb[0].mxu0
  %1799 = vmatprep.mubr.bf16.mxu0 0
  %1800 = vmatmul.mubr.bf16.gmra.mrb[0].mxu0 %v1002
  %v1801 = vpop.f32.mrb[0].mxu0
  %v1802 = vadd.f32 %v224, %v1801
  %v1803 = vpop.f32.mrb[0].mxu0
  %v1804 = vpop.f32.mrb[0].mxu0
  %v1805 = vadd.f32 %v224, %v1804
  %v1806 = vpop.f32.mrb[0].mxu0
  %1807 = vmatprep.mubr.bf16.mxu0 0
  %1808 = vmatmul.mubr.bf16.gmra.mrb[0].mxu0 %v1005
  %v1809 = vpop.f32.mrb[0].mxu0
  %v1810 = vadd.f32 %v224, %v1809
  %v1811 = vpop.f32.mrb[0].mxu0
  %v1812 = vpop.f32.mrb[0].mxu0
  %v1813 = vadd.f32 %v224, %v1812
  %v1814 = vpop.f32.mrb[0].mxu0
  %1815 = vmatprep.mubr.bf16.mxu0 0
  %1816 = vmatmul.mubr.bf16.gmra.mrb[0].mxu0 %v1008
  %v1817 = vpop.f32.mrb[0].mxu0
  %v1818 = vadd.f32 %v224, %v1817
  %v1819 = vpop.f32.mrb[0].mxu0
  %v1820 = vpop.f32.mrb[0].mxu0
  %v1821 = vadd.f32 %v224, %v1820
  %v1822 = vpop.f32.mrb[0].mxu0
  %1823 = vmatprep.mubr.bf16.mxu0 0
  %1824 = vmatmul.mubr.bf16.gmra.mrb[0].mxu0 %v1011
  %v1825 = vpop.f32.mrb[0].mxu0
  %v1826 = vadd.f32 %v224, %v1825
  %v1827 = vpop.f32.mrb[0].mxu0
  %v1828 = vpop.f32.mrb[0].mxu0
  %v1829 = vadd.f32 %v224, %v1828
  %v1830 = vpop.f32.mrb[0].mxu0
  %1831 = vmatprep.mubr.bf16.mxu0 0
  %1832 = vmatmul.mubr.bf16.gmra.mrb[0].mxu0 %v1014
  %v1833 = vpop.f32.mrb[0].mxu0
  %v1834 = vadd.f32 %v224, %v1833
  %v1835 = vpop.f32.mrb[0].mxu0
  %v1836 = vpop.f32.mrb[0].mxu0
  %v1837 = vadd.f32 %v224, %v1836
  %v1838 = vpop.f32.mrb[0].mxu0
  %1839 = vdwg.mxu0
  %v1840 = vmax.f32 %v1058, 0.0
  %v1841 = vmax.f32 %v1061, 0.0
  %v1842 = vmax.f32 %v1066, 0.0
  %v1843 = vmax.f32 %v1069, 0.0
  %v1844 = vmax.f32 %v1074, 0.0
  %v1845 = vmax.f32 %v1077, 0.0
  %v1846 = vmax.f32 %v1082, 0.0
  %v1847 = vmax.f32 %v1085, 0.0
  %v1848 = vmax.f32 %v1090, 0.0
  %v1849 = vmax.f32 %v1093, 0.0
  %v1850 = vmax.f32 %v1098, 0.0
  %v1851 = vmax.f32 %v1101, 0.0
  %v1852 = vmax.f32 %v1106, 0.0
  %v1853 = vmax.f32 %v1109, 0.0
  %v1854 = vmax.f32 %v1114, 0.0
  %v1855 = vmax.f32 %v1117, 0.0
  %v1856 = vmax.f32 %v1122, 0.0
  %v1857 = vmax.f32 %v1125, 0.0
  %v1858 = vmax.f32 %v1130, 0.0
  %v1859 = vmax.f32 %v1133, 0.0
  %v1860 = vmax.f32 %v1138, 0.0
  %v1861 = vmax.f32 %v1141, 0.0
  %v1862 = vmax.f32 %v1146, 0.0
  %v1863 = vmax.f32 %v1149, 0.0
  %v1864 = vmax.f32 %v1154, 0.0
  %v1865 = vmax.f32 %v1157, 0.0
  %v1866 = vmax.f32 %v1162, 0.0
  %v1867 = vmax.f32 %v1165, 0.0
  %v1868 = vmax.f32 %v1170, 0.0
  %v1869 = vmax.f32 %v1173, 0.0
  %v1870 = vmax.f32 %v1178, 0.0
  %v1871 = vmax.f32 %v1181, 0.0
  %v1872 = vmax.f32 %v1186, 0.0
  %v1873 = vmax.f32 %v1189, 0.0
  %v1874 = vmax.f32 %v1194, 0.0
  %v1875 = vmax.f32 %v1197, 0.0
  %v1876 = vmax.f32 %v1202, 0.0
  %v1877 = vmax.f32 %v1205, 0.0
  %v1878 = vmax.f32 %v1210, 0.0
  %v1879 = vmax.f32 %v1213, 0.0
  %v1880 = vmax.f32 %v1218, 0.0
  %v1881 = vmax.f32 %v1221, 0.0
  %v1882 = vmax.f32 %v1226, 0.0
  %v1883 = vmax.f32 %v1229, 0.0
  %v1884 = vmax.f32 %v1234, 0.0
  %v1885 = vmax.f32 %v1237, 0.0
  %v1886 = vmax.f32 %v1242, 0.0
  %v1887 = vmax.f32 %v1245, 0.0
  %v1888 = vmax.f32 %v1250, 0.0
  %v1889 = vmax.f32 %v1253, 0.0
  %v1890 = vmax.f32 %v1258, 0.0
  %v1891 = vmax.f32 %v1261, 0.0
  %v1892 = vmax.f32 %v1266, 0.0
  %v1893 = vmax.f32 %v1269, 0.0
  %v1894 = vmax.f32 %v1274, 0.0
  %v1895 = vmax.f32 %v1277, 0.0
  %v1896 = vmax.f32 %v1282, 0.0
  %v1897 = vmax.f32 %v1285, 0.0
  %v1898 = vmax.f32 %v1290, 0.0
  %v1899 = vmax.f32 %v1293, 0.0
  %v1900 = vmax.f32 %v1298, 0.0
  %v1901 = vmax.f32 %v1301, 0.0
  %v1902 = vmax.f32 %v1306, 0.0
  %v1903 = vmax.f32 %v1309, 0.0
  %v1904 = vmax.f32 %v1314, 0.0
  %v1905 = vmax.f32 %v1317, 0.0
  %v1906 = vmax.f32 %v1322, 0.0
  %v1907 = vmax.f32 %v1325, 0.0
  %v1908 = vmax.f32 %v1330, 0.0
  %v1909 = vmax.f32 %v1333, 0.0
  %v1910 = vmax.f32 %v1338, 0.0
  %v1911 = vmax.f32 %v1341, 0.0
  %v1912 = vmax.f32 %v1346, 0.0
  %v1913 = vmax.f32 %v1349, 0.0
  %v1914 = vmax.f32 %v1354, 0.0
  %v1915 = vmax.f32 %v1357, 0.0
  %v1916 = vmax.f32 %v1362, 0.0
  %v1917 = vmax.f32 %v1365, 0.0
  %v1918 = vmax.f32 %v1370, 0.0
  %v1919 = vmax.f32 %v1373, 0.0
  %v1920 = vmax.f32 %v1378, 0.0
  %v1921 = vmax.f32 %v1381, 0.0
  %v1922 = vmax.f32 %v1386, 0.0
  %v1923 = vmax.f32 %v1389, 0.0
  %v1924 = vmax.f32 %v1394, 0.0
  %v1925 = vmax.f32 %v1397, 0.0
  %v1926 = vmax.f32 %v1402, 0.0
  %v1927 = vmax.f32 %v1405, 0.0
  %v1928 = vmax.f32 %v1410, 0.0
  %v1929 = vmax.f32 %v1413, 0.0
  %v1930 = vmax.f32 %v1418, 0.0
  %v1931 = vmax.f32 %v1421, 0.0
  %v1932 = vmax.f32 %v1426, 0.0
  %v1933 = vmax.f32 %v1429, 0.0
  %v1934 = vmax.f32 %v1434, 0.0
  %v1935 = vmax.f32 %v1437, 0.0
  %v1936 = vmax.f32 %v1442, 0.0
  %v1937 = vmax.f32 %v1445, 0.0
  %v1938 = vmax.f32 %v1450, 0.0
  %v1939 = vmax.f32 %v1453, 0.0
  %v1940 = vmax.f32 %v1458, 0.0
  %v1941 = vmax.f32 %v1461, 0.0
  %v1942 = vmax.f32 %v1466, 0.0
  %v1943 = vmax.f32 %v1469, 0.0
  %v1944 = vmax.f32 %v1474, 0.0
  %v1945 = vmax.f32 %v1477, 0.0
  %v1946 = vmax.f32 %v1482, 0.0
  %v1947 = vmax.f32 %v1485, 0.0
  %v1948 = vmax.f32 %v1490, 0.0
  %v1949 = vmax.f32 %v1493, 0.0
  %v1950 = vmax.f32 %v1498, 0.0
  %v1951 = vmax.f32 %v1501, 0.0
  %v1952 = vmax.f32 %v1506, 0.0
  %v1953 = vmax.f32 %v1509, 0.0
  %v1954 = vmax.f32 %v1514, 0.0
  %v1955 = vmax.f32 %v1517, 0.0
  %v1956 = vmax.f32 %v1522, 0.0
  %v1957 = vmax.f32 %v1525, 0.0
  %v1958 = vmax.f32 %v1530, 0.0
  %v1959 = vmax.f32 %v1533, 0.0
  %v1960 = vmax.f32 %v1538, 0.0
  %v1961 = vmax.f32 %v1541, 0.0
  %v1962 = vmax.f32 %v1546, 0.0
  %v1963 = vmax.f32 %v1549, 0.0
  %v1964 = vmax.f32 %v1554, 0.0
  %v1965 = vmax.f32 %v1557, 0.0
  %v1966 = vmax.f32 %v1562, 0.0
  %v1967 = vmax.f32 %v1565, 0.0
  %v1968 = vmax.f32 %v1570, 0.0
  %v1969 = vmax.f32 %v1573, 0.0
  %v1970 = vmax.f32 %v1578, 0.0
  %v1971 = vmax.f32 %v1581, 0.0
  %v1972 = vmax.f32 %v1586, 0.0
  %v1973 = vmax.f32 %v1589, 0.0
  %v1974 = vmax.f32 %v1594, 0.0
  %v1975 = vmax.f32 %v1597, 0.0
  %v1976 = vmax.f32 %v1602, 0.0
  %v1977 = vmax.f32 %v1605, 0.0
  %v1978 = vmax.f32 %v1610, 0.0
  %v1979 = vmax.f32 %v1613, 0.0
  %v1980 = vmax.f32 %v1618, 0.0
  %v1981 = vmax.f32 %v1621, 0.0
  %v1982 = vmax.f32 %v1626, 0.0
  %v1983 = vmax.f32 %v1629, 0.0
  %v1984 = vmax.f32 %v1634, 0.0
  %v1985 = vmax.f32 %v1637, 0.0
  %v1986 = vmax.f32 %v1642, 0.0
  %v1987 = vmax.f32 %v1645, 0.0
  %v1988 = vmax.f32 %v1650, 0.0
  %v1989 = vmax.f32 %v1653, 0.0
  %v1990 = vmax.f32 %v1658, 0.0
  %v1991 = vmax.f32 %v1661, 0.0
  %v1992 = vmax.f32 %v1666, 0.0
  %v1993 = vmax.f32 %v1669, 0.0
  %v1994 = vmax.f32 %v1674, 0.0
  %v1995 = vmax.f32 %v1677, 0.0
  %v1996 = vmax.f32 %v1682, 0.0
  %v1997 = vmax.f32 %v1685, 0.0
  %v1998 = vmax.f32 %v1690, 0.0
  %v1999 = vmax.f32 %v1693, 0.0
  %v2000 = vmax.f32 %v1698, 0.0
  %v2001 = vmax.f32 %v1701, 0.0
  %v2002 = vmax.f32 %v1706, 0.0
  %v2003 = vmax.f32 %v1709, 0.0
  %v2004 = vmax.f32 %v1714, 0.0
  %v2005 = vmax.f32 %v1717, 0.0
  %v2006 = vmax.f32 %v1722, 0.0
  %v2007 = vmax.f32 %v1725, 0.0
  %v2008 = vmax.f32 %v1730, 0.0
  %v2009 = vmax.f32 %v1733, 0.0
  %v2010 = vmax.f32 %v1738, 0.0
  %v2011 = vmax.f32 %v1741, 0.0
  %v2012 = vmax.f32 %v1746, 0.0
  %v2013 = vmax.f32 %v1749, 0.0
  %v2014 = vmax.f32 %v1754, 0.0
  %v2015 = vmax.f32 %v1757, 0.0
  %v2016 = vmax.f32 %v1762, 0.0
  %v2017 = vmax.f32 %v1765, 0.0
  %v2018 = vmax.f32 %v1770, 0.0
  %v2019 = vmax.f32 %v1773, 0.0
  %v2020 = vmax.f32 %v1778, 0.0
  %v2021 = vmax.f32 %v1781, 0.0
  %v2022 = vmax.f32 %v1786, 0.0
  %v2023 = vmax.f32 %v1789, 0.0
  %v2024 = vmax.f32 %v1794, 0.0
  %v2025 = vmax.f32 %v1797, 0.0
  %v2026 = vmax.f32 %v1802, 0.0
  %v2027 = vmax.f32 %v1805, 0.0
  %v2028 = vmax.f32 %v1810, 0.0
  %v2029 = vmax.f32 %v1813, 0.0
  %v2030 = vmax.f32 %v1818, 0.0
  %v2031 = vmax.f32 %v1821, 0.0
  %v2032 = vmax.f32 %v1826, 0.0
  %v2033 = vmax.f32 %v1829, 0.0
  %v2034 = vmax.f32 %v1834, 0.0
  %v2035 = vmax.f32 %v1837, 0.0
  %vm2036 = vcmask 130048
  %v2037 = vsel %vm2036, %v1840, 0.0
  %v2038 = vsel %vm2036, %v1841, 0.0
  %v2039 = vadd.f32 %v2037, %v2038
  %v2040 = vsel %vm2036, %v1842, 0.0
  %v2041 = vadd.f32 %v2039, %v2040
  %v2042 = vsel %vm2036, %v1843, 0.0
  %v2043 = vadd.f32 %v2041, %v2042
  %v2044 = vsel %vm2036, %v1844, 0.0
  %v2045 = vadd.f32 %v2043, %v2044
  %v2046 = vsel %vm2036, %v1845, 0.0
  %v2047 = vadd.f32 %v2045, %v2046
  %v2048 = vsel %vm2036, %v1846, 0.0
  %v2049 = vadd.f32 %v2047, %v2048
  %v2050 = vsel %vm2036, %v1847, 0.0
  %v2051 = vadd.f32 %v2049, %v2050
  %v2052 = vsel %vm2036, %v1848, 0.0
  %v2053 = vadd.f32 %v2051, %v2052
  %v2054 = vsel %vm2036, %v1849, 0.0
  %v2055 = vadd.f32 %v2053, %v2054
  %v2056 = vsel %vm2036, %v1850, 0.0
  %v2057 = vadd.f32 %v2055, %v2056
  %v2058 = vsel %vm2036, %v1851, 0.0
  %v2059 = vadd.f32 %v2057, %v2058
  %v2060 = vsel %vm2036, %v1852, 0.0
  %v2061 = vadd.f32 %v2059, %v2060
  %v2062 = vsel %vm2036, %v1853, 0.0
  %v2063 = vadd.f32 %v2061, %v2062
  %v2064 = vsel %vm2036, %v1854, 0.0
  %v2065 = vadd.f32 %v2063, %v2064
  %v2066 = vsel %vm2036, %v1855, 0.0
  %v2067 = vadd.f32 %v2065, %v2066
  %v2068 = vsel %vm2036, %v1856, 0.0
  %v2069 = vadd.f32 %v2067, %v2068
  %v2070 = vsel %vm2036, %v1857, 0.0
  %v2071 = vadd.f32 %v2069, %v2070
  %v2072 = vsel %vm2036, %v1858, 0.0
  %v2073 = vadd.f32 %v2071, %v2072
  %v2074 = vsel %vm2036, %v1859, 0.0
  %v2075 = vadd.f32 %v2073, %v2074
  %v2076 = vsel %vm2036, %v1860, 0.0
  %v2077 = vadd.f32 %v2075, %v2076
  %v2078 = vsel %vm2036, %v1861, 0.0
  %v2079 = vadd.f32 %v2077, %v2078
  %v2080 = vsel %vm2036, %v1862, 0.0
  %v2081 = vadd.f32 %v2079, %v2080
  %v2082 = vsel %vm2036, %v1863, 0.0
  %v2083 = vadd.f32 %v2081, %v2082
  %v2084 = vsel %vm2036, %v1864, 0.0
  %v2085 = vadd.f32 %v2083, %v2084
  %v2086 = vsel %vm2036, %v1865, 0.0
  %v2087 = vadd.f32 %v2085, %v2086
  %v2088 = vsel %vm2036, %v1866, 0.0
  %v2089 = vadd.f32 %v2087, %v2088
  %v2090 = vsel %vm2036, %v1867, 0.0
  %v2091 = vadd.f32 %v2089, %v2090
  %v2092 = vsel %vm2036, %v1868, 0.0
  %v2093 = vadd.f32 %v2091, %v2092
  %v2094 = vsel %vm2036, %v1869, 0.0
  %v2095 = vadd.f32 %v2093, %v2094
  %v2096 = vsel %vm2036, %v1870, 0.0
  %v2097 = vadd.f32 %v2095, %v2096
  %v2098 = vsel %vm2036, %v1871, 0.0
  %v2099 = vadd.f32 %v2097, %v2098
  %v2100 = vsel %vm2036, %v1872, 0.0
  %v2101 = vadd.f32 %v2099, %v2100
  %v2102 = vsel %vm2036, %v1873, 0.0
  %v2103 = vadd.f32 %v2101, %v2102
  %v2104 = vsel %vm2036, %v1874, 0.0
  %v2105 = vadd.f32 %v2103, %v2104
  %v2106 = vsel %vm2036, %v1875, 0.0
  %v2107 = vadd.f32 %v2105, %v2106
  %v2108 = vsel %vm2036, %v1876, 0.0
  %v2109 = vadd.f32 %v2107, %v2108
  %v2110 = vsel %vm2036, %v1877, 0.0
  %v2111 = vadd.f32 %v2109, %v2110
  %v2112 = vsel %vm2036, %v1878, 0.0
  %v2113 = vadd.f32 %v2111, %v2112
  %v2114 = vsel %vm2036, %v1879, 0.0
  %v2115 = vadd.f32 %v2113, %v2114
  %v2116 = vsel %vm2036, %v1880, 0.0
  %v2117 = vadd.f32 %v2115, %v2116
  %v2118 = vsel %vm2036, %v1881, 0.0
  %v2119 = vadd.f32 %v2117, %v2118
  %v2120 = vsel %vm2036, %v1882, 0.0
  %v2121 = vadd.f32 %v2119, %v2120
  %v2122 = vsel %vm2036, %v1883, 0.0
  %v2123 = vadd.f32 %v2121, %v2122
  %v2124 = vsel %vm2036, %v1884, 0.0
  %v2125 = vadd.f32 %v2123, %v2124
  %v2126 = vsel %vm2036, %v1885, 0.0
  %v2127 = vadd.f32 %v2125, %v2126
  %v2128 = vsel %vm2036, %v1886, 0.0
  %v2129 = vadd.f32 %v2127, %v2128
  %v2130 = vsel %vm2036, %v1887, 0.0
  %v2131 = vadd.f32 %v2129, %v2130
  %v2132 = vsel %vm2036, %v1888, 0.0
  %v2133 = vadd.f32 %v2131, %v2132
  %v2134 = vsel %vm2036, %v1889, 0.0
  %v2135 = vadd.f32 %v2133, %v2134
  %v2136 = vsel %vm2036, %v1890, 0.0
  %v2137 = vadd.f32 %v2135, %v2136
  %v2138 = vsel %vm2036, %v1891, 0.0
  %v2139 = vadd.f32 %v2137, %v2138
  %v2140 = vsel %vm2036, %v1892, 0.0
  %v2141 = vadd.f32 %v2139, %v2140
  %v2142 = vsel %vm2036, %v1893, 0.0
  %v2143 = vadd.f32 %v2141, %v2142
  %v2144 = vsel %vm2036, %v1894, 0.0
  %v2145 = vadd.f32 %v2143, %v2144
  %v2146 = vsel %vm2036, %v1895, 0.0
  %v2147 = vadd.f32 %v2145, %v2146
  %v2148 = vsel %vm2036, %v1896, 0.0
  %v2149 = vadd.f32 %v2147, %v2148
  %v2150 = vsel %vm2036, %v1897, 0.0
  %v2151 = vadd.f32 %v2149, %v2150
  %v2152 = vsel %vm2036, %v1898, 0.0
  %v2153 = vadd.f32 %v2151, %v2152
  %v2154 = vsel %vm2036, %v1899, 0.0
  %v2155 = vadd.f32 %v2153, %v2154
  %v2156 = vsel %vm2036, %v1900, 0.0
  %v2157 = vadd.f32 %v2155, %v2156
  %v2158 = vsel %vm2036, %v1901, 0.0
  %v2159 = vadd.f32 %v2157, %v2158
  %v2160 = vsel %vm2036, %v1902, 0.0
  %v2161 = vadd.f32 %v2159, %v2160
  %v2162 = vsel %vm2036, %v1903, 0.0
  %v2163 = vadd.f32 %v2161, %v2162
  %v2164 = vsel %vm2036, %v1904, 0.0
  %v2165 = vadd.f32 %v2163, %v2164
  %v2166 = vsel %vm2036, %v1905, 0.0
  %v2167 = vadd.f32 %v2165, %v2166
  %v2168 = vsel %vm2036, %v1906, 0.0
  %v2169 = vadd.f32 %v2167, %v2168
  %v2170 = vsel %vm2036, %v1907, 0.0
  %v2171 = vadd.f32 %v2169, %v2170
  %v2172 = vsel %vm2036, %v1908, 0.0
  %v2173 = vadd.f32 %v2171, %v2172
  %v2174 = vsel %vm2036, %v1909, 0.0
  %v2175 = vadd.f32 %v2173, %v2174
  %v2176 = vsel %vm2036, %v1910, 0.0
  %v2177 = vadd.f32 %v2175, %v2176
  %v2178 = vsel %vm2036, %v1911, 0.0
  %v2179 = vadd.f32 %v2177, %v2178
  %v2180 = vsel %vm2036, %v1912, 0.0
  %v2181 = vadd.f32 %v2179, %v2180
  %v2182 = vsel %vm2036, %v1913, 0.0
  %v2183 = vadd.f32 %v2181, %v2182
  %v2184 = vsel %vm2036, %v1914, 0.0
  %v2185 = vadd.f32 %v2183, %v2184
  %v2186 = vsel %vm2036, %v1915, 0.0
  %v2187 = vadd.f32 %v2185, %v2186
  %v2188 = vsel %vm2036, %v1916, 0.0
  %v2189 = vadd.f32 %v2187, %v2188
  %v2190 = vsel %vm2036, %v1917, 0.0
  %v2191 = vadd.f32 %v2189, %v2190
  %v2192 = vsel %vm2036, %v1918, 0.0
  %v2193 = vadd.f32 %v2191, %v2192
  %v2194 = vsel %vm2036, %v1919, 0.0
  %v2195 = vadd.f32 %v2193, %v2194
  %v2196 = vsel %vm2036, %v1920, 0.0
  %v2197 = vadd.f32 %v2195, %v2196
  %v2198 = vsel %vm2036, %v1921, 0.0
  %v2199 = vadd.f32 %v2197, %v2198
  %v2200 = vsel %vm2036, %v1922, 0.0
  %v2201 = vadd.f32 %v2199, %v2200
  %v2202 = vsel %vm2036, %v1923, 0.0
  %v2203 = vadd.f32 %v2201, %v2202
  %v2204 = vsel %vm2036, %v1924, 0.0
  %v2205 = vadd.f32 %v2203, %v2204
  %v2206 = vsel %vm2036, %v1925, 0.0
  %v2207 = vadd.f32 %v2205, %v2206
  %v2208 = vsel %vm2036, %v1926, 0.0
  %v2209 = vadd.f32 %v2207, %v2208
  %v2210 = vsel %vm2036, %v1927, 0.0
  %v2211 = vadd.f32 %v2209, %v2210
  %v2212 = vsel %vm2036, %v1928, 0.0
  %v2213 = vadd.f32 %v2211, %v2212
  %v2214 = vsel %vm2036, %v1929, 0.0
  %v2215 = vadd.f32 %v2213, %v2214
  %v2216 = vsel %vm2036, %v1930, 0.0
  %v2217 = vadd.f32 %v2215, %v2216
  %v2218 = vsel %vm2036, %v1931, 0.0
  %v2219 = vadd.f32 %v2217, %v2218
  %v2220 = vsel %vm2036, %v1932, 0.0
  %v2221 = vadd.f32 %v2219, %v2220
  %v2222 = vsel %vm2036, %v1933, 0.0
  %v2223 = vadd.f32 %v2221, %v2222
  %v2224 = vsel %vm2036, %v1934, 0.0
  %v2225 = vadd.f32 %v2223, %v2224
  %v2226 = vsel %vm2036, %v1935, 0.0
  %v2227 = vadd.f32 %v2225, %v2226
  %v2228 = vsel %vm2036, %v1936, 0.0
  %v2229 = vadd.f32 %v2227, %v2228
  %v2230 = vsel %vm2036, %v1937, 0.0
  %v2231 = vadd.f32 %v2229, %v2230
  %v2232 = vrot.slane %v2231, 4
  %v2233 = vadd.f32 %v2231, %v2232
  %v2234 = vrot.slane %v2233, 2
  %v2235 = vadd.f32 %v2233, %v2234
  %v2236 = vrot.slane %v2235, 1
  %v2237 = vadd.f32 %v2235, %v2236
  %v2238 = vsel %vm2036, %v1938, 0.0
  %v2239 = vsel %vm2036, %v1939, 0.0
  %v2240 = vadd.f32 %v2238, %v2239
  %v2241 = vsel %vm2036, %v1940, 0.0
  %v2242 = vadd.f32 %v2240, %v2241
  %v2243 = vsel %vm2036, %v1941, 0.0
  %v2244 = vadd.f32 %v2242, %v2243
  %v2245 = vsel %vm2036, %v1942, 0.0
  %v2246 = vadd.f32 %v2244, %v2245
  %v2247 = vsel %vm2036, %v1943, 0.0
  %v2248 = vadd.f32 %v2246, %v2247
  %v2249 = vsel %vm2036, %v1944, 0.0
  %v2250 = vadd.f32 %v2248, %v2249
  %v2251 = vsel %vm2036, %v1945, 0.0
  %v2252 = vadd.f32 %v2250, %v2251
  %v2253 = vsel %vm2036, %v1946, 0.0
  %v2254 = vadd.f32 %v2252, %v2253
  %v2255 = vsel %vm2036, %v1947, 0.0
  %v2256 = vadd.f32 %v2254, %v2255
  %v2257 = vsel %vm2036, %v1948, 0.0
  %v2258 = vadd.f32 %v2256, %v2257
  %v2259 = vsel %vm2036, %v1949, 0.0
  %v2260 = vadd.f32 %v2258, %v2259
  %v2261 = vsel %vm2036, %v1950, 0.0
  %v2262 = vadd.f32 %v2260, %v2261
  %v2263 = vsel %vm2036, %v1951, 0.0
  %v2264 = vadd.f32 %v2262, %v2263
  %v2265 = vsel %vm2036, %v1952, 0.0
  %v2266 = vadd.f32 %v2264, %v2265
  %v2267 = vsel %vm2036, %v1953, 0.0
  %v2268 = vadd.f32 %v2266, %v2267
  %v2269 = vsel %vm2036, %v1954, 0.0
  %v2270 = vadd.f32 %v2268, %v2269
  %v2271 = vsel %vm2036, %v1955, 0.0
  %v2272 = vadd.f32 %v2270, %v2271
  %v2273 = vsel %vm2036, %v1956, 0.0
  %v2274 = vadd.f32 %v2272, %v2273
  %v2275 = vsel %vm2036, %v1957, 0.0
  %v2276 = vadd.f32 %v2274, %v2275
  %v2277 = vsel %vm2036, %v1958, 0.0
  %v2278 = vadd.f32 %v2276, %v2277
  %v2279 = vsel %vm2036, %v1959, 0.0
  %v2280 = vadd.f32 %v2278, %v2279
  %v2281 = vsel %vm2036, %v1960, 0.0
  %v2282 = vadd.f32 %v2280, %v2281
  %v2283 = vsel %vm2036, %v1961, 0.0
  %v2284 = vadd.f32 %v2282, %v2283
  %v2285 = vsel %vm2036, %v1962, 0.0
  %v2286 = vadd.f32 %v2284, %v2285
  %v2287 = vsel %vm2036, %v1963, 0.0
  %v2288 = vadd.f32 %v2286, %v2287
  %v2289 = vsel %vm2036, %v1964, 0.0
  %v2290 = vadd.f32 %v2288, %v2289
  %v2291 = vsel %vm2036, %v1965, 0.0
  %v2292 = vadd.f32 %v2290, %v2291
  %v2293 = vsel %vm2036, %v1966, 0.0
  %v2294 = vadd.f32 %v2292, %v2293
  %v2295 = vsel %vm2036, %v1967, 0.0
  %v2296 = vadd.f32 %v2294, %v2295
  %v2297 = vsel %vm2036, %v1968, 0.0
  %v2298 = vadd.f32 %v2296, %v2297
  %v2299 = vsel %vm2036, %v1969, 0.0
  %v2300 = vadd.f32 %v2298, %v2299
  %v2301 = vsel %vm2036, %v1970, 0.0
  %v2302 = vadd.f32 %v2300, %v2301
  %v2303 = vsel %vm2036, %v1971, 0.0
  %v2304 = vadd.f32 %v2302, %v2303
  %v2305 = vsel %vm2036, %v1972, 0.0
  %v2306 = vadd.f32 %v2304, %v2305
  %v2307 = vsel %vm2036, %v1973, 0.0
  %v2308 = vadd.f32 %v2306, %v2307
  %v2309 = vsel %vm2036, %v1974, 0.0
  %v2310 = vadd.f32 %v2308, %v2309
  %v2311 = vsel %vm2036, %v1975, 0.0
  %v2312 = vadd.f32 %v2310, %v2311
  %v2313 = vsel %vm2036, %v1976, 0.0
  %v2314 = vadd.f32 %v2312, %v2313
  %v2315 = vsel %vm2036, %v1977, 0.0
  %v2316 = vadd.f32 %v2314, %v2315
  %v2317 = vsel %vm2036, %v1978, 0.0
  %v2318 = vadd.f32 %v2316, %v2317
  %v2319 = vsel %vm2036, %v1979, 0.0
  %v2320 = vadd.f32 %v2318, %v2319
  %v2321 = vsel %vm2036, %v1980, 0.0
  %v2322 = vadd.f32 %v2320, %v2321
  %v2323 = vsel %vm2036, %v1981, 0.0
  %v2324 = vadd.f32 %v2322, %v2323
  %v2325 = vsel %vm2036, %v1982, 0.0
  %v2326 = vadd.f32 %v2324, %v2325
  %v2327 = vsel %vm2036, %v1983, 0.0
  %v2328 = vadd.f32 %v2326, %v2327
  %v2329 = vsel %vm2036, %v1984, 0.0
  %v2330 = vadd.f32 %v2328, %v2329
  %v2331 = vsel %vm2036, %v1985, 0.0
  %v2332 = vadd.f32 %v2330, %v2331
  %v2333 = vsel %vm2036, %v1986, 0.0
  %v2334 = vadd.f32 %v2332, %v2333
  %v2335 = vsel %vm2036, %v1987, 0.0
  %v2336 = vadd.f32 %v2334, %v2335
  %v2337 = vsel %vm2036, %v1988, 0.0
  %v2338 = vadd.f32 %v2336, %v2337
  %v2339 = vsel %vm2036, %v1989, 0.0
  %v2340 = vadd.f32 %v2338, %v2339
  %v2341 = vsel %vm2036, %v1990, 0.0
  %v2342 = vadd.f32 %v2340, %v2341
  %v2343 = vsel %vm2036, %v1991, 0.0
  %v2344 = vadd.f32 %v2342, %v2343
  %v2345 = vsel %vm2036, %v1992, 0.0
  %v2346 = vadd.f32 %v2344, %v2345
  %v2347 = vsel %vm2036, %v1993, 0.0
  %v2348 = vadd.f32 %v2346, %v2347
  %v2349 = vsel %vm2036, %v1994, 0.0
  %v2350 = vadd.f32 %v2348, %v2349
  %v2351 = vsel %vm2036, %v1995, 0.0
  %v2352 = vadd.f32 %v2350, %v2351
  %v2353 = vsel %vm2036, %v1996, 0.0
  %v2354 = vadd.f32 %v2352, %v2353
  %v2355 = vsel %vm2036, %v1997, 0.0
  %v2356 = vadd.f32 %v2354, %v2355
  %v2357 = vsel %vm2036, %v1998, 0.0
  %v2358 = vadd.f32 %v2356, %v2357
  %v2359 = vsel %vm2036, %v1999, 0.0
  %v2360 = vadd.f32 %v2358, %v2359
  %v2361 = vsel %vm2036, %v2000, 0.0
  %v2362 = vadd.f32 %v2360, %v2361
  %v2363 = vsel %vm2036, %v2001, 0.0
  %v2364 = vadd.f32 %v2362, %v2363
  %v2365 = vsel %vm2036, %v2002, 0.0
  %v2366 = vadd.f32 %v2364, %v2365
  %v2367 = vsel %vm2036, %v2003, 0.0
  %v2368 = vadd.f32 %v2366, %v2367
  %v2369 = vsel %vm2036, %v2004, 0.0
  %v2370 = vadd.f32 %v2368, %v2369
  %v2371 = vsel %vm2036, %v2005, 0.0
  %v2372 = vadd.f32 %v2370, %v2371
  %v2373 = vsel %vm2036, %v2006, 0.0
  %v2374 = vadd.f32 %v2372, %v2373
  %v2375 = vsel %vm2036, %v2007, 0.0
  %v2376 = vadd.f32 %v2374, %v2375
  %v2377 = vsel %vm2036, %v2008, 0.0
  %v2378 = vadd.f32 %v2376, %v2377
  %v2379 = vsel %vm2036, %v2009, 0.0
  %v2380 = vadd.f32 %v2378, %v2379
  %v2381 = vsel %vm2036, %v2010, 0.0
  %v2382 = vadd.f32 %v2380, %v2381
  %v2383 = vsel %vm2036, %v2011, 0.0
  %v2384 = vadd.f32 %v2382, %v2383
  %v2385 = vsel %vm2036, %v2012, 0.0
  %v2386 = vadd.f32 %v2384, %v2385
  %v2387 = vsel %vm2036, %v2013, 0.0
  %v2388 = vadd.f32 %v2386, %v2387
  %v2389 = vsel %vm2036, %v2014, 0.0
  %v2390 = vadd.f32 %v2388, %v2389
  %v2391 = vsel %vm2036, %v2015, 0.0
  %v2392 = vadd.f32 %v2390, %v2391
  %v2393 = vsel %vm2036, %v2016, 0.0
  %v2394 = vadd.f32 %v2392, %v2393
  %v2395 = vsel %vm2036, %v2017, 0.0
  %v2396 = vadd.f32 %v2394, %v2395
  %v2397 = vsel %vm2036, %v2018, 0.0
  %v2398 = vadd.f32 %v2396, %v2397
  %v2399 = vsel %vm2036, %v2019, 0.0
  %v2400 = vadd.f32 %v2398, %v2399
  %v2401 = vsel %vm2036, %v2020, 0.0
  %v2402 = vadd.f32 %v2400, %v2401
  %v2403 = vsel %vm2036, %v2021, 0.0
  %v2404 = vadd.f32 %v2402, %v2403
  %v2405 = vsel %vm2036, %v2022, 0.0
  %v2406 = vadd.f32 %v2404, %v2405
  %v2407 = vsel %vm2036, %v2023, 0.0
  %v2408 = vadd.f32 %v2406, %v2407
  %v2409 = vsel %vm2036, %v2024, 0.0
  %v2410 = vadd.f32 %v2408, %v2409
  %v2411 = vsel %vm2036, %v2025, 0.0
  %v2412 = vadd.f32 %v2410, %v2411
  %v2413 = vsel %vm2036, %v2026, 0.0
  %v2414 = vadd.f32 %v2412, %v2413
  %v2415 = vsel %vm2036, %v2027, 0.0
  %v2416 = vadd.f32 %v2414, %v2415
  %v2417 = vsel %vm2036, %v2028, 0.0
  %v2418 = vadd.f32 %v2416, %v2417
  %v2419 = vsel %vm2036, %v2029, 0.0
  %v2420 = vadd.f32 %v2418, %v2419
  %v2421 = vsel %vm2036, %v2030, 0.0
  %v2422 = vadd.f32 %v2420, %v2421
  %v2423 = vsel %vm2036, %v2031, 0.0
  %v2424 = vadd.f32 %v2422, %v2423
  %v2425 = vsel %vm2036, %v2032, 0.0
  %v2426 = vadd.f32 %v2424, %v2425
  %v2427 = vsel %vm2036, %v2033, 0.0
  %v2428 = vadd.f32 %v2426, %v2427
  %v2429 = vsel %vm2036, %v2034, 0.0
  %v2430 = vadd.f32 %v2428, %v2429
  %v2431 = vsel %vm2036, %v2035, 0.0
  %v2432 = vadd.f32 %v2430, %v2431
  %v2433 = vrot.slane %v2432, 4
  %v2434 = vadd.f32 %v2432, %v2433
  %v2435 = vrot.slane %v2434, 2
  %v2436 = vadd.f32 %v2434, %v2435
  %v2437 = vrot.slane %v2436, 1
  %v2438 = vadd.f32 %v2436, %v2437
  %v2439 = vrcp.pop 784.0
  %v2440 = vmul.f32 %v2237, %v2439
  %v2441 = vmul.f32 %v2438, %v2439
  %v2442 = vld [vmem:[%s3] sm:$0xff]
  %v2443 = vld [vmem:[%s3 + $0x8] sm:$0xff]
  %v2444 = vld [vmem:[%s4] sm:$0x1]
  %v2446 = vlaneseq
  %v2447 = vshrl.u32 %v2446, 7
  %v2448 = vsub.s32 0, %v2447
  %v2449 = vrot.slane %v2444, %v2448
  %vm2453 = vcmask 1041409
  %v2454 = vsel %vm2453, %v2441, %v2440
  %v2455 = vsel %vm2036, %v2454, 0
  %2457 = vmatprep.subr.mxu0 0.0
  %2458 = vmatpush1.msra.mxu0 %v2442
  %2459 = vmatprep.subr.mxu0 0.0
  %2460 = vmatpush1.msra.mxu0 %v2443
  %2461 = vmatprep.subr.mxu0 0.0
  %2462 = vmatpush1.msra.mxu0 0.0
  %2463 = vmatprep.subr.mxu0 0.0
  %2464 = vmatpush1.msra.mxu0 0.0
  %2465 = vmatprep.subr.mxu0 0.0
  %2466 = vmatpush1.msra.mxu0 0.0
  %2467 = vmatprep.subr.mxu0 0.0
  %2468 = vmatpush1.msra.mxu0 0.0
  %2469 = vmatprep.subr.mxu0 0.0
  %2470 = vmatpush1.msra.mxu0 0.0
  %2471 = vmatprep.subr.mxu0 0.0
  %2472 = vmatpush1.msra.mxu0 0.0
  %2473 = vmatprep.subr.mxu0 0.0
  %2474 = vmatpush1.msra.mxu0 0.0
  %2475 = vmatprep.subr.mxu0 0.0
  %2476 = vmatpush1.msra.mxu0 0.0
  %2477 = vmatprep.subr.mxu0 0.0
  %2478 = vmatpush1.msra.mxu0 0.0
  %2479 = vmatprep.subr.mxu0 0.0
  %2480 = vmatpush1.msra.mxu0 0.0
  %2481 = vmatprep.subr.mxu0 0.0
  %2482 = vmatpush1.msra.mxu0 0.0
  %2483 = vmatprep.subr.mxu0 0.0
  %2484 = vmatpush1.msra.mxu0 0.0
  %2485 = vmatprep.subr.mxu0 0.0
  %2486 = vmatpush1.msra.mxu0 0.0
  %2487 = vmatprep.subr.mxu0 0.0
  %2488 = vmatpush1.msra.mxu0 0.0
  %2489 = vmatprep.subr.mxu0 0.0
  %2490 = vmatpush1.msra.mxu0 0.0
  %2491 = vmatprep.subr.mxu0 0.0
  %2492 = vmatpush1.msra.mxu0 0.0
  %2493 = vmatprep.subr.mxu0 0.0
  %2494 = vmatpush1.msra.mxu0 0.0
  %2495 = vmatprep.subr.mxu0 0.0
  %2496 = vmatpush1.msra.mxu0 0.0
  %2497 = vmatprep.subr.mxu0 0.0
  %2498 = vmatpush1.msra.mxu0 0.0
  %2499 = vmatprep.subr.mxu0 0.0
  %2500 = vmatpush1.msra.mxu0 0.0
  %2501 = vmatprep.subr.mxu0 0.0
  %2502 = vmatpush1.msra.mxu0 0.0
  %2503 = vmatprep.subr.mxu0 0.0
  %2504 = vmatpush1.msra.mxu0 0.0
  %2505 = vmatprep.subr.mxu0 0.0
  %2506 = vmatpush1.msra.mxu0 0.0
  %2507 = vmatprep.subr.mxu0 0.0
  %2508 = vmatpush1.msra.mxu0 0.0
  %2509 = vmatprep.subr.mxu0 0.0
  %2510 = vmatpush1.msra.mxu0 0.0
  %2511 = vmatprep.subr.mxu0 0.0
  %2512 = vmatpush1.msra.mxu0 0.0
  %2513 = vmatprep.subr.mxu0 0.0
  %2514 = vmatpush1.msra.mxu0 0.0
  %2515 = vmatprep.subr.mxu0 0.0
  %2516 = vmatpush1.msra.mxu0 0.0
  %2517 = vmatprep.subr.mxu0 0.0
  %2518 = vmatpush1.msra.mxu0 0.0
  %2519 = vmatprep.subr.mxu0 0.0
  %2520 = vmatpush1.msra.mxu0 0.0
  %2521 = vmatprep.mubr.f32.mxu0 0.0
  %2522 = vmatmul.mubr.f32.gmra.mrb[0].mxu0 %v2455
  %v2523 = vpop.f32.mrb[0].mxu0
  %v2524 = vadd.f32 %v2449, %v2523
  %v2525 = vpop.f32.mrb[0].mxu0
  %2526 = vdwg.mxu0
  %2527 = vst [vmem:[%s5] sm:$0x3] %v2524
  // Predicated region
  $region22: #{moe_forward.2} parent=0 // pred_check
    _
  $region23: #{moe_forward.2} parent=0 // pred_check_branch
    %2529 = sbr.rel (0) target = $region25
  $region24: #{moe_forward.2} parent=0 // pred_region
    _
  $region25: #{moe_forward.2} parent=0 // pred_fallthru
    _
  // Predicated region
  $region26: #{moe_forward.2} parent=0 // pred_check
    _
  $region27: #{moe_forward.2} parent=0 // pred_check_branch
    %2531 = sbr.rel (0) target = $region29
  $region28: #{moe_forward.2} parent=0 // pred_region
    _
  $region29: #{moe_forward.2} parent=0 // pred_fallthru
    _

// kernel: moe_forward.3
$region0: #{moe_forward.3}
  #allocation0 [shape = 'u32[]', space=smem, size = 0x4, offset = 0x4, fixed_abs, tag = 'smem constant byte address 0x4 - core index']
  #allocation1 [shape = 'u32[144,128]{1,0:T(1,128)}', space=vmem, size = 0x12000, scoped, tag = 'internal scratch']
  #allocation2 [shape = 'f32[1,1]{1,0:T(1,128)S(6)}', space=smem, size = 0x200, scoped, tag = 'scoped memory for moe_forward.3']
  %s0 = inlined_call_operand.<no memory space> [shape: f32[1,1], index: 0, kind: input, shape index: {}]
  %s1 = inlined_call_operand.vmem [shape: bf16[2048,27], index: 1, kind: input, shape index: {}]
  %s2 = inlined_call_operand.vmem [shape: bf16[27,16], index: 2, kind: input, shape index: {}]
  %s3 = inlined_call_operand.vmem [shape: f32[1,16], index: 3, kind: input, shape index: {}]
  %s4 = inlined_call_operand.vmem [shape: f32[16,128], index: 4, kind: input, shape index: {}]
  %s5 = inlined_call_operand.vmem [shape: f32[1,128], index: 5, kind: input, shape index: {}]
  %s6 = inlined_call_operand.vmem [shape: f32[2,128], index: 6, kind: input, shape index: {}]
  %s7 = inlined_call_operand.hbm [shape: f32[2,128], index: 7, kind: output, shape index: {}]
  %s8 = sld [smem:[#allocation0]]
  $region38: #{moe_forward.3} parent=0
    _
  %s10 = ssub.s32 1, %s8
  %s11 = scalar_select 0, %s10, %s8
  %12 = sst [smem:[#allocation2]] %s0
  $region1: #{moe_forward.3} parent=0
    #allocation3 [shape = 'u8[1024]{0}', space=vmem, size = 0x400, scoped, tag = 'output window, operand 0, single buffered']
    #allocation4 [shape = 's32[1]{0}', space=sflag, size = 0x4, scoped, tag = 'scoped memory for moe_forward.3']
    %13 = vsyncpa [#allocation4], 0
    // Predicated region
    $region2: #{moe_forward.3} parent=1 // pred_check
      _
    $region3: #{moe_forward.3} parent=1 // pred_check_branch
      %15 = sbr.rel (0) target = $region5
    $region4: #{moe_forward.3} parent=1 // pred_region
      _
    $region5: #{moe_forward.3} parent=1 // pred_fallthru
      _
    // Predicated region
    $region6: #{moe_forward.3} parent=1 // pred_check
      _
    $region7: #{moe_forward.3} parent=1 // pred_check_branch
      %17 = sbr.rel (0) target = $region9
    $region8: #{moe_forward.3} parent=1 // pred_region
      _
    $region9: #{moe_forward.3} parent=1 // pred_fallthru
      _
    // Predicated region
    $region10: #{moe_forward.3} parent=1 // pred_check
      _
    $region11: #{moe_forward.3} parent=1 // pred_check_branch
      %19 = sbr.rel (0) target = $region13
    $region12: #{moe_forward.3} parent=1 // pred_region
      _
    $region13: #{moe_forward.3} parent=1 // pred_fallthru
      _
    // Predicated region
    $region14: #{moe_forward.3} parent=1 // pred_check
      _
    $region15: #{moe_forward.3} parent=1 // pred_check_branch
      %21 = sbr.rel (0) target = $region17
    $region16: #{moe_forward.3} parent=1 // pred_region
      _
    $region17: #{moe_forward.3} parent=1 // pred_fallthru
      _
    // Predicated region
    $region18: #{moe_forward.3} parent=1 // pred_check
      _
    $region19: #{moe_forward.3} parent=1 // pred_check_branch
      %23 = sbr.rel (0) target = $region21
    $region20: #{moe_forward.3} parent=1 // pred_region
      _
    $region21: #{moe_forward.3} parent=1 // pred_fallthru
      _
    // Predicated region
    $region22: #{moe_forward.3} parent=1 // pred_check
      _
    $region23: #{moe_forward.3} parent=1 // pred_check_branch
      %25 = sbr.rel (0) target = $region25
    $region24: #{moe_forward.3} parent=1 // pred_region
      _
    $region25: #{moe_forward.3} parent=1 // pred_fallthru
      _
    // Predicated region
    $region26: #{moe_forward.3} parent=1 // pred_check
      _
    $region27: #{moe_forward.3} parent=1 // pred_check_branch
      %27 = sbr.rel (0) target = $region29
    $region28: #{moe_forward.3} parent=1 // pred_region
      _
    $region29: #{moe_forward.3} parent=1 // pred_fallthru
      _
    %v29 = vld [vmem:[%s1] sm:$0xf]
    %v30 = vld [vmem:[%s1 + $0x4] sm:$0xf]
    %v31 = vld [vmem:[%s1 + $0x8] sm:$0xf]
    %v32 = vld [vmem:[%s1 + $0xc] sm:$0xf]
    %v33 = vld [vmem:[%s1 + $0x10] sm:$0xf]
    %v34 = vld [vmem:[%s1 + $0x14] sm:$0xf]
    %v35 = vld [vmem:[%s1 + $0x18] sm:$0xf]
    %v36 = vld [vmem:[%s1 + $0x1c] sm:$0xf]
    %v37 = vld [vmem:[%s1 + $0x20] sm:$0xf]
    %v38 = vld [vmem:[%s1 + $0x24] sm:$0xf]
    %v39 = vld [vmem:[%s1 + $0x28] sm:$0xf]
    %v40 = vld [vmem:[%s1 + $0x2c] sm:$0xf]
    %v41 = vld [vmem:[%s1 + $0x30] sm:$0xf]
    %v42 = vld [vmem:[%s1 + $0x34] sm:$0xf]
    %v43 = vld [vmem:[%s1 + $0x38] sm:$0xf]
    %v44 = vld [vmem:[%s1 + $0x3c] sm:$0xf]
    %v45 = vld [vmem:[%s1 + $0x40] sm:$0xf]
    %v46 = vld [vmem:[%s1 + $0x44] sm:$0xf]
    %v47 = vld [vmem:[%s1 + $0x48] sm:$0xf]
    %v48 = vld [vmem:[%s1 + $0x4c] sm:$0xf]
    %v49 = vld [vmem:[%s1 + $0x50] sm:$0xf]
    %v50 = vld [vmem:[%s1 + $0x54] sm:$0xf]
    %v51 = vld [vmem:[%s1 + $0x58] sm:$0xf]
    %v52 = vld [vmem:[%s1 + $0x5c] sm:$0xf]
    %v53 = vld [vmem:[%s1 + $0x60] sm:$0xf]
    %v54 = vld [vmem:[%s1 + $0x64] sm:$0xf]
    %v55 = vld [vmem:[%s1 + $0x68] sm:$0xf]
    %v56 = vld [vmem:[%s1 + $0x6c] sm:$0xf]
    %v57 = vld [vmem:[%s1 + $0x70] sm:$0xf]
    %v58 = vld [vmem:[%s1 + $0x74] sm:$0xf]
    %v59 = vld [vmem:[%s1 + $0x78] sm:$0xf]
    %v60 = vld [vmem:[%s1 + $0x7c] sm:$0xf]
    %v61 = vld [vmem:[%s1 + $0x80] sm:$0xf]
    %v62 = vld [vmem:[%s1 + $0x84] sm:$0xf]
    %v63 = vld [vmem:[%s1 + $0x88] sm:$0xf]
    %v64 = vld [vmem:[%s1 + $0x8c] sm:$0xf]
    %v65 = vld [vmem:[%s1 + $0x90] sm:$0xf]
    %v66 = vld [vmem:[%s1 + $0x94] sm:$0xf]
    %v67 = vld [vmem:[%s1 + $0x98] sm:$0xf]
    %v68 = vld [vmem:[%s1 + $0x9c] sm:$0xf]
    %v69 = vld [vmem:[%s1 + $0xa0] sm:$0xf]
    %v70 = vld [vmem:[%s1 + $0xa4] sm:$0xf]
    %v71 = vld [vmem:[%s1 + $0xa8] sm:$0xf]
    %v72 = vld [vmem:[%s1 + $0xac] sm:$0xf]
    %v73 = vld [vmem:[%s1 + $0xb0] sm:$0xf]
    %v74 = vld [vmem:[%s1 + $0xb4] sm:$0xf]
    %v75 = vld [vmem:[%s1 + $0xb8] sm:$0xf]
    %v76 = vld [vmem:[%s1 + $0xbc] sm:$0xf]
    %v77 = vld [vmem:[%s1 + $0xc0] sm:$0xf]
    %v78 = vld [vmem:[%s1 + $0xc4] sm:$0xf]
    %v79 = vld [vmem:[%s1 + $0xc8] sm:$0xf]
    %v80 = vld [vmem:[%s1 + $0xcc] sm:$0xf]
    %v81 = vld [vmem:[%s1 + $0xd0] sm:$0xf]
    %v82 = vld [vmem:[%s1 + $0xd4] sm:$0xf]
    %v83 = vld [vmem:[%s1 + $0xd8] sm:$0xf]
    %v84 = vld [vmem:[%s1 + $0xdc] sm:$0xf]
    %v85 = vld [vmem:[%s1 + $0xe0] sm:$0xf]
    %v86 = vld [vmem:[%s1 + $0xe4] sm:$0xf]
    %v87 = vld [vmem:[%s1 + $0xe8] sm:$0xf]
    %v88 = vld [vmem:[%s1 + $0xec] sm:$0xf]
    %v89 = vld [vmem:[%s1 + $0xf0] sm:$0xf]
    %v90 = vld [vmem:[%s1 + $0xf4] sm:$0xf]
    %v91 = vld [vmem:[%s1 + $0xf8] sm:$0xf]
    %v92 = vld [vmem:[%s1 + $0xfc] sm:$0xf]
    %v93 = vld [vmem:[%s1 + $0x100] sm:$0xf]
    %v94 = vld [vmem:[%s1 + $0x104] sm:$0xf]
    %v95 = vld [vmem:[%s1 + $0x108] sm:$0xf]
    %v96 = vld [vmem:[%s1 + $0x10c] sm:$0xf]
    %v97 = vld [vmem:[%s1 + $0x110] sm:$0xf]
    %v98 = vld [vmem:[%s1 + $0x114] sm:$0xf]
    %v99 = vld [vmem:[%s1 + $0x118] sm:$0xf]
    %v100 = vld [vmem:[%s1 + $0x11c] sm:$0xf]
    %v101 = vld [vmem:[%s1 + $0x120] sm:$0xf]
    %v102 = vld [vmem:[%s1 + $0x124] sm:$0xf]
    %v103 = vld [vmem:[%s1 + $0x128] sm:$0xf]
    %v104 = vld [vmem:[%s1 + $0x12c] sm:$0xf]
    %v105 = vld [vmem:[%s1 + $0x130] sm:$0xf]
    %v106 = vld [vmem:[%s1 + $0x134] sm:$0xf]
    %v107 = vld [vmem:[%s1 + $0x138] sm:$0xf]
    %v108 = vld [vmem:[%s1 + $0x13c] sm:$0xf]
    %v109 = vld [vmem:[%s1 + $0x140] sm:$0xf]
    %v110 = vld [vmem:[%s1 + $0x144] sm:$0xf]
    %v111 = vld [vmem:[%s1 + $0x148] sm:$0xf]
    %v112 = vld [vmem:[%s1 + $0x14c] sm:$0xf]
    %v113 = vld [vmem:[%s1 + $0x150] sm:$0xf]
    %v114 = vld [vmem:[%s1 + $0x154] sm:$0xf]
    %v115 = vld [vmem:[%s1 + $0x158] sm:$0xf]
    %v116 = vld [vmem:[%s1 + $0x15c] sm:$0xf]
    %v117 = vld [vmem:[%s1 + $0x160] sm:$0xf]
    %v118 = vld [vmem:[%s1 + $0x164] sm:$0xf]
    %v119 = vld [vmem:[%s1 + $0x168] sm:$0xf]
    %v120 = vld [vmem:[%s1 + $0x16c] sm:$0xf]
    %v121 = vld [vmem:[%s1 + $0x170] sm:$0xf]
    %v122 = vld [vmem:[%s1 + $0x174] sm:$0xf]
    %v123 = vld [vmem:[%s1 + $0x178] sm:$0xf]
    %v124 = vld [vmem:[%s1 + $0x17c] sm:$0xf]
    %v125 = vld [vmem:[%s1 + $0x180] sm:$0xf]
    %v126 = vld [vmem:[%s1 + $0x184] sm:$0xf]
    %v127 = vld [vmem:[%s1 + $0x188] sm:$0xf]
    %v128 = vld [vmem:[%s1 + $0x18c] sm:$0xf]
    %v129 = vld [vmem:[%s1 + $0x190] sm:$0xf]
    %v130 = vld [vmem:[%s1 + $0x194] sm:$0xf]
    %v131 = vld [vmem:[%s1 + $0x198] sm:$0xf]
    %v132 = vld [vmem:[%s1 + $0x19c] sm:$0xf]
    %v133 = vld [vmem:[%s1 + $0x1a0] sm:$0xf]
    %v134 = vld [vmem:[%s1 + $0x1a4] sm:$0xf]
    %v135 = vld [vmem:[%s1 + $0x1a8] sm:$0xf]
    %v136 = vld [vmem:[%s1 + $0x1ac] sm:$0xf]
    %v137 = vld [vmem:[%s1 + $0x1b0] sm:$0xf]
    %v138 = vld [vmem:[%s1 + $0x1b4] sm:$0xf]
    %v139 = vld [vmem:[%s1 + $0x1b8] sm:$0xf]
    %v140 = vld [vmem:[%s1 + $0x1bc] sm:$0xf]
    %v141 = vld [vmem:[%s1 + $0x1c0] sm:$0xf]
    %v142 = vld [vmem:[%s1 + $0x1c4] sm:$0xf]
    %v143 = vld [vmem:[%s1 + $0x1c8] sm:$0xf]
    %v144 = vld [vmem:[%s1 + $0x1cc] sm:$0xf]
    %v145 = vld [vmem:[%s1 + $0x1d0] sm:$0xf]
    %v146 = vld [vmem:[%s1 + $0x1d4] sm:$0xf]
    %v147 = vld [vmem:[%s1 + $0x1d8] sm:$0xf]
    %v148 = vld [vmem:[%s1 + $0x1dc] sm:$0xf]
    %v149 = vld [vmem:[%s1 + $0x1e0] sm:$0xf]
    %v150 = vld [vmem:[%s1 + $0x1e4] sm:$0xf]
    %v151 = vld [vmem:[%s1 + $0x1e8] sm:$0xf]
    %v152 = vld [vmem:[%s1 + $0x1ec] sm:$0xf]
    %v153 = vld [vmem:[%s1 + $0x1f0] sm:$0xf]
    %v154 = vld [vmem:[%s1 + $0x1f4] sm:$0xf]
    %v155 = vld [vmem:[%s1 + $0x1f8] sm:$0xf]
    %v156 = vld [vmem:[%s1 + $0x1fc] sm:$0xf]
    %v157 = vld [vmem:[%s1 + $0x200] sm:$0xf]
    %v158 = vld [vmem:[%s1 + $0x204] sm:$0xf]
    %v159 = vld [vmem:[%s1 + $0x208] sm:$0xf]
    %v160 = vld [vmem:[%s1 + $0x20c] sm:$0xf]
    %v161 = vld [vmem:[%s1 + $0x210] sm:$0xf]
    %v162 = vld [vmem:[%s1 + $0x214] sm:$0xf]
    %v163 = vld [vmem:[%s1 + $0x218] sm:$0xf]
    %v164 = vld [vmem:[%s1 + $0x21c] sm:$0xf]
    %v165 = vld [vmem:[%s1 + $0x220] sm:$0xf]
    %v166 = vld [vmem:[%s1 + $0x224] sm:$0xf]
    %v167 = vld [vmem:[%s1 + $0x228] sm:$0xf]
    %v168 = vld [vmem:[%s1 + $0x22c] sm:$0xf]
    %v169 = vld [vmem:[%s1 + $0x230] sm:$0xf]
    %v170 = vld [vmem:[%s1 + $0x234] sm:$0xf]
    %v171 = vld [vmem:[%s1 + $0x238] sm:$0xf]
    %v172 = vld [vmem:[%s1 + $0x23c] sm:$0xf]
    %v173 = vld [vmem:[%s1 + $0x240] sm:$0xf]
    %v174 = vld [vmem:[%s1 + $0x244] sm:$0xf]
    %v175 = vld [vmem:[%s1 + $0x248] sm:$0xf]
    %v176 = vld [vmem:[%s1 + $0x24c] sm:$0xf]
    %v177 = vld [vmem:[%s1 + $0x250] sm:$0xf]
    %v178 = vld [vmem:[%s1 + $0x254] sm:$0xf]
    %v179 = vld [vmem:[%s1 + $0x258] sm:$0xf]
    %v180 = vld [vmem:[%s1 + $0x25c] sm:$0xf]
    %v181 = vld [vmem:[%s1 + $0x260] sm:$0xf]
    %v182 = vld [vmem:[%s1 + $0x264] sm:$0xf]
    %v183 = vld [vmem:[%s1 + $0x268] sm:$0xf]
    %v184 = vld [vmem:[%s1 + $0x26c] sm:$0xf]
    %v185 = vld [vmem:[%s1 + $0x270] sm:$0xf]
    %v186 = vld [vmem:[%s1 + $0x274] sm:$0xf]
    %v187 = vld [vmem:[%s1 + $0x278] sm:$0xf]
    %v188 = vld [vmem:[%s1 + $0x27c] sm:$0xf]
    %v189 = vld [vmem:[%s1 + $0x280] sm:$0xf]
    %v190 = vld [vmem:[%s1 + $0x284] sm:$0xf]
    %v191 = vld [vmem:[%s1 + $0x288] sm:$0xf]
    %v192 = vld [vmem:[%s1 + $0x28c] sm:$0xf]
    %v193 = vld [vmem:[%s1 + $0x290] sm:$0xf]
    %v194 = vld [vmem:[%s1 + $0x294] sm:$0xf]
    %v195 = vld [vmem:[%s1 + $0x298] sm:$0xf]
    %v196 = vld [vmem:[%s1 + $0x29c] sm:$0xf]
    %v197 = vld [vmem:[%s1 + $0x2a0] sm:$0xf]
    %v198 = vld [vmem:[%s1 + $0x2a4] sm:$0xf]
    %v199 = vld [vmem:[%s1 + $0x2a8] sm:$0xf]
    %v200 = vld [vmem:[%s1 + $0x2ac] sm:$0xf]
    %v201 = vld [vmem:[%s1 + $0x2b0] sm:$0xf]
    %v202 = vld [vmem:[%s1 + $0x2b4] sm:$0xf]
    %v203 = vld [vmem:[%s1 + $0x2b8] sm:$0xf]
    %v204 = vld [vmem:[%s1 + $0x2bc] sm:$0xf]
    %v205 = vld [vmem:[%s1 + $0x2c0] sm:$0xf]
    %v206 = vld [vmem:[%s1 + $0x2c4] sm:$0xf]
    %v207 = vld [vmem:[%s1 + $0x2c8] sm:$0xf]
    %v208 = vld [vmem:[%s1 + $0x2cc] sm:$0xf]
    %v209 = vld [vmem:[%s1 + $0x2d0] sm:$0xf]
    %v210 = vld [vmem:[%s1 + $0x2d4] sm:$0xf]
    %v211 = vld [vmem:[%s1 + $0x2d8] sm:$0xf]
    %v212 = vld [vmem:[%s1 + $0x2dc] sm:$0xf]
    %v213 = vld [vmem:[%s1 + $0x2e0] sm:$0xf]
    %v214 = vld [vmem:[%s1 + $0x2e4] sm:$0xf]
    %v215 = vld [vmem:[%s1 + $0x2e8] sm:$0xf]
    %v216 = vld [vmem:[%s1 + $0x2ec] sm:$0xf]
    %v217 = vld [vmem:[%s1 + $0x2f0] sm:$0xf]
    %v218 = vld [vmem:[%s1 + $0x2f4] sm:$0xf]
    %v219 = vld [vmem:[%s1 + $0x2f8] sm:$0xf]
    %v220 = vld [vmem:[%s1 + $0x2fc] sm:$0xf]
    %v221 = vld [vmem:[%s1 + $0x300] sm:$0xf]
    %v222 = vld [vmem:[%s1 + $0x304] sm:$0xf]
    %v223 = vld [vmem:[%s1 + $0x308] sm:$0xf]
    %v224 = vld [vmem:[%s1 + $0x30c] sm:$0xf]
    %v225 = vld [vmem:[%s1 + $0x310] sm:$0xf]
    %v226 = vld [vmem:[%s1 + $0x314] sm:$0xf]
    %v227 = vld [vmem:[%s1 + $0x318] sm:$0xf]
    %v228 = vld [vmem:[%s1 + $0x31c] sm:$0xf]
    %v229 = vld [vmem:[%s1 + $0x320] sm:$0xf]
    %v230 = vld [vmem:[%s1 + $0x324] sm:$0xf]
    %v231 = vld [vmem:[%s1 + $0x328] sm:$0xf]
    %v232 = vld [vmem:[%s1 + $0x32c] sm:$0xf]
    %v233 = vld [vmem:[%s1 + $0x330] sm:$0xf]
    %v234 = vld [vmem:[%s1 + $0x334] sm:$0xf]
    %v235 = vld [vmem:[%s1 + $0x338] sm:$0xf]
    %v236 = vld [vmem:[%s1 + $0x33c] sm:$0xf]
    %v237 = vld [vmem:[%s1 + $0x340] sm:$0xf]
    %v238 = vld [vmem:[%s1 + $0x344] sm:$0xf]
    %v239 = vld [vmem:[%s1 + $0x348] sm:$0xf]
    %v240 = vld [vmem:[%s1 + $0x34c] sm:$0xf]
    %v241 = vld [vmem:[%s1 + $0x350] sm:$0xf]
    %v242 = vld [vmem:[%s1 + $0x354] sm:$0xf]
    %v243 = vld [vmem:[%s1 + $0x358] sm:$0xf]
    %v244 = vld [vmem:[%s1 + $0x35c] sm:$0xf]
    %v245 = vld [vmem:[%s1 + $0x360] sm:$0xf]
    %v246 = vld [vmem:[%s1 + $0x364] sm:$0xf]
    %v247 = vld [vmem:[%s1 + $0x368] sm:$0xf]
    %v248 = vld [vmem:[%s1 + $0x36c] sm:$0xf]
    %v249 = vld [vmem:[%s1 + $0x370] sm:$0xf]
    %v250 = vld [vmem:[%s1 + $0x374] sm:$0xf]
    %v251 = vld [vmem:[%s1 + $0x378] sm:$0xf]
    %v252 = vld [vmem:[%s1 + $0x37c] sm:$0xf]
    %v253 = vld [vmem:[%s1 + $0x380] sm:$0xf]
    %v254 = vld [vmem:[%s1 + $0x384] sm:$0xf]
    %v255 = vld [vmem:[%s1 + $0x388] sm:$0xf]
    %v256 = vld [vmem:[%s1 + $0x38c] sm:$0xf]
    %v257 = vld [vmem:[%s1 + $0x390] sm:$0xf]
    %v258 = vld [vmem:[%s1 + $0x394] sm:$0xf]
    %v259 = vld [vmem:[%s1 + $0x398] sm:$0xf]
    %v260 = vld [vmem:[%s1 + $0x39c] sm:$0xf]
    %v261 = vld [vmem:[%s1 + $0x3a0] sm:$0xf]
    %v262 = vld [vmem:[%s1 + $0x3a4] sm:$0xf]
    %v263 = vld [vmem:[%s1 + $0x3a8] sm:$0xf]
    %v264 = vld [vmem:[%s1 + $0x3ac] sm:$0xf]
    %v265 = vld [vmem:[%s1 + $0x3b0] sm:$0xf]
    %v266 = vld [vmem:[%s1 + $0x3b4] sm:$0xf]
    %v267 = vld [vmem:[%s1 + $0x3b8] sm:$0xf]
    %v268 = vld [vmem:[%s1 + $0x3bc] sm:$0xf]
    %v269 = vld [vmem:[%s1 + $0x3c0] sm:$0xf]
    %v270 = vld [vmem:[%s1 + $0x3c4] sm:$0xf]
    %v271 = vld [vmem:[%s1 + $0x3c8] sm:$0xf]
    %v272 = vld [vmem:[%s1 + $0x3cc] sm:$0xf]
    %v273 = vld [vmem:[%s1 + $0x3d0] sm:$0xf]
    %v274 = vld [vmem:[%s1 + $0x3d4] sm:$0xf]
    %v275 = vld [vmem:[%s1 + $0x3d8] sm:$0xf]
    %v276 = vld [vmem:[%s1 + $0x3dc] sm:$0xf]
    %v277 = vld [vmem:[%s1 + $0x3e0] sm:$0xf]
    %v278 = vld [vmem:[%s1 + $0x3e4] sm:$0xf]
    %v279 = vld [vmem:[%s1 + $0x3e8] sm:$0xf]
    %v280 = vld [vmem:[%s1 + $0x3ec] sm:$0xf]
    %v281 = vld [vmem:[%s1 + $0x3f0] sm:$0xf]
    %v282 = vld [vmem:[%s1 + $0x3f4] sm:$0xf]
    %v283 = vld [vmem:[%s1 + $0x3f8] sm:$0xf]
    %v284 = vld [vmem:[%s1 + $0x3fc] sm:$0xf]
    %v285 = vld [vmem:[%s2] sm:$0xf]
    %v286 = vld [vmem:[%s2 + $0x4] sm:$0xf]
    %v287 = vld [vmem:[%s2 + $0x8] sm:$0xf]
    %v288 = vld [vmem:[%s2 + $0xc] sm:$0x3]
    %v289 = vld [vmem:[%s3] sm:$0x1]
    %v291 = vlaneseq
    %v292 = vshrl.u32 %v291, 7
    %v293 = vsub.s32 0, %v292
    %v294 = vrot.slane %v289, %v293
    %v552 = vunpack.c.l.b16 %v29
    %v553 = vunpack.c.l.b16 %v30
    %v554 = vunpack.c.l.b16 %v31
    %v555 = vunpack.c.l.b16 %v32
    %v556 = vunpack.c.l.b16 %v33
    %v557 = vunpack.c.l.b16 %v34
    %v558 = vunpack.c.l.b16 %v35
    %v559 = vunpack.c.l.b16 %v36
    %v560 = vunpack.c.l.b16 %v37
    %v561 = vunpack.c.l.b16 %v38
    %v562 = vunpack.c.l.b16 %v39
    %v563 = vunpack.c.l.b16 %v40
    %v564 = vunpack.c.l.b16 %v41
    %v565 = vunpack.c.l.b16 %v42
    %v566 = vunpack.c.l.b16 %v43
    %v567 = vunpack.c.l.b16 %v44
    %v568 = vunpack.c.l.b16 %v45
    %v569 = vunpack.c.l.b16 %v46
    %v570 = vunpack.c.l.b16 %v47
    %v571 = vunpack.c.l.b16 %v48
    %v572 = vunpack.c.l.b16 %v49
    %v573 = vunpack.c.l.b16 %v50
    %v574 = vunpack.c.l.b16 %v51
    %v575 = vunpack.c.l.b16 %v52
    %v576 = vunpack.c.l.b16 %v53
    %v577 = vunpack.c.l.b16 %v54
    %v578 = vunpack.c.l.b16 %v55
    %v579 = vunpack.c.l.b16 %v56
    %v580 = vunpack.c.l.b16 %v57
    %v581 = vunpack.c.l.b16 %v58
    %v582 = vunpack.c.l.b16 %v59
    %v583 = vunpack.c.l.b16 %v60
    %v584 = vunpack.c.l.b16 %v61
    %v585 = vunpack.c.l.b16 %v62
    %v586 = vunpack.c.l.b16 %v63
    %v587 = vunpack.c.l.b16 %v64
    %v588 = vunpack.c.l.b16 %v65
    %v589 = vunpack.c.l.b16 %v66
    %v590 = vunpack.c.l.b16 %v67
    %v591 = vunpack.c.l.b16 %v68
    %v592 = vunpack.c.l.b16 %v69
    %v593 = vunpack.c.l.b16 %v70
    %v594 = vunpack.c.l.b16 %v71
    %v595 = vunpack.c.l.b16 %v72
    %v596 = vunpack.c.l.b16 %v73
    %v597 = vunpack.c.l.b16 %v74
    %v598 = vunpack.c.l.b16 %v75
    %v599 = vunpack.c.l.b16 %v76
    %v600 = vunpack.c.l.b16 %v77
    %v601 = vunpack.c.l.b16 %v78
    %v602 = vunpack.c.l.b16 %v79
    %v603 = vunpack.c.l.b16 %v80
    %v604 = vunpack.c.l.b16 %v81
    %v605 = vunpack.c.l.b16 %v82
    %v606 = vunpack.c.l.b16 %v83
    %v607 = vunpack.c.l.b16 %v84
    %v608 = vunpack.c.l.b16 %v85
    %v609 = vunpack.c.l.b16 %v86
    %v610 = vunpack.c.l.b16 %v87
    %v611 = vunpack.c.l.b16 %v88
    %v612 = vunpack.c.l.b16 %v89
    %v613 = vunpack.c.l.b16 %v90
    %v614 = vunpack.c.l.b16 %v91
    %v615 = vunpack.c.l.b16 %v92
    %v616 = vunpack.c.l.b16 %v93
    %v617 = vunpack.c.l.b16 %v94
    %v618 = vunpack.c.l.b16 %v95
    %v619 = vunpack.c.l.b16 %v96
    %v620 = vunpack.c.l.b16 %v97
    %v621 = vunpack.c.l.b16 %v98
    %v622 = vunpack.c.l.b16 %v99
    %v623 = vunpack.c.l.b16 %v100
    %v624 = vunpack.c.l.b16 %v101
    %v625 = vunpack.c.l.b16 %v102
    %v626 = vunpack.c.l.b16 %v103
    %v627 = vunpack.c.l.b16 %v104
    %v628 = vunpack.c.l.b16 %v105
    %v629 = vunpack.c.l.b16 %v106
    %v630 = vunpack.c.l.b16 %v107
    %v631 = vunpack.c.l.b16 %v108
    %v632 = vunpack.c.l.b16 %v109
    %v633 = vunpack.c.l.b16 %v110
    %v634 = vunpack.c.l.b16 %v111
    %v635 = vunpack.c.l.b16 %v112
    %v636 = vunpack.c.l.b16 %v113
    %v637 = vunpack.c.l.b16 %v114
    %v638 = vunpack.c.l.b16 %v115
    %v639 = vunpack.c.l.b16 %v116
    %v640 = vunpack.c.l.b16 %v117
    %v641 = vunpack.c.l.b16 %v118
    %v642 = vunpack.c.l.b16 %v119
    %v643 = vunpack.c.l.b16 %v120
    %v644 = vunpack.c.l.b16 %v121
    %v645 = vunpack.c.l.b16 %v122
    %v646 = vunpack.c.l.b16 %v123
    %v647 = vunpack.c.l.b16 %v124
    %v648 = vunpack.c.l.b16 %v125
    %v649 = vunpack.c.l.b16 %v126
    %v650 = vunpack.c.l.b16 %v127
    %v651 = vunpack.c.l.b16 %v128
    %v652 = vunpack.c.l.b16 %v129
    %v653 = vunpack.c.l.b16 %v130
    %v654 = vunpack.c.l.b16 %v131
    %v655 = vunpack.c.l.b16 %v132
    %v656 = vunpack.c.l.b16 %v133
    %v657 = vunpack.c.l.b16 %v134
    %v658 = vunpack.c.l.b16 %v135
    %v659 = vunpack.c.l.b16 %v136
    %v660 = vunpack.c.l.b16 %v137
    %v661 = vunpack.c.l.b16 %v138
    %v662 = vunpack.c.l.b16 %v139
    %v663 = vunpack.c.l.b16 %v140
    %v664 = vunpack.c.l.b16 %v141
    %v665 = vunpack.c.l.b16 %v142
    %v666 = vunpack.c.l.b16 %v143
    %v667 = vunpack.c.l.b16 %v144
    %v668 = vunpack.c.l.b16 %v145
    %v669 = vunpack.c.l.b16 %v146
    %v670 = vunpack.c.l.b16 %v147
    %v671 = vunpack.c.l.b16 %v148
    %v672 = vunpack.c.l.b16 %v149
    %v673 = vunpack.c.l.b16 %v150
    %v674 = vunpack.c.l.b16 %v151
    %v675 = vunpack.c.l.b16 %v152
    %v676 = vunpack.c.l.b16 %v153
    %v677 = vunpack.c.l.b16 %v154
    %v678 = vunpack.c.l.b16 %v155
    %v679 = vunpack.c.l.b16 %v156
    %v680 = vunpack.c.l.b16 %v157
    %v681 = vunpack.c.l.b16 %v158
    %v682 = vunpack.c.l.b16 %v159
    %v683 = vunpack.c.l.b16 %v160
    %v684 = vunpack.c.l.b16 %v161
    %v685 = vunpack.c.l.b16 %v162
    %v686 = vunpack.c.l.b16 %v163
    %v687 = vunpack.c.l.b16 %v164
    %v688 = vunpack.c.l.b16 %v165
    %v689 = vunpack.c.l.b16 %v166
    %v690 = vunpack.c.l.b16 %v167
    %v691 = vunpack.c.l.b16 %v168
    %v692 = vunpack.c.l.b16 %v169
    %v693 = vunpack.c.l.b16 %v170
    %v694 = vunpack.c.l.b16 %v171
    %v695 = vunpack.c.l.b16 %v172
    %v696 = vunpack.c.l.b16 %v173
    %v697 = vunpack.c.l.b16 %v174
    %v698 = vunpack.c.l.b16 %v175
    %v699 = vunpack.c.l.b16 %v176
    %v700 = vunpack.c.l.b16 %v177
    %v701 = vunpack.c.l.b16 %v178
    %v702 = vunpack.c.l.b16 %v179
    %v703 = vunpack.c.l.b16 %v180
    %v704 = vunpack.c.l.b16 %v181
    %v705 = vunpack.c.l.b16 %v182
    %v706 = vunpack.c.l.b16 %v183
    %v707 = vunpack.c.l.b16 %v184
    %v708 = vunpack.c.l.b16 %v185
    %v709 = vunpack.c.l.b16 %v186
    %v710 = vunpack.c.l.b16 %v187
    %v711 = vunpack.c.l.b16 %v188
    %v712 = vunpack.c.l.b16 %v189
    %v713 = vunpack.c.l.b16 %v190
    %v714 = vunpack.c.l.b16 %v191
    %v715 = vunpack.c.l.b16 %v192
    %v716 = vunpack.c.l.b16 %v193
    %v717 = vunpack.c.l.b16 %v194
    %v718 = vunpack.c.l.b16 %v195
    %v719 = vunpack.c.l.b16 %v196
    %v720 = vunpack.c.l.b16 %v197
    %v721 = vunpack.c.l.b16 %v198
    %v722 = vunpack.c.l.b16 %v199
    %v723 = vunpack.c.l.b16 %v200
    %v724 = vunpack.c.l.b16 %v201
    %v725 = vunpack.c.l.b16 %v202
    %v726 = vunpack.c.l.b16 %v203
    %v727 = vunpack.c.l.b16 %v204
    %v728 = vunpack.c.l.b16 %v205
    %v729 = vunpack.c.l.b16 %v206
    %v730 = vunpack.c.l.b16 %v207
    %v731 = vunpack.c.l.b16 %v208
    %v732 = vunpack.c.l.b16 %v209
    %v733 = vunpack.c.l.b16 %v210
    %v734 = vunpack.c.l.b16 %v211
    %v735 = vunpack.c.l.b16 %v212
    %v736 = vunpack.c.l.b16 %v213
    %v737 = vunpack.c.l.b16 %v214
    %v738 = vunpack.c.l.b16 %v215
    %v739 = vunpack.c.l.b16 %v216
    %v740 = vunpack.c.l.b16 %v217
    %v741 = vunpack.c.l.b16 %v218
    %v742 = vunpack.c.l.b16 %v219
    %v743 = vunpack.c.l.b16 %v220
    %v744 = vunpack.c.l.b16 %v221
    %v745 = vunpack.c.l.b16 %v222
    %v746 = vunpack.c.l.b16 %v223
    %v747 = vunpack.c.l.b16 %v224
    %v748 = vunpack.c.l.b16 %v225
    %v749 = vunpack.c.l.b16 %v226
    %v750 = vunpack.c.l.b16 %v227
    %v751 = vunpack.c.l.b16 %v228
    %v752 = vunpack.c.l.b16 %v229
    %v753 = vunpack.c.l.b16 %v230
    %v754 = vunpack.c.l.b16 %v231
    %v755 = vunpack.c.l.b16 %v232
    %v756 = vunpack.c.l.b16 %v233
    %v757 = vunpack.c.l.b16 %v234
    %v758 = vunpack.c.l.b16 %v235
    %v759 = vunpack.c.l.b16 %v236
    %v760 = vunpack.c.l.b16 %v237
    %v761 = vunpack.c.l.b16 %v238
    %v762 = vunpack.c.l.b16 %v239
    %v763 = vunpack.c.l.b16 %v240
    %v764 = vunpack.c.l.b16 %v241
    %v765 = vunpack.c.l.b16 %v242
    %v766 = vunpack.c.l.b16 %v243
    %v767 = vunpack.c.l.b16 %v244
    %v768 = vunpack.c.l.b16 %v245
    %v769 = vunpack.c.l.b16 %v246
    %v770 = vunpack.c.l.b16 %v247
    %v771 = vunpack.c.l.b16 %v248
    %v772 = vunpack.c.l.b16 %v249
    %v773 = vunpack.c.l.b16 %v250
    %v774 = vunpack.c.l.b16 %v251
    %v775 = vunpack.c.l.b16 %v252
    %v776 = vunpack.c.l.b16 %v253
    %v777 = vunpack.c.l.b16 %v254
    %v778 = vunpack.c.l.b16 %v255
    %v779 = vunpack.c.l.b16 %v256
    %v780 = vunpack.c.l.b16 %v257
    %v781 = vunpack.c.l.b16 %v258
    %v782 = vunpack.c.l.b16 %v259
    %v783 = vunpack.c.l.b16 %v260
    %v784 = vunpack.c.l.b16 %v261
    %v785 = vunpack.c.l.b16 %v262
    %v786 = vunpack.c.l.b16 %v263
    %v787 = vunpack.c.l.b16 %v264
    %v788 = vunpack.c.l.b16 %v265
    %v789 = vunpack.c.l.b16 %v266
    %v790 = vunpack.c.l.b16 %v267
    %v791 = vunpack.c.l.b16 %v268
    %v792 = vunpack.c.l.b16 %v269
    %v793 = vunpack.c.l.b16 %v270
    %v794 = vunpack.c.l.b16 %v271
    %v795 = vunpack.c.l.b16 %v272
    %v796 = vunpack.c.l.b16 %v273
    %v797 = vunpack.c.l.b16 %v274
    %v798 = vunpack.c.l.b16 %v275
    %v799 = vunpack.c.l.b16 %v276
    %v800 = vunpack.c.l.b16 %v277
    %v801 = vunpack.c.l.b16 %v278
    %v802 = vunpack.c.l.b16 %v279
    %v803 = vunpack.c.l.b16 %v280
    %v804 = vunpack.c.l.b16 %v281
    %v805 = vunpack.c.l.b16 %v282
    %v806 = vunpack.c.l.b16 %v283
    %v807 = vunpack.c.l.b16 %v284
    %v808 = vpack.c.b16 %v553, %v552
    %v809 = vpack.c.b16 %v555, %v554
    %v810 = vpack.c.b16 %v557, %v556
    %v811 = vpack.c.b16 %v559, %v558
    %v812 = vpack.c.b16 %v561, %v560
    %v813 = vpack.c.b16 %v563, %v562
    %v814 = vpack.c.b16 %v565, %v564
    %v815 = vpack.c.b16 %v567, %v566
    %v816 = vpack.c.b16 %v569, %v568
    %v817 = vpack.c.b16 %v571, %v570
    %v818 = vpack.c.b16 %v573, %v572
    %v819 = vpack.c.b16 %v575, %v574
    %v820 = vpack.c.b16 %v577, %v576
    %v821 = vpack.c.b16 %v579, %v578
    %v822 = vpack.c.b16 %v581, %v580
    %v823 = vpack.c.b16 %v583, %v582
    %v824 = vpack.c.b16 %v585, %v584
    %v825 = vpack.c.b16 %v587, %v586
    %v826 = vpack.c.b16 %v589, %v588
    %v827 = vpack.c.b16 %v591, %v590
    %v828 = vpack.c.b16 %v593, %v592
    %v829 = vpack.c.b16 %v595, %v594
    %v830 = vpack.c.b16 %v597, %v596
    %v831 = vpack.c.b16 %v599, %v598
    %v832 = vpack.c.b16 %v601, %v600
    %v833 = vpack.c.b16 %v603, %v602
    %v834 = vpack.c.b16 %v605, %v604
    %v835 = vpack.c.b16 %v607, %v606
    %v836 = vpack.c.b16 %v609, %v608
    %v837 = vpack.c.b16 %v611, %v610
    %v838 = vpack.c.b16 %v613, %v612
    %v839 = vpack.c.b16 %v615, %v614
    %v840 = vpack.c.b16 %v617, %v616
    %v841 = vpack.c.b16 %v619, %v618
    %v842 = vpack.c.b16 %v621, %v620
    %v843 = vpack.c.b16 %v623, %v622
    %v844 = vpack.c.b16 %v625, %v624
    %v845 = vpack.c.b16 %v627, %v626
    %v846 = vpack.c.b16 %v629, %v628
    %v847 = vpack.c.b16 %v631, %v630
    %v848 = vpack.c.b16 %v633, %v632
    %v849 = vpack.c.b16 %v635, %v634
    %v850 = vpack.c.b16 %v637, %v636
    %v851 = vpack.c.b16 %v639, %v638
    %v852 = vpack.c.b16 %v641, %v640
    %v853 = vpack.c.b16 %v643, %v642
    %v854 = vpack.c.b16 %v645, %v644
    %v855 = vpack.c.b16 %v647, %v646
    %v856 = vpack.c.b16 %v649, %v648
    %v857 = vpack.c.b16 %v651, %v650
    %v858 = vpack.c.b16 %v653, %v652
    %v859 = vpack.c.b16 %v655, %v654
    %v860 = vpack.c.b16 %v657, %v656
    %v861 = vpack.c.b16 %v659, %v658
    %v862 = vpack.c.b16 %v661, %v660
    %v863 = vpack.c.b16 %v663, %v662
    %v864 = vpack.c.b16 %v665, %v664
    %v865 = vpack.c.b16 %v667, %v666
    %v866 = vpack.c.b16 %v669, %v668
    %v867 = vpack.c.b16 %v671, %v670
    %v868 = vpack.c.b16 %v673, %v672
    %v869 = vpack.c.b16 %v675, %v674
    %v870 = vpack.c.b16 %v677, %v676
    %v871 = vpack.c.b16 %v679, %v678
    %v872 = vpack.c.b16 %v681, %v680
    %v873 = vpack.c.b16 %v683, %v682
    %v874 = vpack.c.b16 %v685, %v684
    %v875 = vpack.c.b16 %v687, %v686
    %v876 = vpack.c.b16 %v689, %v688
    %v877 = vpack.c.b16 %v691, %v690
    %v878 = vpack.c.b16 %v693, %v692
    %v879 = vpack.c.b16 %v695, %v694
    %v880 = vpack.c.b16 %v697, %v696
    %v881 = vpack.c.b16 %v699, %v698
    %v882 = vpack.c.b16 %v701, %v700
    %v883 = vpack.c.b16 %v703, %v702
    %v884 = vpack.c.b16 %v705, %v704
    %v885 = vpack.c.b16 %v707, %v706
    %v886 = vpack.c.b16 %v709, %v708
    %v887 = vpack.c.b16 %v711, %v710
    %v888 = vpack.c.b16 %v713, %v712
    %v889 = vpack.c.b16 %v715, %v714
    %v890 = vpack.c.b16 %v717, %v716
    %v891 = vpack.c.b16 %v719, %v718
    %v892 = vpack.c.b16 %v721, %v720
    %v893 = vpack.c.b16 %v723, %v722
    %v894 = vpack.c.b16 %v725, %v724
    %v895 = vpack.c.b16 %v727, %v726
    %v896 = vpack.c.b16 %v729, %v728
    %v897 = vpack.c.b16 %v731, %v730
    %v898 = vpack.c.b16 %v733, %v732
    %v899 = vpack.c.b16 %v735, %v734
    %v900 = vpack.c.b16 %v737, %v736
    %v901 = vpack.c.b16 %v739, %v738
    %v902 = vpack.c.b16 %v741, %v740
    %v903 = vpack.c.b16 %v743, %v742
    %v904 = vpack.c.b16 %v745, %v744
    %v905 = vpack.c.b16 %v747, %v746
    %v906 = vpack.c.b16 %v749, %v748
    %v907 = vpack.c.b16 %v751, %v750
    %v908 = vpack.c.b16 %v753, %v752
    %v909 = vpack.c.b16 %v755, %v754
    %v910 = vpack.c.b16 %v757, %v756
    %v911 = vpack.c.b16 %v759, %v758
    %v912 = vpack.c.b16 %v761, %v760
    %v913 = vpack.c.b16 %v763, %v762
    %v914 = vpack.c.b16 %v765, %v764
    %v915 = vpack.c.b16 %v767, %v766
    %v916 = vpack.c.b16 %v769, %v768
    %v917 = vpack.c.b16 %v771, %v770
    %v918 = vpack.c.b16 %v773, %v772
    %v919 = vpack.c.b16 %v775, %v774
    %v920 = vpack.c.b16 %v777, %v776
    %v921 = vpack.c.b16 %v779, %v778
    %v922 = vpack.c.b16 %v781, %v780
    %v923 = vpack.c.b16 %v783, %v782
    %v924 = vpack.c.b16 %v785, %v784
    %v925 = vpack.c.b16 %v787, %v786
    %v926 = vpack.c.b16 %v789, %v788
    %v927 = vpack.c.b16 %v791, %v790
    %v928 = vpack.c.b16 %v793, %v792
    %v929 = vpack.c.b16 %v795, %v794
    %v930 = vpack.c.b16 %v797, %v796
    %v931 = vpack.c.b16 %v799, %v798
    %v932 = vpack.c.b16 %v801, %v800
    %v933 = vpack.c.b16 %v803, %v802
    %v934 = vpack.c.b16 %v805, %v804
    %v935 = vpack.c.b16 %v807, %v806
    %v940 = vunpack.c.l.b16 %v285
    %v941 = vunpack.c.l.b16 %v286
    %v942 = vunpack.c.l.b16 %v287
    %v943 = vunpack.c.l.b16 %v288
    %v944 = vpack.c.b16 %v941, %v940
    %v945 = vpack.c.b16 %v943, %v942
    %vm947 = vcmask 220160
    %v949 = vsel %vm947, %v808, 0
    %v952 = vsel %vm947, %v809, 0
    %v955 = vsel %vm947, %v810, 0
    %v958 = vsel %vm947, %v811, 0
    %v961 = vsel %vm947, %v812, 0
    %v964 = vsel %vm947, %v813, 0
    %v967 = vsel %vm947, %v814, 0
    %v970 = vsel %vm947, %v815, 0
    %v973 = vsel %vm947, %v816, 0
    %v976 = vsel %vm947, %v817, 0
    %v979 = vsel %vm947, %v818, 0
    %v982 = vsel %vm947, %v819, 0
    %v985 = vsel %vm947, %v820, 0
    %v988 = vsel %vm947, %v821, 0
    %v991 = vsel %vm947, %v822, 0
    %v994 = vsel %vm947, %v823, 0
    %v997 = vsel %vm947, %v824, 0
    %v1000 = vsel %vm947, %v825, 0
    %v1003 = vsel %vm947, %v826, 0
    %v1006 = vsel %vm947, %v827, 0
    %v1009 = vsel %vm947, %v828, 0
    %v1012 = vsel %vm947, %v829, 0
    %v1015 = vsel %vm947, %v830, 0
    %v1018 = vsel %vm947, %v831, 0
    %v1021 = vsel %vm947, %v832, 0
    %v1024 = vsel %vm947, %v833, 0
    %v1027 = vsel %vm947, %v834, 0
    %v1030 = vsel %vm947, %v835, 0
    %v1033 = vsel %vm947, %v836, 0
    %v1036 = vsel %vm947, %v837, 0
    %v1039 = vsel %vm947, %v838, 0
    %v1042 = vsel %vm947, %v839, 0
    %v1045 = vsel %vm947, %v840, 0
    %v1048 = vsel %vm947, %v841, 0
    %v1051 = vsel %vm947, %v842, 0
    %v1054 = vsel %vm947, %v843, 0
    %v1057 = vsel %vm947, %v844, 0
    %v1060 = vsel %vm947, %v845, 0
    %v1063 = vsel %vm947, %v846, 0
    %v1066 = vsel %vm947, %v847, 0
    %v1069 = vsel %vm947, %v848, 0
    %v1072 = vsel %vm947, %v849, 0
    %v1075 = vsel %vm947, %v850, 0
    %v1078 = vsel %vm947, %v851, 0
    %v1081 = vsel %vm947, %v852, 0
    %v1084 = vsel %vm947, %v853, 0
    %v1087 = vsel %vm947, %v854, 0
    %v1090 = vsel %vm947, %v855, 0
    %v1093 = vsel %vm947, %v856, 0
    %v1096 = vsel %vm947, %v857, 0
    %v1099 = vsel %vm947, %v858, 0
    %v1102 = vsel %vm947, %v859, 0
    %v1105 = vsel %vm947, %v860, 0
    %v1108 = vsel %vm947, %v861, 0
    %v1111 = vsel %vm947, %v862, 0
    %v1114 = vsel %vm947, %v863, 0
    %v1117 = vsel %vm947, %v864, 0
    %v1120 = vsel %vm947, %v865, 0
    %v1123 = vsel %vm947, %v866, 0
    %v1126 = vsel %vm947, %v867, 0
    %v1129 = vsel %vm947, %v868, 0
    %v1132 = vsel %vm947, %v869, 0
    %v1135 = vsel %vm947, %v870, 0
    %v1138 = vsel %vm947, %v871, 0
    %v1141 = vsel %vm947, %v872, 0
    %v1144 = vsel %vm947, %v873, 0
    %v1147 = vsel %vm947, %v874, 0
    %v1150 = vsel %vm947, %v875, 0
    %v1153 = vsel %vm947, %v876, 0
    %v1156 = vsel %vm947, %v877, 0
    %v1159 = vsel %vm947, %v878, 0
    %v1162 = vsel %vm947, %v879, 0
    %v1165 = vsel %vm947, %v880, 0
    %v1168 = vsel %vm947, %v881, 0
    %v1171 = vsel %vm947, %v882, 0
    %v1174 = vsel %vm947, %v883, 0
    %v1177 = vsel %vm947, %v884, 0
    %v1180 = vsel %vm947, %v885, 0
    %v1183 = vsel %vm947, %v886, 0
    %v1186 = vsel %vm947, %v887, 0
    %v1189 = vsel %vm947, %v888, 0
    %v1192 = vsel %vm947, %v889, 0
    %v1195 = vsel %vm947, %v890, 0
    %v1198 = vsel %vm947, %v891, 0
    %v1201 = vsel %vm947, %v892, 0
    %v1204 = vsel %vm947, %v893, 0
    %v1207 = vsel %vm947, %v894, 0
    %v1210 = vsel %vm947, %v895, 0
    %v1213 = vsel %vm947, %v896, 0
    %v1216 = vsel %vm947, %v897, 0
    %v1219 = vsel %vm947, %v898, 0
    %v1222 = vsel %vm947, %v899, 0
    %v1225 = vsel %vm947, %v900, 0
    %v1228 = vsel %vm947, %v901, 0
    %v1231 = vsel %vm947, %v902, 0
    %v1234 = vsel %vm947, %v903, 0
    %v1237 = vsel %vm947, %v904, 0
    %v1240 = vsel %vm947, %v905, 0
    %v1243 = vsel %vm947, %v906, 0
    %v1246 = vsel %vm947, %v907, 0
    %v1249 = vsel %vm947, %v908, 0
    %v1252 = vsel %vm947, %v909, 0
    %v1255 = vsel %vm947, %v910, 0
    %v1258 = vsel %vm947, %v911, 0
    %v1261 = vsel %vm947, %v912, 0
    %v1264 = vsel %vm947, %v913, 0
    %v1267 = vsel %vm947, %v914, 0
    %v1270 = vsel %vm947, %v915, 0
    %v1273 = vsel %vm947, %v916, 0
    %v1276 = vsel %vm947, %v917, 0
    %v1279 = vsel %vm947, %v918, 0
    %v1282 = vsel %vm947, %v919, 0
    %v1285 = vsel %vm947, %v920, 0
    %v1288 = vsel %vm947, %v921, 0
    %v1291 = vsel %vm947, %v922, 0
    %v1294 = vsel %vm947, %v923, 0
    %v1297 = vsel %vm947, %v924, 0
    %v1300 = vsel %vm947, %v925, 0
    %v1303 = vsel %vm947, %v926, 0
    %v1306 = vsel %vm947, %v927, 0
    %v1309 = vsel %vm947, %v928, 0
    %v1312 = vsel %vm947, %v929, 0
    %v1315 = vsel %vm947, %v930, 0
    %v1318 = vsel %vm947, %v931, 0
    %v1321 = vsel %vm947, %v932, 0
    %v1324 = vsel %vm947, %v933, 0
    %v1327 = vsel %vm947, %v934, 0
    %v1330 = vsel %vm947, %v935, 0
    %vm1332 = vcmask 1044480
    %vm1333 = vcmask 1045504
    %v1334 = vsel %vm1332, 4294967295, 65535
    %v1335 = vsel %vm1333, %v1334, 0
    %v1337 = vand.u32 %v945, %v1335
    %1339 = vmatprep.subr.bf16.mxu0 0
    %1340 = vmatpush1.bf16.msra.mxu0 %v944
    %1341 = vmatprep.subr.bf16.mxu0 0
    %1342 = vmatpush1.bf16.msra.mxu0 %v1337
    %1343 = vmatprep.subr.bf16.mxu0 0
    %1344 = vmatpush1.bf16.msra.mxu0 0
    %1345 = vmatprep.subr.bf16.mxu0 0
    %1346 = vmatpush1.bf16.msra.mxu0 0
    %1347 = vmatprep.subr.bf16.mxu0 0
    %1348 = vmatpush1.bf16.msra.mxu0 0
    %1349 = vmatprep.subr.bf16.mxu0 0
    %1350 = vmatpush1.bf16.msra.mxu0 0
    %1351 = vmatprep.subr.bf16.mxu0 0
    %1352 = vmatpush1.bf16.msra.mxu0 0
    %1353 = vmatprep.subr.bf16.mxu0 0
    %1354 = vmatpush1.bf16.msra.mxu0 0
    %1355 = vmatprep.subr.bf16.mxu0 0
    %1356 = vmatpush1.bf16.msra.mxu0 0
    %1357 = vmatprep.subr.bf16.mxu0 0
    %1358 = vmatpush1.bf16.msra.mxu0 0
    %1359 = vmatprep.subr.bf16.mxu0 0
    %1360 = vmatpush1.bf16.msra.mxu0 0
    %1361 = vmatprep.subr.bf16.mxu0 0
    %1362 = vmatpush1.bf16.msra.mxu0 0
    %1363 = vmatprep.subr.bf16.mxu0 0
    %1364 = vmatpush1.bf16.msra.mxu0 0
    %1365 = vmatprep.subr.bf16.mxu0 0
    %1366 = vmatpush1.bf16.msra.mxu0 0
    %1367 = vmatprep.subr.bf16.mxu0 0
    %1368 = vmatpush1.bf16.msra.mxu0 0
    %1369 = vmatprep.subr.bf16.mxu0 0
    %1370 = vmatpush1.bf16.msra.mxu0 0
    %1371 = vmatprep.mubr.bf16.mxu0 0
    %1372 = vmatmul.mubr.bf16.gmra.mrb[0].mxu0 %v949
    %v1373 = vpop.f32.mrb[0].mxu0
    %v1374 = vadd.f32 %v294, %v1373
    %v1375 = vpop.f32.mrb[0].mxu0
    %v1376 = vpop.f32.mrb[0].mxu0
    %v1377 = vadd.f32 %v294, %v1376
    %v1378 = vpop.f32.mrb[0].mxu0
    %1379 = vmatprep.mubr.bf16.mxu0 0
    %1380 = vmatmul.mubr.bf16.gmra.mrb[0].mxu0 %v952
    %v1381 = vpop.f32.mrb[0].mxu0
    %v1382 = vadd.f32 %v294, %v1381
    %v1383 = vpop.f32.mrb[0].mxu0
    %v1384 = vpop.f32.mrb[0].mxu0
    %v1385 = vadd.f32 %v294, %v1384
    %v1386 = vpop.f32.mrb[0].mxu0
    %1387 = vmatprep.mubr.bf16.mxu0 0
    %1388 = vmatmul.mubr.bf16.gmra.mrb[0].mxu0 %v955
    %v1389 = vpop.f32.mrb[0].mxu0
    %v1390 = vadd.f32 %v294, %v1389
    %v1391 = vpop.f32.mrb[0].mxu0
    %v1392 = vpop.f32.mrb[0].mxu0
    %v1393 = vadd.f32 %v294, %v1392
    %v1394 = vpop.f32.mrb[0].mxu0
    %1395 = vmatprep.mubr.bf16.mxu0 0
    %1396 = vmatmul.mubr.bf16.gmra.mrb[0].mxu0 %v958
    %v1397 = vpop.f32.mrb[0].mxu0
    %v1398 = vadd.f32 %v294, %v1397
    %v1399 = vpop.f32.mrb[0].mxu0
    %v1400 = vpop.f32.mrb[0].mxu0
    %v1401 = vadd.f32 %v294, %v1400
    %v1402 = vpop.f32.mrb[0].mxu0
    %1403 = vmatprep.mubr.bf16.mxu0 0
    %1404 = vmatmul.mubr.bf16.gmra.mrb[0].mxu0 %v961
    %v1405 = vpop.f32.mrb[0].mxu0
    %v1406 = vadd.f32 %v294, %v1405
    %v1407 = vpop.f32.mrb[0].mxu0
    %v1408 = vpop.f32.mrb[0].mxu0
    %v1409 = vadd.f32 %v294, %v1408
    %v1410 = vpop.f32.mrb[0].mxu0
    %1411 = vmatprep.mubr.bf16.mxu0 0
    %1412 = vmatmul.mubr.bf16.gmra.mrb[0].mxu0 %v964
    %v1413 = vpop.f32.mrb[0].mxu0
    %v1414 = vadd.f32 %v294, %v1413
    %v1415 = vpop.f32.mrb[0].mxu0
    %v1416 = vpop.f32.mrb[0].mxu0
    %v1417 = vadd.f32 %v294, %v1416
    %v1418 = vpop.f32.mrb[0].mxu0
    %1419 = vmatprep.mubr.bf16.mxu0 0
    %1420 = vmatmul.mubr.bf16.gmra.mrb[0].mxu0 %v967
    %v1421 = vpop.f32.mrb[0].mxu0
    %v1422 = vadd.f32 %v294, %v1421
    %v1423 = vpop.f32.mrb[0].mxu0
    %v1424 = vpop.f32.mrb[0].mxu0
    %v1425 = vadd.f32 %v294, %v1424
    %v1426 = vpop.f32.mrb[0].mxu0
    %1427 = vmatprep.mubr.bf16.mxu0 0
    %1428 = vmatmul.mubr.bf16.gmra.mrb[0].mxu0 %v970
    %v1429 = vpop.f32.mrb[0].mxu0
    %v1430 = vadd.f32 %v294, %v1429
    %v1431 = vpop.f32.mrb[0].mxu0
    %v1432 = vpop.f32.mrb[0].mxu0
    %v1433 = vadd.f32 %v294, %v1432
    %v1434 = vpop.f32.mrb[0].mxu0
    %1435 = vmatprep.mubr.bf16.mxu0 0
    %1436 = vmatmul.mubr.bf16.gmra.mrb[0].mxu0 %v973
    %v1437 = vpop.f32.mrb[0].mxu0
    %v1438 = vadd.f32 %v294, %v1437
    %v1439 = vpop.f32.mrb[0].mxu0
    %v1440 = vpop.f32.mrb[0].mxu0
    %v1441 = vadd.f32 %v294, %v1440
    %v1442 = vpop.f32.mrb[0].mxu0
    %1443 = vmatprep.mubr.bf16.mxu0 0
    %1444 = vmatmul.mubr.bf16.gmra.mrb[0].mxu0 %v976
    %v1445 = vpop.f32.mrb[0].mxu0
    %v1446 = vadd.f32 %v294, %v1445
    %v1447 = vpop.f32.mrb[0].mxu0
    %v1448 = vpop.f32.mrb[0].mxu0
    %v1449 = vadd.f32 %v294, %v1448
    %v1450 = vpop.f32.mrb[0].mxu0
    %1451 = vmatprep.mubr.bf16.mxu0 0
    %1452 = vmatmul.mubr.bf16.gmra.mrb[0].mxu0 %v979
    %v1453 = vpop.f32.mrb[0].mxu0
    %v1454 = vadd.f32 %v294, %v1453
    %v1455 = vpop.f32.mrb[0].mxu0
    %v1456 = vpop.f32.mrb[0].mxu0
    %v1457 = vadd.f32 %v294, %v1456
    %v1458 = vpop.f32.mrb[0].mxu0
    %1459 = vmatprep.mubr.bf16.mxu0 0
    %1460 = vmatmul.mubr.bf16.gmra.mrb[0].mxu0 %v982
    %v1461 = vpop.f32.mrb[0].mxu0
    %v1462 = vadd.f32 %v294, %v1461
    %v1463 = vpop.f32.mrb[0].mxu0
    %v1464 = vpop.f32.mrb[0].mxu0
    %v1465 = vadd.f32 %v294, %v1464
    %v1466 = vpop.f32.mrb[0].mxu0
    %1467 = vmatprep.mubr.bf16.mxu0 0
    %1468 = vmatmul.mubr.bf16.gmra.mrb[0].mxu0 %v985
    %v1469 = vpop.f32.mrb[0].mxu0
    %v1470 = vadd.f32 %v294, %v1469
    %v1471 = vpop.f32.mrb[0].mxu0
    %v1472 = vpop.f32.mrb[0].mxu0
    %v1473 = vadd.f32 %v294, %v1472
    %v1474 = vpop.f32.mrb[0].mxu0
    %1475 = vmatprep.mubr.bf16.mxu0 0
    %1476 = vmatmul.mubr.bf16.gmra.mrb[0].mxu0 %v988
    %v1477 = vpop.f32.mrb[0].mxu0
    %v1478 = vadd.f32 %v294, %v1477
    %v1479 = vpop.f32.mrb[0].mxu0
    %v1480 = vpop.f32.mrb[0].mxu0
    %v1481 = vadd.f32 %v294, %v1480
    %v1482 = vpop.f32.mrb[0].mxu0
    %1483 = vmatprep.mubr.bf16.mxu0 0
    %1484 = vmatmul.mubr.bf16.gmra.mrb[0].mxu0 %v991
    %v1485 = vpop.f32.mrb[0].mxu0
    %v1486 = vadd.f32 %v294, %v1485
    %v1487 = vpop.f32.mrb[0].mxu0
    %v1488 = vpop.f32.mrb[0].mxu0
    %v1489 = vadd.f32 %v294, %v1488
    %v1490 = vpop.f32.mrb[0].mxu0
    %1491 = vmatprep.mubr.bf16.mxu0 0
    %1492 = vmatmul.mubr.bf16.gmra.mrb[0].mxu0 %v994
    %v1493 = vpop.f32.mrb[0].mxu0
    %v1494 = vadd.f32 %v294, %v1493
    %v1495 = vpop.f32.mrb[0].mxu0
    %v1496 = vpop.f32.mrb[0].mxu0
    %v1497 = vadd.f32 %v294, %v1496
    %v1498 = vpop.f32.mrb[0].mxu0
    %1499 = vmatprep.mubr.bf16.mxu0 0
    %1500 = vmatmul.mubr.bf16.gmra.mrb[0].mxu0 %v997
    %v1501 = vpop.f32.mrb[0].mxu0
    %v1502 = vadd.f32 %v294, %v1501
    %v1503 = vpop.f32.mrb[0].mxu0
    %v1504 = vpop.f32.mrb[0].mxu0
    %v1505 = vadd.f32 %v294, %v1504
    %v1506 = vpop.f32.mrb[0].mxu0
    %1507 = vmatprep.mubr.bf16.mxu0 0
    %1508 = vmatmul.mubr.bf16.gmra.mrb[0].mxu0 %v1000
    %v1509 = vpop.f32.mrb[0].mxu0
    %v1510 = vadd.f32 %v294, %v1509
    %v1511 = vpop.f32.mrb[0].mxu0
    %v1512 = vpop.f32.mrb[0].mxu0
    %v1513 = vadd.f32 %v294, %v1512
    %v1514 = vpop.f32.mrb[0].mxu0
    %1515 = vmatprep.mubr.bf16.mxu0 0
    %1516 = vmatmul.mubr.bf16.gmra.mrb[0].mxu0 %v1003
    %v1517 = vpop.f32.mrb[0].mxu0
    %v1518 = vadd.f32 %v294, %v1517
    %v1519 = vpop.f32.mrb[0].mxu0
    %v1520 = vpop.f32.mrb[0].mxu0
    %v1521 = vadd.f32 %v294, %v1520
    %v1522 = vpop.f32.mrb[0].mxu0
    %1523 = vmatprep.mubr.bf16.mxu0 0
    %1524 = vmatmul.mubr.bf16.gmra.mrb[0].mxu0 %v1006
    %v1525 = vpop.f32.mrb[0].mxu0
    %v1526 = vadd.f32 %v294, %v1525
    %v1527 = vpop.f32.mrb[0].mxu0
    %v1528 = vpop.f32.mrb[0].mxu0
    %v1529 = vadd.f32 %v294, %v1528
    %v1530 = vpop.f32.mrb[0].mxu0
    %1531 = vmatprep.mubr.bf16.mxu0 0
    %1532 = vmatmul.mubr.bf16.gmra.mrb[0].mxu0 %v1009
    %v1533 = vpop.f32.mrb[0].mxu0
    %v1534 = vadd.f32 %v294, %v1533
    %v1535 = vpop.f32.mrb[0].mxu0
    %v1536 = vpop.f32.mrb[0].mxu0
    %v1537 = vadd.f32 %v294, %v1536
    %v1538 = vpop.f32.mrb[0].mxu0
    %1539 = vmatprep.mubr.bf16.mxu0 0
    %1540 = vmatmul.mubr.bf16.gmra.mrb[0].mxu0 %v1012
    %v1541 = vpop.f32.mrb[0].mxu0
    %v1542 = vadd.f32 %v294, %v1541
    %v1543 = vpop.f32.mrb[0].mxu0
    %v1544 = vpop.f32.mrb[0].mxu0
    %v1545 = vadd.f32 %v294, %v1544
    %v1546 = vpop.f32.mrb[0].mxu0
    %1547 = vmatprep.mubr.bf16.mxu0 0
    %1548 = vmatmul.mubr.bf16.gmra.mrb[0].mxu0 %v1015
    %v1549 = vpop.f32.mrb[0].mxu0
    %v1550 = vadd.f32 %v294, %v1549
    %v1551 = vpop.f32.mrb[0].mxu0
    %v1552 = vpop.f32.mrb[0].mxu0
    %v1553 = vadd.f32 %v294, %v1552
    %v1554 = vpop.f32.mrb[0].mxu0
    %1555 = vmatprep.mubr.bf16.mxu0 0
    %1556 = vmatmul.mubr.bf16.gmra.mrb[0].mxu0 %v1018
    %v1557 = vpop.f32.mrb[0].mxu0
    %v1558 = vadd.f32 %v294, %v1557
    %v1559 = vpop.f32.mrb[0].mxu0
    %v1560 = vpop.f32.mrb[0].mxu0
    %v1561 = vadd.f32 %v294, %v1560
    %v1562 = vpop.f32.mrb[0].mxu0
    %1563 = vmatprep.mubr.bf16.mxu0 0
    %1564 = vmatmul.mubr.bf16.gmra.mrb[0].mxu0 %v1021
    %v1565 = vpop.f32.mrb[0].mxu0
    %v1566 = vadd.f32 %v294, %v1565
    %v1567 = vpop.f32.mrb[0].mxu0
    %v1568 = vpop.f32.mrb[0].mxu0
    %v1569 = vadd.f32 %v294, %v1568
    %v1570 = vpop.f32.mrb[0].mxu0
    %1571 = vmatprep.mubr.bf16.mxu0 0
    %1572 = vmatmul.mubr.bf16.gmra.mrb[0].mxu0 %v1024
    %v1573 = vpop.f32.mrb[0].mxu0
    %v1574 = vadd.f32 %v294, %v1573
    %v1575 = vpop.f32.mrb[0].mxu0
    %v1576 = vpop.f32.mrb[0].mxu0
    %v1577 = vadd.f32 %v294, %v1576
    %v1578 = vpop.f32.mrb[0].mxu0
    %1579 = vmatprep.mubr.bf16.mxu0 0
    %1580 = vmatmul.mubr.bf16.gmra.mrb[0].mxu0 %v1027
    %v1581 = vpop.f32.mrb[0].mxu0
    %v1582 = vadd.f32 %v294, %v1581
    %v1583 = vpop.f32.mrb[0].mxu0
    %v1584 = vpop.f32.mrb[0].mxu0
    %v1585 = vadd.f32 %v294, %v1584
    %v1586 = vpop.f32.mrb[0].mxu0
    %1587 = vmatprep.mubr.bf16.mxu0 0
    %1588 = vmatmul.mubr.bf16.gmra.mrb[0].mxu0 %v1030
    %v1589 = vpop.f32.mrb[0].mxu0
    %v1590 = vadd.f32 %v294, %v1589
    %v1591 = vpop.f32.mrb[0].mxu0
    %v1592 = vpop.f32.mrb[0].mxu0
    %v1593 = vadd.f32 %v294, %v1592
    %v1594 = vpop.f32.mrb[0].mxu0
    %1595 = vmatprep.mubr.bf16.mxu0 0
    %1596 = vmatmul.mubr.bf16.gmra.mrb[0].mxu0 %v1033
    %v1597 = vpop.f32.mrb[0].mxu0
    %v1598 = vadd.f32 %v294, %v1597
    %v1599 = vpop.f32.mrb[0].mxu0
    %v1600 = vpop.f32.mrb[0].mxu0
    %v1601 = vadd.f32 %v294, %v1600
    %v1602 = vpop.f32.mrb[0].mxu0
    %1603 = vmatprep.mubr.bf16.mxu0 0
    %1604 = vmatmul.mubr.bf16.gmra.mrb[0].mxu0 %v1036
    %v1605 = vpop.f32.mrb[0].mxu0
    %v1606 = vadd.f32 %v294, %v1605
    %v1607 = vpop.f32.mrb[0].mxu0
    %v1608 = vpop.f32.mrb[0].mxu0
    %v1609 = vadd.f32 %v294, %v1608
    %v1610 = vpop.f32.mrb[0].mxu0
    %1611 = vmatprep.mubr.bf16.mxu0 0
    %1612 = vmatmul.mubr.bf16.gmra.mrb[0].mxu0 %v1039
    %v1613 = vpop.f32.mrb[0].mxu0
    %v1614 = vadd.f32 %v294, %v1613
    %v1615 = vpop.f32.mrb[0].mxu0
    %v1616 = vpop.f32.mrb[0].mxu0
    %v1617 = vadd.f32 %v294, %v1616
    %v1618 = vpop.f32.mrb[0].mxu0
    %1619 = vmatprep.mubr.bf16.mxu0 0
    %1620 = vmatmul.mubr.bf16.gmra.mrb[0].mxu0 %v1042
    %v1621 = vpop.f32.mrb[0].mxu0
    %v1622 = vadd.f32 %v294, %v1621
    %v1623 = vpop.f32.mrb[0].mxu0
    %v1624 = vpop.f32.mrb[0].mxu0
    %v1625 = vadd.f32 %v294, %v1624
    %v1626 = vpop.f32.mrb[0].mxu0
    %1627 = vmatprep.mubr.bf16.mxu0 0
    %1628 = vmatmul.mubr.bf16.gmra.mrb[0].mxu0 %v1045
    %v1629 = vpop.f32.mrb[0].mxu0
    %v1630 = vadd.f32 %v294, %v1629
    %v1631 = vpop.f32.mrb[0].mxu0
    %v1632 = vpop.f32.mrb[0].mxu0
    %v1633 = vadd.f32 %v294, %v1632
    %v1634 = vpop.f32.mrb[0].mxu0
    %1635 = vmatprep.mubr.bf16.mxu0 0
    %1636 = vmatmul.mubr.bf16.gmra.mrb[0].mxu0 %v1048
    %v1637 = vpop.f32.mrb[0].mxu0
    %v1638 = vadd.f32 %v294, %v1637
    %v1639 = vpop.f32.mrb[0].mxu0
    %v1640 = vpop.f32.mrb[0].mxu0
    %v1641 = vadd.f32 %v294, %v1640
    %v1642 = vpop.f32.mrb[0].mxu0
    %1643 = vmatprep.mubr.bf16.mxu0 0
    %1644 = vmatmul.mubr.bf16.gmra.mrb[0].mxu0 %v1051
    %v1645 = vpop.f32.mrb[0].mxu0
    %v1646 = vadd.f32 %v294, %v1645
    %v1647 = vpop.f32.mrb[0].mxu0
    %v1648 = vpop.f32.mrb[0].mxu0
    %v1649 = vadd.f32 %v294, %v1648
    %v1650 = vpop.f32.mrb[0].mxu0
    %1651 = vmatprep.mubr.bf16.mxu0 0
    %1652 = vmatmul.mubr.bf16.gmra.mrb[0].mxu0 %v1054
    %v1653 = vpop.f32.mrb[0].mxu0
    %v1654 = vadd.f32 %v294, %v1653
    %v1655 = vpop.f32.mrb[0].mxu0
    %v1656 = vpop.f32.mrb[0].mxu0
    %v1657 = vadd.f32 %v294, %v1656
    %v1658 = vpop.f32.mrb[0].mxu0
    %1659 = vmatprep.mubr.bf16.mxu0 0
    %1660 = vmatmul.mubr.bf16.gmra.mrb[0].mxu0 %v1057
    %v1661 = vpop.f32.mrb[0].mxu0
    %v1662 = vadd.f32 %v294, %v1661
    %v1663 = vpop.f32.mrb[0].mxu0
    %v1664 = vpop.f32.mrb[0].mxu0
    %v1665 = vadd.f32 %v294, %v1664
    %v1666 = vpop.f32.mrb[0].mxu0
    %1667 = vmatprep.mubr.bf16.mxu0 0
    %1668 = vmatmul.mubr.bf16.gmra.mrb[0].mxu0 %v1060
    %v1669 = vpop.f32.mrb[0].mxu0
    %v1670 = vadd.f32 %v294, %v1669
    %v1671 = vpop.f32.mrb[0].mxu0
    %v1672 = vpop.f32.mrb[0].mxu0
    %v1673 = vadd.f32 %v294, %v1672
    %v1674 = vpop.f32.mrb[0].mxu0
    %1675 = vmatprep.mubr.bf16.mxu0 0
    %1676 = vmatmul.mubr.bf16.gmra.mrb[0].mxu0 %v1063
    %v1677 = vpop.f32.mrb[0].mxu0
    %v1678 = vadd.f32 %v294, %v1677
    %v1679 = vpop.f32.mrb[0].mxu0
    %v1680 = vpop.f32.mrb[0].mxu0
    %v1681 = vadd.f32 %v294, %v1680
    %v1682 = vpop.f32.mrb[0].mxu0
    %1683 = vmatprep.mubr.bf16.mxu0 0
    %1684 = vmatmul.mubr.bf16.gmra.mrb[0].mxu0 %v1066
    %v1685 = vpop.f32.mrb[0].mxu0
    %v1686 = vadd.f32 %v294, %v1685
    %v1687 = vpop.f32.mrb[0].mxu0
    %v1688 = vpop.f32.mrb[0].mxu0
    %v1689 = vadd.f32 %v294, %v1688
    %v1690 = vpop.f32.mrb[0].mxu0
    %1691 = vmatprep.mubr.bf16.mxu0 0
    %1692 = vmatmul.mubr.bf16.gmra.mrb[0].mxu0 %v1069
    %v1693 = vpop.f32.mrb[0].mxu0
    %v1694 = vadd.f32 %v294, %v1693
    %v1695 = vpop.f32.mrb[0].mxu0
    %v1696 = vpop.f32.mrb[0].mxu0
    %v1697 = vadd.f32 %v294, %v1696
    %v1698 = vpop.f32.mrb[0].mxu0
    %1699 = vmatprep.mubr.bf16.mxu0 0
    %1700 = vmatmul.mubr.bf16.gmra.mrb[0].mxu0 %v1072
    %v1701 = vpop.f32.mrb[0].mxu0
    %v1702 = vadd.f32 %v294, %v1701
    %v1703 = vpop.f32.mrb[0].mxu0
    %v1704 = vpop.f32.mrb[0].mxu0
    %v1705 = vadd.f32 %v294, %v1704
    %v1706 = vpop.f32.mrb[0].mxu0
    %1707 = vmatprep.mubr.bf16.mxu0 0
    %1708 = vmatmul.mubr.bf16.gmra.mrb[0].mxu0 %v1075
    %v1709 = vpop.f32.mrb[0].mxu0
    %v1710 = vadd.f32 %v294, %v1709
    %v1711 = vpop.f32.mrb[0].mxu0
    %v1712 = vpop.f32.mrb[0].mxu0
    %v1713 = vadd.f32 %v294, %v1712
    %v1714 = vpop.f32.mrb[0].mxu0
    %1715 = vmatprep.mubr.bf16.mxu0 0
    %1716 = vmatmul.mubr.bf16.gmra.mrb[0].mxu0 %v1078
    %v1717 = vpop.f32.mrb[0].mxu0
    %v1718 = vadd.f32 %v294, %v1717
    %v1719 = vpop.f32.mrb[0].mxu0
    %v1720 = vpop.f32.mrb[0].mxu0
    %v1721 = vadd.f32 %v294, %v1720
    %v1722 = vpop.f32.mrb[0].mxu0
    %1723 = vmatprep.mubr.bf16.mxu0 0
    %1724 = vmatmul.mubr.bf16.gmra.mrb[0].mxu0 %v1081
    %v1725 = vpop.f32.mrb[0].mxu0
    %v1726 = vadd.f32 %v294, %v1725
    %v1727 = vpop.f32.mrb[0].mxu0
    %v1728 = vpop.f32.mrb[0].mxu0
    %v1729 = vadd.f32 %v294, %v1728
    %v1730 = vpop.f32.mrb[0].mxu0
    %1731 = vmatprep.mubr.bf16.mxu0 0
    %1732 = vmatmul.mubr.bf16.gmra.mrb[0].mxu0 %v1084
    %v1733 = vpop.f32.mrb[0].mxu0
    %v1734 = vadd.f32 %v294, %v1733
    %v1735 = vpop.f32.mrb[0].mxu0
    %v1736 = vpop.f32.mrb[0].mxu0
    %v1737 = vadd.f32 %v294, %v1736
    %v1738 = vpop.f32.mrb[0].mxu0
    %1739 = vmatprep.mubr.bf16.mxu0 0
    %1740 = vmatmul.mubr.bf16.gmra.mrb[0].mxu0 %v1087
    %v1741 = vpop.f32.mrb[0].mxu0
    %v1742 = vadd.f32 %v294, %v1741
    %v1743 = vpop.f32.mrb[0].mxu0
    %v1744 = vpop.f32.mrb[0].mxu0
    %v1745 = vadd.f32 %v294, %v1744
    %v1746 = vpop.f32.mrb[0].mxu0
    %1747 = vmatprep.mubr.bf16.mxu0 0
    %1748 = vmatmul.mubr.bf16.gmra.mrb[0].mxu0 %v1090
    %v1749 = vpop.f32.mrb[0].mxu0
    %v1750 = vadd.f32 %v294, %v1749
    %v1751 = vpop.f32.mrb[0].mxu0
    %v1752 = vpop.f32.mrb[0].mxu0
    %v1753 = vadd.f32 %v294, %v1752
    %v1754 = vpop.f32.mrb[0].mxu0
    %1755 = vmatprep.mubr.bf16.mxu0 0
    %1756 = vmatmul.mubr.bf16.gmra.mrb[0].mxu0 %v1093
    %v1757 = vpop.f32.mrb[0].mxu0
    %v1758 = vadd.f32 %v294, %v1757
    %v1759 = vpop.f32.mrb[0].mxu0
    %v1760 = vpop.f32.mrb[0].mxu0
    %v1761 = vadd.f32 %v294, %v1760
    %v1762 = vpop.f32.mrb[0].mxu0
    %1763 = vmatprep.mubr.bf16.mxu0 0
    %1764 = vmatmul.mubr.bf16.gmra.mrb[0].mxu0 %v1096
    %v1765 = vpop.f32.mrb[0].mxu0
    %v1766 = vadd.f32 %v294, %v1765
    %v1767 = vpop.f32.mrb[0].mxu0
    %v1768 = vpop.f32.mrb[0].mxu0
    %v1769 = vadd.f32 %v294, %v1768
    %v1770 = vpop.f32.mrb[0].mxu0
    %1771 = vmatprep.mubr.bf16.mxu0 0
    %1772 = vmatmul.mubr.bf16.gmra.mrb[0].mxu0 %v1099
    %v1773 = vpop.f32.mrb[0].mxu0
    %v1774 = vadd.f32 %v294, %v1773
    %v1775 = vpop.f32.mrb[0].mxu0
    %v1776 = vpop.f32.mrb[0].mxu0
    %v1777 = vadd.f32 %v294, %v1776
    %v1778 = vpop.f32.mrb[0].mxu0
    %1779 = vmatprep.mubr.bf16.mxu0 0
    %1780 = vmatmul.mubr.bf16.gmra.mrb[0].mxu0 %v1102
    %v1781 = vpop.f32.mrb[0].mxu0
    %v1782 = vadd.f32 %v294, %v1781
    %v1783 = vpop.f32.mrb[0].mxu0
    %v1784 = vpop.f32.mrb[0].mxu0
    %v1785 = vadd.f32 %v294, %v1784
    %v1786 = vpop.f32.mrb[0].mxu0
    %1787 = vmatprep.mubr.bf16.mxu0 0
    %1788 = vmatmul.mubr.bf16.gmra.mrb[0].mxu0 %v1105
    %v1789 = vpop.f32.mrb[0].mxu0
    %v1790 = vadd.f32 %v294, %v1789
    %v1791 = vpop.f32.mrb[0].mxu0
    %v1792 = vpop.f32.mrb[0].mxu0
    %v1793 = vadd.f32 %v294, %v1792
    %v1794 = vpop.f32.mrb[0].mxu0
    %1795 = vmatprep.mubr.bf16.mxu0 0
    %1796 = vmatmul.mubr.bf16.gmra.mrb[0].mxu0 %v1108
    %v1797 = vpop.f32.mrb[0].mxu0
    %v1798 = vadd.f32 %v294, %v1797
    %v1799 = vpop.f32.mrb[0].mxu0
    %v1800 = vpop.f32.mrb[0].mxu0
    %v1801 = vadd.f32 %v294, %v1800
    %v1802 = vpop.f32.mrb[0].mxu0
    %1803 = vmatprep.mubr.bf16.mxu0 0
    %1804 = vmatmul.mubr.bf16.gmra.mrb[0].mxu0 %v1111
    %v1805 = vpop.f32.mrb[0].mxu0
    %v1806 = vadd.f32 %v294, %v1805
    %v1807 = vpop.f32.mrb[0].mxu0
    %v1808 = vpop.f32.mrb[0].mxu0
    %v1809 = vadd.f32 %v294, %v1808
    %v1810 = vpop.f32.mrb[0].mxu0
    %1811 = vmatprep.mubr.bf16.mxu0 0
    %1812 = vmatmul.mubr.bf16.gmra.mrb[0].mxu0 %v1114
    %v1813 = vpop.f32.mrb[0].mxu0
    %v1814 = vadd.f32 %v294, %v1813
    %v1815 = vpop.f32.mrb[0].mxu0
    %v1816 = vpop.f32.mrb[0].mxu0
    %v1817 = vadd.f32 %v294, %v1816
    %v1818 = vpop.f32.mrb[0].mxu0
    %1819 = vmatprep.mubr.bf16.mxu0 0
    %1820 = vmatmul.mubr.bf16.gmra.mrb[0].mxu0 %v1117
    %v1821 = vpop.f32.mrb[0].mxu0
    %v1822 = vadd.f32 %v294, %v1821
    %v1823 = vpop.f32.mrb[0].mxu0
    %v1824 = vpop.f32.mrb[0].mxu0
    %v1825 = vadd.f32 %v294, %v1824
    %v1826 = vpop.f32.mrb[0].mxu0
    %1827 = vmatprep.mubr.bf16.mxu0 0
    %1828 = vmatmul.mubr.bf16.gmra.mrb[0].mxu0 %v1120
    %v1829 = vpop.f32.mrb[0].mxu0
    %v1830 = vadd.f32 %v294, %v1829
    %v1831 = vpop.f32.mrb[0].mxu0
    %v1832 = vpop.f32.mrb[0].mxu0
    %v1833 = vadd.f32 %v294, %v1832
    %v1834 = vpop.f32.mrb[0].mxu0
    %1835 = vmatprep.mubr.bf16.mxu0 0
    %1836 = vmatmul.mubr.bf16.gmra.mrb[0].mxu0 %v1123
    %v1837 = vpop.f32.mrb[0].mxu0
    %v1838 = vadd.f32 %v294, %v1837
    %v1839 = vpop.f32.mrb[0].mxu0
    %v1840 = vpop.f32.mrb[0].mxu0
    %v1841 = vadd.f32 %v294, %v1840
    %v1842 = vpop.f32.mrb[0].mxu0
    %1843 = vmatprep.mubr.bf16.mxu0 0
    %1844 = vmatmul.mubr.bf16.gmra.mrb[0].mxu0 %v1126
    %v1845 = vpop.f32.mrb[0].mxu0
    %v1846 = vadd.f32 %v294, %v1845
    %v1847 = vpop.f32.mrb[0].mxu0
    %v1848 = vpop.f32.mrb[0].mxu0
    %v1849 = vadd.f32 %v294, %v1848
    %v1850 = vpop.f32.mrb[0].mxu0
    %1851 = vmatprep.mubr.bf16.mxu0 0
    %1852 = vmatmul.mubr.bf16.gmra.mrb[0].mxu0 %v1129
    %v1853 = vpop.f32.mrb[0].mxu0
    %v1854 = vadd.f32 %v294, %v1853
    %v1855 = vpop.f32.mrb[0].mxu0
    %v1856 = vpop.f32.mrb[0].mxu0
    %v1857 = vadd.f32 %v294, %v1856
    %v1858 = vpop.f32.mrb[0].mxu0
    %1859 = vmatprep.mubr.bf16.mxu0 0
    %1860 = vmatmul.mubr.bf16.gmra.mrb[0].mxu0 %v1132
    %v1861 = vpop.f32.mrb[0].mxu0
    %v1862 = vadd.f32 %v294, %v1861
    %v1863 = vpop.f32.mrb[0].mxu0
    %v1864 = vpop.f32.mrb[0].mxu0
    %v1865 = vadd.f32 %v294, %v1864
    %v1866 = vpop.f32.mrb[0].mxu0
    %1867 = vmatprep.mubr.bf16.mxu0 0
    %1868 = vmatmul.mubr.bf16.gmra.mrb[0].mxu0 %v1135
    %v1869 = vpop.f32.mrb[0].mxu0
    %v1870 = vadd.f32 %v294, %v1869
    %v1871 = vpop.f32.mrb[0].mxu0
    %v1872 = vpop.f32.mrb[0].mxu0
    %v1873 = vadd.f32 %v294, %v1872
    %v1874 = vpop.f32.mrb[0].mxu0
    %1875 = vmatprep.mubr.bf16.mxu0 0
    %1876 = vmatmul.mubr.bf16.gmra.mrb[0].mxu0 %v1138
    %v1877 = vpop.f32.mrb[0].mxu0
    %v1878 = vadd.f32 %v294, %v1877
    %v1879 = vpop.f32.mrb[0].mxu0
    %v1880 = vpop.f32.mrb[0].mxu0
    %v1881 = vadd.f32 %v294, %v1880
    %v1882 = vpop.f32.mrb[0].mxu0
    %1883 = vmatprep.mubr.bf16.mxu0 0
    %1884 = vmatmul.mubr.bf16.gmra.mrb[0].mxu0 %v1141
    %v1885 = vpop.f32.mrb[0].mxu0
    %v1886 = vadd.f32 %v294, %v1885
    %v1887 = vpop.f32.mrb[0].mxu0
    %v1888 = vpop.f32.mrb[0].mxu0
    %v1889 = vadd.f32 %v294, %v1888
    %v1890 = vpop.f32.mrb[0].mxu0
    %1891 = vmatprep.mubr.bf16.mxu0 0
    %1892 = vmatmul.mubr.bf16.gmra.mrb[0].mxu0 %v1144
    %v1893 = vpop.f32.mrb[0].mxu0
    %v1894 = vadd.f32 %v294, %v1893
    %v1895 = vpop.f32.mrb[0].mxu0
    %v1896 = vpop.f32.mrb[0].mxu0
    %v1897 = vadd.f32 %v294, %v1896
    %v1898 = vpop.f32.mrb[0].mxu0
    %1899 = vmatprep.mubr.bf16.mxu0 0
    %1900 = vmatmul.mubr.bf16.gmra.mrb[0].mxu0 %v1147
    %v1901 = vpop.f32.mrb[0].mxu0
    %v1902 = vadd.f32 %v294, %v1901
    %v1903 = vpop.f32.mrb[0].mxu0
    %v1904 = vpop.f32.mrb[0].mxu0
    %v1905 = vadd.f32 %v294, %v1904
    %v1906 = vpop.f32.mrb[0].mxu0
    %1907 = vmatprep.mubr.bf16.mxu0 0
    %1908 = vmatmul.mubr.bf16.gmra.mrb[0].mxu0 %v1150
    %v1909 = vpop.f32.mrb[0].mxu0
    %v1910 = vadd.f32 %v294, %v1909
    %v1911 = vpop.f32.mrb[0].mxu0
    %v1912 = vpop.f32.mrb[0].mxu0
    %v1913 = vadd.f32 %v294, %v1912
    %v1914 = vpop.f32.mrb[0].mxu0
    %1915 = vmatprep.mubr.bf16.mxu0 0
    %1916 = vmatmul.mubr.bf16.gmra.mrb[0].mxu0 %v1153
    %v1917 = vpop.f32.mrb[0].mxu0
    %v1918 = vadd.f32 %v294, %v1917
    %v1919 = vpop.f32.mrb[0].mxu0
    %v1920 = vpop.f32.mrb[0].mxu0
    %v1921 = vadd.f32 %v294, %v1920
    %v1922 = vpop.f32.mrb[0].mxu0
    %1923 = vmatprep.mubr.bf16.mxu0 0
    %1924 = vmatmul.mubr.bf16.gmra.mrb[0].mxu0 %v1156
    %v1925 = vpop.f32.mrb[0].mxu0
    %v1926 = vadd.f32 %v294, %v1925
    %v1927 = vpop.f32.mrb[0].mxu0
    %v1928 = vpop.f32.mrb[0].mxu0
    %v1929 = vadd.f32 %v294, %v1928
    %v1930 = vpop.f32.mrb[0].mxu0
    %1931 = vmatprep.mubr.bf16.mxu0 0
    %1932 = vmatmul.mubr.bf16.gmra.mrb[0].mxu0 %v1159
    %v1933 = vpop.f32.mrb[0].mxu0
    %v1934 = vadd.f32 %v294, %v1933
    %v1935 = vpop.f32.mrb[0].mxu0
    %v1936 = vpop.f32.mrb[0].mxu0
    %v1937 = vadd.f32 %v294, %v1936
    %v1938 = vpop.f32.mrb[0].mxu0
    %1939 = vmatprep.mubr.bf16.mxu0 0
    %1940 = vmatmul.mubr.bf16.gmra.mrb[0].mxu0 %v1162
    %v1941 = vpop.f32.mrb[0].mxu0
    %v1942 = vadd.f32 %v294, %v1941
    %v1943 = vpop.f32.mrb[0].mxu0
    %v1944 = vpop.f32.mrb[0].mxu0
    %v1945 = vadd.f32 %v294, %v1944
    %v1946 = vpop.f32.mrb[0].mxu0
    %1947 = vmatprep.mubr.bf16.mxu0 0
    %1948 = vmatmul.mubr.bf16.gmra.mrb[0].mxu0 %v1165
    %v1949 = vpop.f32.mrb[0].mxu0
    %v1950 = vadd.f32 %v294, %v1949
    %v1951 = vpop.f32.mrb[0].mxu0
    %v1952 = vpop.f32.mrb[0].mxu0
    %v1953 = vadd.f32 %v294, %v1952
    %v1954 = vpop.f32.mrb[0].mxu0
    %1955 = vmatprep.mubr.bf16.mxu0 0
    %1956 = vmatmul.mubr.bf16.gmra.mrb[0].mxu0 %v1168
    %v1957 = vpop.f32.mrb[0].mxu0
    %v1958 = vadd.f32 %v294, %v1957
    %v1959 = vpop.f32.mrb[0].mxu0
    %v1960 = vpop.f32.mrb[0].mxu0
    %v1961 = vadd.f32 %v294, %v1960
    %v1962 = vpop.f32.mrb[0].mxu0
    %1963 = vmatprep.mubr.bf16.mxu0 0
    %1964 = vmatmul.mubr.bf16.gmra.mrb[0].mxu0 %v1171
    %v1965 = vpop.f32.mrb[0].mxu0
    %v1966 = vadd.f32 %v294, %v1965
    %v1967 = vpop.f32.mrb[0].mxu0
    %v1968 = vpop.f32.mrb[0].mxu0
    %v1969 = vadd.f32 %v294, %v1968
    %v1970 = vpop.f32.mrb[0].mxu0
    %1971 = vmatprep.mubr.bf16.mxu0 0
    %1972 = vmatmul.mubr.bf16.gmra.mrb[0].mxu0 %v1174
    %v1973 = vpop.f32.mrb[0].mxu0
    %v1974 = vadd.f32 %v294, %v1973
    %v1975 = vpop.f32.mrb[0].mxu0
    %v1976 = vpop.f32.mrb[0].mxu0
    %v1977 = vadd.f32 %v294, %v1976
    %v1978 = vpop.f32.mrb[0].mxu0
    %1979 = vmatprep.mubr.bf16.mxu0 0
    %1980 = vmatmul.mubr.bf16.gmra.mrb[0].mxu0 %v1177
    %v1981 = vpop.f32.mrb[0].mxu0
    %v1982 = vadd.f32 %v294, %v1981
    %v1983 = vpop.f32.mrb[0].mxu0
    %v1984 = vpop.f32.mrb[0].mxu0
    %v1985 = vadd.f32 %v294, %v1984
    %v1986 = vpop.f32.mrb[0].mxu0
    %1987 = vmatprep.mubr.bf16.mxu0 0
    %1988 = vmatmul.mubr.bf16.gmra.mrb[0].mxu0 %v1180
    %v1989 = vpop.f32.mrb[0].mxu0
    %v1990 = vadd.f32 %v294, %v1989
    %v1991 = vpop.f32.mrb[0].mxu0
    %v1992 = vpop.f32.mrb[0].mxu0
    %v1993 = vadd.f32 %v294, %v1992
    %v1994 = vpop.f32.mrb[0].mxu0
    %1995 = vmatprep.mubr.bf16.mxu0 0
    %1996 = vmatmul.mubr.bf16.gmra.mrb[0].mxu0 %v1183
    %v1997 = vpop.f32.mrb[0].mxu0
    %v1998 = vadd.f32 %v294, %v1997
    %v1999 = vpop.f32.mrb[0].mxu0
    %v2000 = vpop.f32.mrb[0].mxu0
    %v2001 = vadd.f32 %v294, %v2000
    %v2002 = vpop.f32.mrb[0].mxu0
    %2003 = vmatprep.mubr.bf16.mxu0 0
    %2004 = vmatmul.mubr.bf16.gmra.mrb[0].mxu0 %v1186
    %v2005 = vpop.f32.mrb[0].mxu0
    %v2006 = vadd.f32 %v294, %v2005
    %v2007 = vpop.f32.mrb[0].mxu0
    %v2008 = vpop.f32.mrb[0].mxu0
    %v2009 = vadd.f32 %v294, %v2008
    %v2010 = vpop.f32.mrb[0].mxu0
    %2011 = vmatprep.mubr.bf16.mxu0 0
    %2012 = vmatmul.mubr.bf16.gmra.mrb[0].mxu0 %v1189
    %v2013 = vpop.f32.mrb[0].mxu0
    %v2014 = vadd.f32 %v294, %v2013
    %v2015 = vpop.f32.mrb[0].mxu0
    %v2016 = vpop.f32.mrb[0].mxu0
    %v2017 = vadd.f32 %v294, %v2016
    %v2018 = vpop.f32.mrb[0].mxu0
    %2019 = vmatprep.mubr.bf16.mxu0 0
    %2020 = vmatmul.mubr.bf16.gmra.mrb[0].mxu0 %v1192
    %v2021 = vpop.f32.mrb[0].mxu0
    %v2022 = vadd.f32 %v294, %v2021
    %v2023 = vpop.f32.mrb[0].mxu0
    %v2024 = vpop.f32.mrb[0].mxu0
    %v2025 = vadd.f32 %v294, %v2024
    %v2026 = vpop.f32.mrb[0].mxu0
    %2027 = vmatprep.mubr.bf16.mxu0 0
    %2028 = vmatmul.mubr.bf16.gmra.mrb[0].mxu0 %v1195
    %v2029 = vpop.f32.mrb[0].mxu0
    %v2030 = vadd.f32 %v294, %v2029
    %v2031 = vpop.f32.mrb[0].mxu0
    %v2032 = vpop.f32.mrb[0].mxu0
    %v2033 = vadd.f32 %v294, %v2032
    %v2034 = vpop.f32.mrb[0].mxu0
    %2035 = vmatprep.mubr.bf16.mxu0 0
    %2036 = vmatmul.mubr.bf16.gmra.mrb[0].mxu0 %v1198
    %v2037 = vpop.f32.mrb[0].mxu0
    %v2038 = vadd.f32 %v294, %v2037
    %v2039 = vpop.f32.mrb[0].mxu0
    %v2040 = vpop.f32.mrb[0].mxu0
    %v2041 = vadd.f32 %v294, %v2040
    %v2042 = vpop.f32.mrb[0].mxu0
    %2043 = vmatprep.mubr.bf16.mxu0 0
    %2044 = vmatmul.mubr.bf16.gmra.mrb[0].mxu0 %v1201
    %v2045 = vpop.f32.mrb[0].mxu0
    %v2046 = vadd.f32 %v294, %v2045
    %v2047 = vpop.f32.mrb[0].mxu0
    %v2048 = vpop.f32.mrb[0].mxu0
    %v2049 = vadd.f32 %v294, %v2048
    %v2050 = vpop.f32.mrb[0].mxu0
    %2051 = vmatprep.mubr.bf16.mxu0 0
    %2052 = vmatmul.mubr.bf16.gmra.mrb[0].mxu0 %v1204
    %v2053 = vpop.f32.mrb[0].mxu0
    %v2054 = vadd.f32 %v294, %v2053
    %v2055 = vpop.f32.mrb[0].mxu0
    %v2056 = vpop.f32.mrb[0].mxu0
    %v2057 = vadd.f32 %v294, %v2056
    %v2058 = vpop.f32.mrb[0].mxu0
    %2059 = vmatprep.mubr.bf16.mxu0 0
    %2060 = vmatmul.mubr.bf16.gmra.mrb[0].mxu0 %v1207
    %v2061 = vpop.f32.mrb[0].mxu0
    %v2062 = vadd.f32 %v294, %v2061
    %v2063 = vpop.f32.mrb[0].mxu0
    %v2064 = vpop.f32.mrb[0].mxu0
    %v2065 = vadd.f32 %v294, %v2064
    %v2066 = vpop.f32.mrb[0].mxu0
    %2067 = vmatprep.mubr.bf16.mxu0 0
    %2068 = vmatmul.mubr.bf16.gmra.mrb[0].mxu0 %v1210
    %v2069 = vpop.f32.mrb[0].mxu0
    %v2070 = vadd.f32 %v294, %v2069
    %v2071 = vpop.f32.mrb[0].mxu0
    %v2072 = vpop.f32.mrb[0].mxu0
    %v2073 = vadd.f32 %v294, %v2072
    %v2074 = vpop.f32.mrb[0].mxu0
    %2075 = vmatprep.mubr.bf16.mxu0 0
    %2076 = vmatmul.mubr.bf16.gmra.mrb[0].mxu0 %v1213
    %v2077 = vpop.f32.mrb[0].mxu0
    %v2078 = vadd.f32 %v294, %v2077
    %v2079 = vpop.f32.mrb[0].mxu0
    %v2080 = vpop.f32.mrb[0].mxu0
    %v2081 = vadd.f32 %v294, %v2080
    %v2082 = vpop.f32.mrb[0].mxu0
    %2083 = vmatprep.mubr.bf16.mxu0 0
    %2084 = vmatmul.mubr.bf16.gmra.mrb[0].mxu0 %v1216
    %v2085 = vpop.f32.mrb[0].mxu0
    %v2086 = vadd.f32 %v294, %v2085
    %v2087 = vpop.f32.mrb[0].mxu0
    %v2088 = vpop.f32.mrb[0].mxu0
    %v2089 = vadd.f32 %v294, %v2088
    %v2090 = vpop.f32.mrb[0].mxu0
    %2091 = vmatprep.mubr.bf16.mxu0 0
    %2092 = vmatmul.mubr.bf16.gmra.mrb[0].mxu0 %v1219
    %v2093 = vpop.f32.mrb[0].mxu0
    %v2094 = vadd.f32 %v294, %v2093
    %v2095 = vpop.f32.mrb[0].mxu0
    %v2096 = vpop.f32.mrb[0].mxu0
    %v2097 = vadd.f32 %v294, %v2096
    %v2098 = vpop.f32.mrb[0].mxu0
    %2099 = vmatprep.mubr.bf16.mxu0 0
    %2100 = vmatmul.mubr.bf16.gmra.mrb[0].mxu0 %v1222
    %v2101 = vpop.f32.mrb[0].mxu0
    %v2102 = vadd.f32 %v294, %v2101
    %v2103 = vpop.f32.mrb[0].mxu0
    %v2104 = vpop.f32.mrb[0].mxu0
    %v2105 = vadd.f32 %v294, %v2104
    %v2106 = vpop.f32.mrb[0].mxu0
    %2107 = vmatprep.mubr.bf16.mxu0 0
    %2108 = vmatmul.mubr.bf16.gmra.mrb[0].mxu0 %v1225
    %v2109 = vpop.f32.mrb[0].mxu0
    %v2110 = vadd.f32 %v294, %v2109
    %v2111 = vpop.f32.mrb[0].mxu0
    %v2112 = vpop.f32.mrb[0].mxu0
    %v2113 = vadd.f32 %v294, %v2112
    %v2114 = vpop.f32.mrb[0].mxu0
    %2115 = vmatprep.mubr.bf16.mxu0 0
    %2116 = vmatmul.mubr.bf16.gmra.mrb[0].mxu0 %v1228
    %v2117 = vpop.f32.mrb[0].mxu0
    %v2118 = vadd.f32 %v294, %v2117
    %v2119 = vpop.f32.mrb[0].mxu0
    %v2120 = vpop.f32.mrb[0].mxu0
    %v2121 = vadd.f32 %v294, %v2120
    %v2122 = vpop.f32.mrb[0].mxu0
    %2123 = vmatprep.mubr.bf16.mxu0 0
    %2124 = vmatmul.mubr.bf16.gmra.mrb[0].mxu0 %v1231
    %v2125 = vpop.f32.mrb[0].mxu0
    %v2126 = vadd.f32 %v294, %v2125
    %v2127 = vpop.f32.mrb[0].mxu0
    %v2128 = vpop.f32.mrb[0].mxu0
    %v2129 = vadd.f32 %v294, %v2128
    %v2130 = vpop.f32.mrb[0].mxu0
    %2131 = vmatprep.mubr.bf16.mxu0 0
    %2132 = vmatmul.mubr.bf16.gmra.mrb[0].mxu0 %v1234
    %v2133 = vpop.f32.mrb[0].mxu0
    %v2134 = vadd.f32 %v294, %v2133
    %v2135 = vpop.f32.mrb[0].mxu0
    %v2136 = vpop.f32.mrb[0].mxu0
    %v2137 = vadd.f32 %v294, %v2136
    %v2138 = vpop.f32.mrb[0].mxu0
    %2139 = vmatprep.mubr.bf16.mxu0 0
    %2140 = vmatmul.mubr.bf16.gmra.mrb[0].mxu0 %v1237
    %v2141 = vpop.f32.mrb[0].mxu0
    %v2142 = vadd.f32 %v294, %v2141
    %v2143 = vpop.f32.mrb[0].mxu0
    %v2144 = vpop.f32.mrb[0].mxu0
    %v2145 = vadd.f32 %v294, %v2144
    %v2146 = vpop.f32.mrb[0].mxu0
    %2147 = vmatprep.mubr.bf16.mxu0 0
    %2148 = vmatmul.mubr.bf16.gmra.mrb[0].mxu0 %v1240
    %v2149 = vpop.f32.mrb[0].mxu0
    %v2150 = vadd.f32 %v294, %v2149
    %v2151 = vpop.f32.mrb[0].mxu0
    %v2152 = vpop.f32.mrb[0].mxu0
    %v2153 = vadd.f32 %v294, %v2152
    %v2154 = vpop.f32.mrb[0].mxu0
    %2155 = vmatprep.mubr.bf16.mxu0 0
    %2156 = vmatmul.mubr.bf16.gmra.mrb[0].mxu0 %v1243
    %v2157 = vpop.f32.mrb[0].mxu0
    %v2158 = vadd.f32 %v294, %v2157
    %v2159 = vpop.f32.mrb[0].mxu0
    %v2160 = vpop.f32.mrb[0].mxu0
    %v2161 = vadd.f32 %v294, %v2160
    %v2162 = vpop.f32.mrb[0].mxu0
    %2163 = vmatprep.mubr.bf16.mxu0 0
    %2164 = vmatmul.mubr.bf16.gmra.mrb[0].mxu0 %v1246
    %v2165 = vpop.f32.mrb[0].mxu0
    %v2166 = vadd.f32 %v294, %v2165
    %v2167 = vpop.f32.mrb[0].mxu0
    %v2168 = vpop.f32.mrb[0].mxu0
    %v2169 = vadd.f32 %v294, %v2168
    %v2170 = vpop.f32.mrb[0].mxu0
    %2171 = vmatprep.mubr.bf16.mxu0 0
    %2172 = vmatmul.mubr.bf16.gmra.mrb[0].mxu0 %v1249
    %v2173 = vpop.f32.mrb[0].mxu0
    %v2174 = vadd.f32 %v294, %v2173
    %v2175 = vpop.f32.mrb[0].mxu0
    %v2176 = vpop.f32.mrb[0].mxu0
    %v2177 = vadd.f32 %v294, %v2176
    %v2178 = vpop.f32.mrb[0].mxu0
    %2179 = vmatprep.mubr.bf16.mxu0 0
    %2180 = vmatmul.mubr.bf16.gmra.mrb[0].mxu0 %v1252
    %v2181 = vpop.f32.mrb[0].mxu0
    %v2182 = vadd.f32 %v294, %v2181
    %v2183 = vpop.f32.mrb[0].mxu0
    %v2184 = vpop.f32.mrb[0].mxu0
    %v2185 = vadd.f32 %v294, %v2184
    %v2186 = vpop.f32.mrb[0].mxu0
    %2187 = vmatprep.mubr.bf16.mxu0 0
    %2188 = vmatmul.mubr.bf16.gmra.mrb[0].mxu0 %v1255
    %v2189 = vpop.f32.mrb[0].mxu0
    %v2190 = vadd.f32 %v294, %v2189
    %v2191 = vpop.f32.mrb[0].mxu0
    %v2192 = vpop.f32.mrb[0].mxu0
    %v2193 = vadd.f32 %v294, %v2192
    %v2194 = vpop.f32.mrb[0].mxu0
    %2195 = vmatprep.mubr.bf16.mxu0 0
    %2196 = vmatmul.mubr.bf16.gmra.mrb[0].mxu0 %v1258
    %v2197 = vpop.f32.mrb[0].mxu0
    %v2198 = vadd.f32 %v294, %v2197
    %v2199 = vpop.f32.mrb[0].mxu0
    %v2200 = vpop.f32.mrb[0].mxu0
    %v2201 = vadd.f32 %v294, %v2200
    %v2202 = vpop.f32.mrb[0].mxu0
    %2203 = vmatprep.mubr.bf16.mxu0 0
    %2204 = vmatmul.mubr.bf16.gmra.mrb[0].mxu0 %v1261
    %v2205 = vpop.f32.mrb[0].mxu0
    %v2206 = vadd.f32 %v294, %v2205
    %v2207 = vpop.f32.mrb[0].mxu0
    %v2208 = vpop.f32.mrb[0].mxu0
    %v2209 = vadd.f32 %v294, %v2208
    %v2210 = vpop.f32.mrb[0].mxu0
    %2211 = vmatprep.mubr.bf16.mxu0 0
    %2212 = vmatmul.mubr.bf16.gmra.mrb[0].mxu0 %v1264
    %v2213 = vpop.f32.mrb[0].mxu0
    %v2214 = vadd.f32 %v294, %v2213
    %v2215 = vpop.f32.mrb[0].mxu0
    %v2216 = vpop.f32.mrb[0].mxu0
    %v2217 = vadd.f32 %v294, %v2216
    %v2218 = vpop.f32.mrb[0].mxu0
    %2219 = vmatprep.mubr.bf16.mxu0 0
    %2220 = vmatmul.mubr.bf16.gmra.mrb[0].mxu0 %v1267
    %v2221 = vpop.f32.mrb[0].mxu0
    %v2222 = vadd.f32 %v294, %v2221
    %v2223 = vpop.f32.mrb[0].mxu0
    %v2224 = vpop.f32.mrb[0].mxu0
    %v2225 = vadd.f32 %v294, %v2224
    %v2226 = vpop.f32.mrb[0].mxu0
    %2227 = vmatprep.mubr.bf16.mxu0 0
    %2228 = vmatmul.mubr.bf16.gmra.mrb[0].mxu0 %v1270
    %v2229 = vpop.f32.mrb[0].mxu0
    %v2230 = vadd.f32 %v294, %v2229
    %v2231 = vpop.f32.mrb[0].mxu0
    %v2232 = vpop.f32.mrb[0].mxu0
    %v2233 = vadd.f32 %v294, %v2232
    %v2234 = vpop.f32.mrb[0].mxu0
    %2235 = vmatprep.mubr.bf16.mxu0 0
    %2236 = vmatmul.mubr.bf16.gmra.mrb[0].mxu0 %v1273
    %v2237 = vpop.f32.mrb[0].mxu0
    %v2238 = vadd.f32 %v294, %v2237
    %v2239 = vpop.f32.mrb[0].mxu0
    %v2240 = vpop.f32.mrb[0].mxu0
    %v2241 = vadd.f32 %v294, %v2240
    %v2242 = vpop.f32.mrb[0].mxu0
    %2243 = vmatprep.mubr.bf16.mxu0 0
    %2244 = vmatmul.mubr.bf16.gmra.mrb[0].mxu0 %v1276
    %v2245 = vpop.f32.mrb[0].mxu0
    %v2246 = vadd.f32 %v294, %v2245
    %v2247 = vpop.f32.mrb[0].mxu0
    %v2248 = vpop.f32.mrb[0].mxu0
    %v2249 = vadd.f32 %v294, %v2248
    %v2250 = vpop.f32.mrb[0].mxu0
    %2251 = vmatprep.mubr.bf16.mxu0 0
    %2252 = vmatmul.mubr.bf16.gmra.mrb[0].mxu0 %v1279
    %v2253 = vpop.f32.mrb[0].mxu0
    %v2254 = vadd.f32 %v294, %v2253
    %v2255 = vpop.f32.mrb[0].mxu0
    %v2256 = vpop.f32.mrb[0].mxu0
    %v2257 = vadd.f32 %v294, %v2256
    %v2258 = vpop.f32.mrb[0].mxu0
    %2259 = vmatprep.mubr.bf16.mxu0 0
    %2260 = vmatmul.mubr.bf16.gmra.mrb[0].mxu0 %v1282
    %v2261 = vpop.f32.mrb[0].mxu0
    %v2262 = vadd.f32 %v294, %v2261
    %v2263 = vpop.f32.mrb[0].mxu0
    %v2264 = vpop.f32.mrb[0].mxu0
    %v2265 = vadd.f32 %v294, %v2264
    %v2266 = vpop.f32.mrb[0].mxu0
    %2267 = vmatprep.mubr.bf16.mxu0 0
    %2268 = vmatmul.mubr.bf16.gmra.mrb[0].mxu0 %v1285
    %v2269 = vpop.f32.mrb[0].mxu0
    %v2270 = vadd.f32 %v294, %v2269
    %v2271 = vpop.f32.mrb[0].mxu0
    %v2272 = vpop.f32.mrb[0].mxu0
    %v2273 = vadd.f32 %v294, %v2272
    %v2274 = vpop.f32.mrb[0].mxu0
    %2275 = vmatprep.mubr.bf16.mxu0 0
    %2276 = vmatmul.mubr.bf16.gmra.mrb[0].mxu0 %v1288
    %v2277 = vpop.f32.mrb[0].mxu0
    %v2278 = vadd.f32 %v294, %v2277
    %v2279 = vpop.f32.mrb[0].mxu0
    %v2280 = vpop.f32.mrb[0].mxu0
    %v2281 = vadd.f32 %v294, %v2280
    %v2282 = vpop.f32.mrb[0].mxu0
    %2283 = vmatprep.mubr.bf16.mxu0 0
    %2284 = vmatmul.mubr.bf16.gmra.mrb[0].mxu0 %v1291
    %v2285 = vpop.f32.mrb[0].mxu0
    %v2286 = vadd.f32 %v294, %v2285
    %v2287 = vpop.f32.mrb[0].mxu0
    %v2288 = vpop.f32.mrb[0].mxu0
    %v2289 = vadd.f32 %v294, %v2288
    %v2290 = vpop.f32.mrb[0].mxu0
    %2291 = vmatprep.mubr.bf16.mxu0 0
    %2292 = vmatmul.mubr.bf16.gmra.mrb[0].mxu0 %v1294
    %v2293 = vpop.f32.mrb[0].mxu0
    %v2294 = vadd.f32 %v294, %v2293
    %v2295 = vpop.f32.mrb[0].mxu0
    %v2296 = vpop.f32.mrb[0].mxu0
    %v2297 = vadd.f32 %v294, %v2296
    %v2298 = vpop.f32.mrb[0].mxu0
    %2299 = vmatprep.mubr.bf16.mxu0 0
    %2300 = vmatmul.mubr.bf16.gmra.mrb[0].mxu0 %v1297
    %v2301 = vpop.f32.mrb[0].mxu0
    %v2302 = vadd.f32 %v294, %v2301
    %v2303 = vpop.f32.mrb[0].mxu0
    %v2304 = vpop.f32.mrb[0].mxu0
    %v2305 = vadd.f32 %v294, %v2304
    %v2306 = vpop.f32.mrb[0].mxu0
    %2307 = vmatprep.mubr.bf16.mxu0 0
    %2308 = vmatmul.mubr.bf16.gmra.mrb[0].mxu0 %v1300
    %v2309 = vpop.f32.mrb[0].mxu0
    %v2310 = vadd.f32 %v294, %v2309
    %v2311 = vpop.f32.mrb[0].mxu0
    %v2312 = vpop.f32.mrb[0].mxu0
    %v2313 = vadd.f32 %v294, %v2312
    %v2314 = vpop.f32.mrb[0].mxu0
    %2315 = vmatprep.mubr.bf16.mxu0 0
    %2316 = vmatmul.mubr.bf16.gmra.mrb[0].mxu0 %v1303
    %v2317 = vpop.f32.mrb[0].mxu0
    %v2318 = vadd.f32 %v294, %v2317
    %v2319 = vpop.f32.mrb[0].mxu0
    %v2320 = vpop.f32.mrb[0].mxu0
    %v2321 = vadd.f32 %v294, %v2320
    %v2322 = vpop.f32.mrb[0].mxu0
    %2323 = vmatprep.mubr.bf16.mxu0 0
    %2324 = vmatmul.mubr.bf16.gmra.mrb[0].mxu0 %v1306
    %v2325 = vpop.f32.mrb[0].mxu0
    %v2326 = vadd.f32 %v294, %v2325
    %v2327 = vpop.f32.mrb[0].mxu0
    %v2328 = vpop.f32.mrb[0].mxu0
    %v2329 = vadd.f32 %v294, %v2328
    %v2330 = vpop.f32.mrb[0].mxu0
    %2331 = vmatprep.mubr.bf16.mxu0 0
    %2332 = vmatmul.mubr.bf16.gmra.mrb[0].mxu0 %v1309
    %v2333 = vpop.f32.mrb[0].mxu0
    %v2334 = vadd.f32 %v294, %v2333
    %v2335 = vpop.f32.mrb[0].mxu0
    %v2336 = vpop.f32.mrb[0].mxu0
    %v2337 = vadd.f32 %v294, %v2336
    %v2338 = vpop.f32.mrb[0].mxu0
    %2339 = vmatprep.mubr.bf16.mxu0 0
    %2340 = vmatmul.mubr.bf16.gmra.mrb[0].mxu0 %v1312
    %v2341 = vpop.f32.mrb[0].mxu0
    %v2342 = vadd.f32 %v294, %v2341
    %v2343 = vpop.f32.mrb[0].mxu0
    %v2344 = vpop.f32.mrb[0].mxu0
    %v2345 = vadd.f32 %v294, %v2344
    %v2346 = vpop.f32.mrb[0].mxu0
    %2347 = vmatprep.mubr.bf16.mxu0 0
    %2348 = vmatmul.mubr.bf16.gmra.mrb[0].mxu0 %v1315
    %v2349 = vpop.f32.mrb[0].mxu0
    %v2350 = vadd.f32 %v294, %v2349
    %v2351 = vpop.f32.mrb[0].mxu0
    %v2352 = vpop.f32.mrb[0].mxu0
    %v2353 = vadd.f32 %v294, %v2352
    %v2354 = vpop.f32.mrb[0].mxu0
    %2355 = vmatprep.mubr.bf16.mxu0 0
    %2356 = vmatmul.mubr.bf16.gmra.mrb[0].mxu0 %v1318
    %v2357 = vpop.f32.mrb[0].mxu0
    %v2358 = vadd.f32 %v294, %v2357
    %v2359 = vpop.f32.mrb[0].mxu0
    %v2360 = vpop.f32.mrb[0].mxu0
    %v2361 = vadd.f32 %v294, %v2360
    %v2362 = vpop.f32.mrb[0].mxu0
    %2363 = vmatprep.mubr.bf16.mxu0 0
    %2364 = vmatmul.mubr.bf16.gmra.mrb[0].mxu0 %v1321
    %v2365 = vpop.f32.mrb[0].mxu0
    %v2366 = vadd.f32 %v294, %v2365
    %v2367 = vpop.f32.mrb[0].mxu0
    %v2368 = vpop.f32.mrb[0].mxu0
    %v2369 = vadd.f32 %v294, %v2368
    %v2370 = vpop.f32.mrb[0].mxu0
    %2371 = vmatprep.mubr.bf16.mxu0 0
    %2372 = vmatmul.mubr.bf16.gmra.mrb[0].mxu0 %v1324
    %v2373 = vpop.f32.mrb[0].mxu0
    %v2374 = vadd.f32 %v294, %v2373
    %v2375 = vpop.f32.mrb[0].mxu0
    %v2376 = vpop.f32.mrb[0].mxu0
    %v2377 = vadd.f32 %v294, %v2376
    %v2378 = vpop.f32.mrb[0].mxu0
    %2379 = vmatprep.mubr.bf16.mxu0 0
    %2380 = vmatmul.mubr.bf16.gmra.mrb[0].mxu0 %v1327
    %v2381 = vpop.f32.mrb[0].mxu0
    %v2382 = vadd.f32 %v294, %v2381
    %v2383 = vpop.f32.mrb[0].mxu0
    %v2384 = vpop.f32.mrb[0].mxu0
    %v2385 = vadd.f32 %v294, %v2384
    %v2386 = vpop.f32.mrb[0].mxu0
    %2387 = vmatprep.mubr.bf16.mxu0 0
    %2388 = vmatmul.mubr.bf16.gmra.mrb[0].mxu0 %v1330
    %v2389 = vpop.f32.mrb[0].mxu0
    %v2390 = vadd.f32 %v294, %v2389
    %v2391 = vpop.f32.mrb[0].mxu0
    %v2392 = vpop.f32.mrb[0].mxu0
    %v2393 = vadd.f32 %v294, %v2392
    %v2394 = vpop.f32.mrb[0].mxu0
    %2395 = vdwg.mxu0
    %v2396 = vmax.f32 %v1374, 0.0
    %v2397 = vmax.f32 %v1377, 0.0
    %v2398 = vmax.f32 %v1382, 0.0
    %v2399 = vmax.f32 %v1385, 0.0
    %v2400 = vmax.f32 %v1390, 0.0
    %v2401 = vmax.f32 %v1393, 0.0
    %v2402 = vmax.f32 %v1398, 0.0
    %v2403 = vmax.f32 %v1401, 0.0
    %v2404 = vmax.f32 %v1406, 0.0
    %v2405 = vmax.f32 %v1409, 0.0
    %v2406 = vmax.f32 %v1414, 0.0
    %v2407 = vmax.f32 %v1417, 0.0
    %v2408 = vmax.f32 %v1422, 0.0
    %v2409 = vmax.f32 %v1425, 0.0
    %v2410 = vmax.f32 %v1430, 0.0
    %v2411 = vmax.f32 %v1433, 0.0
    %v2412 = vmax.f32 %v1438, 0.0
    %v2413 = vmax.f32 %v1441, 0.0
    %v2414 = vmax.f32 %v1446, 0.0
    %v2415 = vmax.f32 %v1449, 0.0
    %v2416 = vmax.f32 %v1454, 0.0
    %v2417 = vmax.f32 %v1457, 0.0
    %v2418 = vmax.f32 %v1462, 0.0
    %v2419 = vmax.f32 %v1465, 0.0
    %v2420 = vmax.f32 %v1470, 0.0
    %v2421 = vmax.f32 %v1473, 0.0
    %v2422 = vmax.f32 %v1478, 0.0
    %v2423 = vmax.f32 %v1481, 0.0
    %v2424 = vmax.f32 %v1486, 0.0
    %v2425 = vmax.f32 %v1489, 0.0
    %v2426 = vmax.f32 %v1494, 0.0
    %v2427 = vmax.f32 %v1497, 0.0
    %v2428 = vmax.f32 %v1502, 0.0
    %v2429 = vmax.f32 %v1505, 0.0
    %v2430 = vmax.f32 %v1510, 0.0
    %v2431 = vmax.f32 %v1513, 0.0
    %v2432 = vmax.f32 %v1518, 0.0
    %v2433 = vmax.f32 %v1521, 0.0
    %v2434 = vmax.f32 %v1526, 0.0
    %v2435 = vmax.f32 %v1529, 0.0
    %v2436 = vmax.f32 %v1534, 0.0
    %v2437 = vmax.f32 %v1537, 0.0
    %v2438 = vmax.f32 %v1542, 0.0
    %v2439 = vmax.f32 %v1545, 0.0
    %v2440 = vmax.f32 %v1550, 0.0
    %v2441 = vmax.f32 %v1553, 0.0
    %v2442 = vmax.f32 %v1558, 0.0
    %v2443 = vmax.f32 %v1561, 0.0
    %v2444 = vmax.f32 %v1566, 0.0
    %v2445 = vmax.f32 %v1569, 0.0
    %v2446 = vmax.f32 %v1574, 0.0
    %v2447 = vmax.f32 %v1577, 0.0
    %v2448 = vmax.f32 %v1582, 0.0
    %v2449 = vmax.f32 %v1585, 0.0
    %v2450 = vmax.f32 %v1590, 0.0
    %v2451 = vmax.f32 %v1593, 0.0
    %v2452 = vmax.f32 %v1598, 0.0
    %v2453 = vmax.f32 %v1601, 0.0
    %v2454 = vmax.f32 %v1606, 0.0
    %v2455 = vmax.f32 %v1609, 0.0
    %v2456 = vmax.f32 %v1614, 0.0
    %v2457 = vmax.f32 %v1617, 0.0
    %v2458 = vmax.f32 %v1622, 0.0
    %v2459 = vmax.f32 %v1625, 0.0
    %v2460 = vmax.f32 %v1630, 0.0
    %v2461 = vmax.f32 %v1633, 0.0
    %v2462 = vmax.f32 %v1638, 0.0
    %v2463 = vmax.f32 %v1641, 0.0
    %v2464 = vmax.f32 %v1646, 0.0
    %v2465 = vmax.f32 %v1649, 0.0
    %v2466 = vmax.f32 %v1654, 0.0
    %v2467 = vmax.f32 %v1657, 0.0
    %v2468 = vmax.f32 %v1662, 0.0
    %v2469 = vmax.f32 %v1665, 0.0
    %v2470 = vmax.f32 %v1670, 0.0
    %v2471 = vmax.f32 %v1673, 0.0
    %v2472 = vmax.f32 %v1678, 0.0
    %v2473 = vmax.f32 %v1681, 0.0
    %v2474 = vmax.f32 %v1686, 0.0
    %v2475 = vmax.f32 %v1689, 0.0
    %v2476 = vmax.f32 %v1694, 0.0
    %v2477 = vmax.f32 %v1697, 0.0
    %v2478 = vmax.f32 %v1702, 0.0
    %v2479 = vmax.f32 %v1705, 0.0
    %v2480 = vmax.f32 %v1710, 0.0
    %v2481 = vmax.f32 %v1713, 0.0
    %v2482 = vmax.f32 %v1718, 0.0
    %v2483 = vmax.f32 %v1721, 0.0
    %v2484 = vmax.f32 %v1726, 0.0
    %v2485 = vmax.f32 %v1729, 0.0
    %v2486 = vmax.f32 %v1734, 0.0
    %v2487 = vmax.f32 %v1737, 0.0
    %v2488 = vmax.f32 %v1742, 0.0
    %v2489 = vmax.f32 %v1745, 0.0
    %v2490 = vmax.f32 %v1750, 0.0
    %v2491 = vmax.f32 %v1753, 0.0
    %v2492 = vmax.f32 %v1758, 0.0
    %v2493 = vmax.f32 %v1761, 0.0
    %v2494 = vmax.f32 %v1766, 0.0
    %v2495 = vmax.f32 %v1769, 0.0
    %v2496 = vmax.f32 %v1774, 0.0
    %v2497 = vmax.f32 %v1777, 0.0
    %v2498 = vmax.f32 %v1782, 0.0
    %v2499 = vmax.f32 %v1785, 0.0
    %v2500 = vmax.f32 %v1790, 0.0
    %v2501 = vmax.f32 %v1793, 0.0
    %v2502 = vmax.f32 %v1798, 0.0
    %v2503 = vmax.f32 %v1801, 0.0
    %v2504 = vmax.f32 %v1806, 0.0
    %v2505 = vmax.f32 %v1809, 0.0
    %v2506 = vmax.f32 %v1814, 0.0
    %v2507 = vmax.f32 %v1817, 0.0
    %v2508 = vmax.f32 %v1822, 0.0
    %v2509 = vmax.f32 %v1825, 0.0
    %v2510 = vmax.f32 %v1830, 0.0
    %v2511 = vmax.f32 %v1833, 0.0
    %v2512 = vmax.f32 %v1838, 0.0
    %v2513 = vmax.f32 %v1841, 0.0
    %v2514 = vmax.f32 %v1846, 0.0
    %v2515 = vmax.f32 %v1849, 0.0
    %v2516 = vmax.f32 %v1854, 0.0
    %v2517 = vmax.f32 %v1857, 0.0
    %v2518 = vmax.f32 %v1862, 0.0
    %v2519 = vmax.f32 %v1865, 0.0
    %v2520 = vmax.f32 %v1870, 0.0
    %v2521 = vmax.f32 %v1873, 0.0
    %v2522 = vmax.f32 %v1878, 0.0
    %v2523 = vmax.f32 %v1881, 0.0
    %v2524 = vmax.f32 %v1886, 0.0
    %v2525 = vmax.f32 %v1889, 0.0
    %v2526 = vmax.f32 %v1894, 0.0
    %v2527 = vmax.f32 %v1897, 0.0
    %v2528 = vmax.f32 %v1902, 0.0
    %v2529 = vmax.f32 %v1905, 0.0
    %v2530 = vmax.f32 %v1910, 0.0
    %v2531 = vmax.f32 %v1913, 0.0
    %v2532 = vmax.f32 %v1918, 0.0
    %v2533 = vmax.f32 %v1921, 0.0
    %v2534 = vmax.f32 %v1926, 0.0
    %v2535 = vmax.f32 %v1929, 0.0
    %v2536 = vmax.f32 %v1934, 0.0
    %v2537 = vmax.f32 %v1937, 0.0
    %v2538 = vmax.f32 %v1942, 0.0
    %v2539 = vmax.f32 %v1945, 0.0
    %v2540 = vmax.f32 %v1950, 0.0
    %v2541 = vmax.f32 %v1953, 0.0
    %v2542 = vmax.f32 %v1958, 0.0
    %v2543 = vmax.f32 %v1961, 0.0
    %v2544 = vmax.f32 %v1966, 0.0
    %v2545 = vmax.f32 %v1969, 0.0
    %v2546 = vmax.f32 %v1974, 0.0
    %v2547 = vmax.f32 %v1977, 0.0
    %v2548 = vmax.f32 %v1982, 0.0
    %v2549 = vmax.f32 %v1985, 0.0
    %v2550 = vmax.f32 %v1990, 0.0
    %v2551 = vmax.f32 %v1993, 0.0
    %v2552 = vmax.f32 %v1998, 0.0
    %v2553 = vmax.f32 %v2001, 0.0
    %v2554 = vmax.f32 %v2006, 0.0
    %v2555 = vmax.f32 %v2009, 0.0
    %v2556 = vmax.f32 %v2014, 0.0
    %v2557 = vmax.f32 %v2017, 0.0
    %v2558 = vmax.f32 %v2022, 0.0
    %v2559 = vmax.f32 %v2025, 0.0
    %v2560 = vmax.f32 %v2030, 0.0
    %v2561 = vmax.f32 %v2033, 0.0
    %v2562 = vmax.f32 %v2038, 0.0
    %v2563 = vmax.f32 %v2041, 0.0
    %v2564 = vmax.f32 %v2046, 0.0
    %v2565 = vmax.f32 %v2049, 0.0
    %v2566 = vmax.f32 %v2054, 0.0
    %v2567 = vmax.f32 %v2057, 0.0
    %v2568 = vmax.f32 %v2062, 0.0
    %v2569 = vmax.f32 %v2065, 0.0
    %v2570 = vmax.f32 %v2070, 0.0
    %v2571 = vmax.f32 %v2073, 0.0
    %v2572 = vmax.f32 %v2078, 0.0
    %v2573 = vmax.f32 %v2081, 0.0
    %v2574 = vmax.f32 %v2086, 0.0
    %v2575 = vmax.f32 %v2089, 0.0
    %v2576 = vmax.f32 %v2094, 0.0
    %v2577 = vmax.f32 %v2097, 0.0
    %v2578 = vmax.f32 %v2102, 0.0
    %v2579 = vmax.f32 %v2105, 0.0
    %v2580 = vmax.f32 %v2110, 0.0
    %v2581 = vmax.f32 %v2113, 0.0
    %v2582 = vmax.f32 %v2118, 0.0
    %v2583 = vmax.f32 %v2121, 0.0
    %v2584 = vmax.f32 %v2126, 0.0
    %v2585 = vmax.f32 %v2129, 0.0
    %v2586 = vmax.f32 %v2134, 0.0
    %v2587 = vmax.f32 %v2137, 0.0
    %v2588 = vmax.f32 %v2142, 0.0
    %v2589 = vmax.f32 %v2145, 0.0
    %v2590 = vmax.f32 %v2150, 0.0
    %v2591 = vmax.f32 %v2153, 0.0
    %v2592 = vmax.f32 %v2158, 0.0
    %v2593 = vmax.f32 %v2161, 0.0
    %v2594 = vmax.f32 %v2166, 0.0
    %v2595 = vmax.f32 %v2169, 0.0
    %v2596 = vmax.f32 %v2174, 0.0
    %v2597 = vmax.f32 %v2177, 0.0
    %v2598 = vmax.f32 %v2182, 0.0
    %v2599 = vmax.f32 %v2185, 0.0
    %v2600 = vmax.f32 %v2190, 0.0
    %v2601 = vmax.f32 %v2193, 0.0
    %v2602 = vmax.f32 %v2198, 0.0
    %v2603 = vmax.f32 %v2201, 0.0
    %v2604 = vmax.f32 %v2206, 0.0
    %v2605 = vmax.f32 %v2209, 0.0
    %v2606 = vmax.f32 %v2214, 0.0
    %v2607 = vmax.f32 %v2217, 0.0
    %v2608 = vmax.f32 %v2222, 0.0
    %v2609 = vmax.f32 %v2225, 0.0
    %v2610 = vmax.f32 %v2230, 0.0
    %v2611 = vmax.f32 %v2233, 0.0
    %v2612 = vmax.f32 %v2238, 0.0
    %v2613 = vmax.f32 %v2241, 0.0
    %v2614 = vmax.f32 %v2246, 0.0
    %v2615 = vmax.f32 %v2249, 0.0
    %v2616 = vmax.f32 %v2254, 0.0
    %v2617 = vmax.f32 %v2257, 0.0
    %v2618 = vmax.f32 %v2262, 0.0
    %v2619 = vmax.f32 %v2265, 0.0
    %v2620 = vmax.f32 %v2270, 0.0
    %v2621 = vmax.f32 %v2273, 0.0
    %v2622 = vmax.f32 %v2278, 0.0
    %v2623 = vmax.f32 %v2281, 0.0
    %v2624 = vmax.f32 %v2286, 0.0
    %v2625 = vmax.f32 %v2289, 0.0
    %v2626 = vmax.f32 %v2294, 0.0
    %v2627 = vmax.f32 %v2297, 0.0
    %v2628 = vmax.f32 %v2302, 0.0
    %v2629 = vmax.f32 %v2305, 0.0
    %v2630 = vmax.f32 %v2310, 0.0
    %v2631 = vmax.f32 %v2313, 0.0
    %v2632 = vmax.f32 %v2318, 0.0
    %v2633 = vmax.f32 %v2321, 0.0
    %v2634 = vmax.f32 %v2326, 0.0
    %v2635 = vmax.f32 %v2329, 0.0
    %v2636 = vmax.f32 %v2334, 0.0
    %v2637 = vmax.f32 %v2337, 0.0
    %v2638 = vmax.f32 %v2342, 0.0
    %v2639 = vmax.f32 %v2345, 0.0
    %v2640 = vmax.f32 %v2350, 0.0
    %v2641 = vmax.f32 %v2353, 0.0
    %v2642 = vmax.f32 %v2358, 0.0
    %v2643 = vmax.f32 %v2361, 0.0
    %v2644 = vmax.f32 %v2366, 0.0
    %v2645 = vmax.f32 %v2369, 0.0
    %v2646 = vmax.f32 %v2374, 0.0
    %v2647 = vmax.f32 %v2377, 0.0
    %v2648 = vmax.f32 %v2382, 0.0
    %v2649 = vmax.f32 %v2385, 0.0
    %v2650 = vmax.f32 %v2390, 0.0
    %v2651 = vmax.f32 %v2393, 0.0
    %vm2652 = vcmask 130048
    %v2653 = vsel %vm2652, %v2396, 0.0
    %v2654 = vsel %vm2652, %v2397, 0.0
    %v2655 = vadd.f32 %v2653, %v2654
    %v2656 = vsel %vm2652, %v2398, 0.0
    %v2657 = vadd.f32 %v2655, %v2656
    %v2658 = vsel %vm2652, %v2399, 0.0
    %v2659 = vadd.f32 %v2657, %v2658
    %v2660 = vsel %vm2652, %v2400, 0.0
    %v2661 = vadd.f32 %v2659, %v2660
    %v2662 = vsel %vm2652, %v2401, 0.0
    %v2663 = vadd.f32 %v2661, %v2662
    %v2664 = vsel %vm2652, %v2402, 0.0
    %v2665 = vadd.f32 %v2663, %v2664
    %v2666 = vsel %vm2652, %v2403, 0.0
    %v2667 = vadd.f32 %v2665, %v2666
    %v2668 = vsel %vm2652, %v2404, 0.0
    %v2669 = vadd.f32 %v2667, %v2668
    %v2670 = vsel %vm2652, %v2405, 0.0
    %v2671 = vadd.f32 %v2669, %v2670
    %v2672 = vsel %vm2652, %v2406, 0.0
    %v2673 = vadd.f32 %v2671, %v2672
    %v2674 = vsel %vm2652, %v2407, 0.0
    %v2675 = vadd.f32 %v2673, %v2674
    %v2676 = vsel %vm2652, %v2408, 0.0
    %v2677 = vadd.f32 %v2675, %v2676
    %v2678 = vsel %vm2652, %v2409, 0.0
    %v2679 = vadd.f32 %v2677, %v2678
    %v2680 = vsel %vm2652, %v2410, 0.0
    %v2681 = vadd.f32 %v2679, %v2680
    %v2682 = vsel %vm2652, %v2411, 0.0
    %v2683 = vadd.f32 %v2681, %v2682
    %v2684 = vsel %vm2652, %v2412, 0.0
    %v2685 = vadd.f32 %v2683, %v2684
    %v2686 = vsel %vm2652, %v2413, 0.0
    %v2687 = vadd.f32 %v2685, %v2686
    %v2688 = vsel %vm2652, %v2414, 0.0
    %v2689 = vadd.f32 %v2687, %v2688
    %v2690 = vsel %vm2652, %v2415, 0.0
    %v2691 = vadd.f32 %v2689, %v2690
    %v2692 = vsel %vm2652, %v2416, 0.0
    %v2693 = vadd.f32 %v2691, %v2692
    %v2694 = vsel %vm2652, %v2417, 0.0
    %v2695 = vadd.f32 %v2693, %v2694
    %v2696 = vsel %vm2652, %v2418, 0.0
    %v2697 = vadd.f32 %v2695, %v2696
    %v2698 = vsel %vm2652, %v2419, 0.0
    %v2699 = vadd.f32 %v2697, %v2698
    %v2700 = vsel %vm2652, %v2420, 0.0
    %v2701 = vadd.f32 %v2699, %v2700
    %v2702 = vsel %vm2652, %v2421, 0.0
    %v2703 = vadd.f32 %v2701, %v2702
    %v2704 = vsel %vm2652, %v2422, 0.0
    %v2705 = vadd.f32 %v2703, %v2704
    %v2706 = vsel %vm2652, %v2423, 0.0
    %v2707 = vadd.f32 %v2705, %v2706
    %v2708 = vsel %vm2652, %v2424, 0.0
    %v2709 = vadd.f32 %v2707, %v2708
    %v2710 = vsel %vm2652, %v2425, 0.0
    %v2711 = vadd.f32 %v2709, %v2710
    %v2712 = vsel %vm2652, %v2426, 0.0
    %v2713 = vadd.f32 %v2711, %v2712
    %v2714 = vsel %vm2652, %v2427, 0.0
    %v2715 = vadd.f32 %v2713, %v2714
    %v2716 = vsel %vm2652, %v2428, 0.0
    %v2717 = vadd.f32 %v2715, %v2716
    %v2718 = vsel %vm2652, %v2429, 0.0
    %v2719 = vadd.f32 %v2717, %v2718
    %v2720 = vsel %vm2652, %v2430, 0.0
    %v2721 = vadd.f32 %v2719, %v2720
    %v2722 = vsel %vm2652, %v2431, 0.0
    %v2723 = vadd.f32 %v2721, %v2722
    %v2724 = vsel %vm2652, %v2432, 0.0
    %v2725 = vadd.f32 %v2723, %v2724
    %v2726 = vsel %vm2652, %v2433, 0.0
    %v2727 = vadd.f32 %v2725, %v2726
    %v2728 = vsel %vm2652, %v2434, 0.0
    %v2729 = vadd.f32 %v2727, %v2728
    %v2730 = vsel %vm2652, %v2435, 0.0
    %v2731 = vadd.f32 %v2729, %v2730
    %v2732 = vsel %vm2652, %v2436, 0.0
    %v2733 = vadd.f32 %v2731, %v2732
    %v2734 = vsel %vm2652, %v2437, 0.0
    %v2735 = vadd.f32 %v2733, %v2734
    %v2736 = vsel %vm2652, %v2438, 0.0
    %v2737 = vadd.f32 %v2735, %v2736
    %v2738 = vsel %vm2652, %v2439, 0.0
    %v2739 = vadd.f32 %v2737, %v2738
    %v2740 = vsel %vm2652, %v2440, 0.0
    %v2741 = vadd.f32 %v2739, %v2740
    %v2742 = vsel %vm2652, %v2441, 0.0
    %v2743 = vadd.f32 %v2741, %v2742
    %v2744 = vsel %vm2652, %v2442, 0.0
    %v2745 = vadd.f32 %v2743, %v2744
    %v2746 = vsel %vm2652, %v2443, 0.0
    %v2747 = vadd.f32 %v2745, %v2746
    %v2748 = vsel %vm2652, %v2444, 0.0
    %v2749 = vadd.f32 %v2747, %v2748
    %v2750 = vsel %vm2652, %v2445, 0.0
    %v2751 = vadd.f32 %v2749, %v2750
    %v2752 = vsel %vm2652, %v2446, 0.0
    %v2753 = vadd.f32 %v2751, %v2752
    %v2754 = vsel %vm2652, %v2447, 0.0
    %v2755 = vadd.f32 %v2753, %v2754
    %v2756 = vsel %vm2652, %v2448, 0.0
    %v2757 = vadd.f32 %v2755, %v2756
    %v2758 = vsel %vm2652, %v2449, 0.0
    %v2759 = vadd.f32 %v2757, %v2758
    %v2760 = vsel %vm2652, %v2450, 0.0
    %v2761 = vadd.f32 %v2759, %v2760
    %v2762 = vsel %vm2652, %v2451, 0.0
    %v2763 = vadd.f32 %v2761, %v2762
    %v2764 = vsel %vm2652, %v2452, 0.0
    %v2765 = vadd.f32 %v2763, %v2764
    %v2766 = vsel %vm2652, %v2453, 0.0
    %v2767 = vadd.f32 %v2765, %v2766
    %v2768 = vsel %vm2652, %v2454, 0.0
    %v2769 = vadd.f32 %v2767, %v2768
    %v2770 = vsel %vm2652, %v2455, 0.0
    %v2771 = vadd.f32 %v2769, %v2770
    %v2772 = vsel %vm2652, %v2456, 0.0
    %v2773 = vadd.f32 %v2771, %v2772
    %v2774 = vsel %vm2652, %v2457, 0.0
    %v2775 = vadd.f32 %v2773, %v2774
    %v2776 = vsel %vm2652, %v2458, 0.0
    %v2777 = vadd.f32 %v2775, %v2776
    %v2778 = vsel %vm2652, %v2459, 0.0
    %v2779 = vadd.f32 %v2777, %v2778
    %v2780 = vsel %vm2652, %v2460, 0.0
    %v2781 = vadd.f32 %v2779, %v2780
    %v2782 = vsel %vm2652, %v2461, 0.0
    %v2783 = vadd.f32 %v2781, %v2782
    %v2784 = vsel %vm2652, %v2462, 0.0
    %v2785 = vadd.f32 %v2783, %v2784
    %v2786 = vsel %vm2652, %v2463, 0.0
    %v2787 = vadd.f32 %v2785, %v2786
    %v2788 = vsel %vm2652, %v2464, 0.0
    %v2789 = vadd.f32 %v2787, %v2788
    %v2790 = vsel %vm2652, %v2465, 0.0
    %v2791 = vadd.f32 %v2789, %v2790
    %v2792 = vsel %vm2652, %v2466, 0.0
    %v2793 = vadd.f32 %v2791, %v2792
    %v2794 = vsel %vm2652, %v2467, 0.0
    %v2795 = vadd.f32 %v2793, %v2794
    %v2796 = vsel %vm2652, %v2468, 0.0
    %v2797 = vadd.f32 %v2795, %v2796
    %v2798 = vsel %vm2652, %v2469, 0.0
    %v2799 = vadd.f32 %v2797, %v2798
    %v2800 = vsel %vm2652, %v2470, 0.0
    %v2801 = vadd.f32 %v2799, %v2800
    %v2802 = vsel %vm2652, %v2471, 0.0
    %v2803 = vadd.f32 %v2801, %v2802
    %v2804 = vsel %vm2652, %v2472, 0.0
    %v2805 = vadd.f32 %v2803, %v2804
    %v2806 = vsel %vm2652, %v2473, 0.0
    %v2807 = vadd.f32 %v2805, %v2806
    %v2808 = vsel %vm2652, %v2474, 0.0
    %v2809 = vadd.f32 %v2807, %v2808
    %v2810 = vsel %vm2652, %v2475, 0.0
    %v2811 = vadd.f32 %v2809, %v2810
    %v2812 = vsel %vm2652, %v2476, 0.0
    %v2813 = vadd.f32 %v2811, %v2812
    %v2814 = vsel %vm2652, %v2477, 0.0
    %v2815 = vadd.f32 %v2813, %v2814
    %v2816 = vsel %vm2652, %v2478, 0.0
    %v2817 = vadd.f32 %v2815, %v2816
    %v2818 = vsel %vm2652, %v2479, 0.0
    %v2819 = vadd.f32 %v2817, %v2818
    %v2820 = vsel %vm2652, %v2480, 0.0
    %v2821 = vadd.f32 %v2819, %v2820
    %v2822 = vsel %vm2652, %v2481, 0.0
    %v2823 = vadd.f32 %v2821, %v2822
    %v2824 = vsel %vm2652, %v2482, 0.0
    %v2825 = vadd.f32 %v2823, %v2824
    %v2826 = vsel %vm2652, %v2483, 0.0
    %v2827 = vadd.f32 %v2825, %v2826
    %v2828 = vsel %vm2652, %v2484, 0.0
    %v2829 = vadd.f32 %v2827, %v2828
    %v2830 = vsel %vm2652, %v2485, 0.0
    %v2831 = vadd.f32 %v2829, %v2830
    %v2832 = vsel %vm2652, %v2486, 0.0
    %v2833 = vadd.f32 %v2831, %v2832
    %v2834 = vsel %vm2652, %v2487, 0.0
    %v2835 = vadd.f32 %v2833, %v2834
    %v2836 = vsel %vm2652, %v2488, 0.0
    %v2837 = vadd.f32 %v2835, %v2836
    %v2838 = vsel %vm2652, %v2489, 0.0
    %v2839 = vadd.f32 %v2837, %v2838
    %v2840 = vsel %vm2652, %v2490, 0.0
    %v2841 = vadd.f32 %v2839, %v2840
    %v2842 = vsel %vm2652, %v2491, 0.0
    %v2843 = vadd.f32 %v2841, %v2842
    %v2844 = vsel %vm2652, %v2492, 0.0
    %v2845 = vadd.f32 %v2843, %v2844
    %v2846 = vsel %vm2652, %v2493, 0.0
    %v2847 = vadd.f32 %v2845, %v2846
    %v2848 = vsel %vm2652, %v2494, 0.0
    %v2849 = vadd.f32 %v2847, %v2848
    %v2850 = vsel %vm2652, %v2495, 0.0
    %v2851 = vadd.f32 %v2849, %v2850
    %v2852 = vsel %vm2652, %v2496, 0.0
    %v2853 = vadd.f32 %v2851, %v2852
    %v2854 = vsel %vm2652, %v2497, 0.0
    %v2855 = vadd.f32 %v2853, %v2854
    %v2856 = vsel %vm2652, %v2498, 0.0
    %v2857 = vadd.f32 %v2855, %v2856
    %v2858 = vsel %vm2652, %v2499, 0.0
    %v2859 = vadd.f32 %v2857, %v2858
    %v2860 = vsel %vm2652, %v2500, 0.0
    %v2861 = vadd.f32 %v2859, %v2860
    %v2862 = vsel %vm2652, %v2501, 0.0
    %v2863 = vadd.f32 %v2861, %v2862
    %v2864 = vsel %vm2652, %v2502, 0.0
    %v2865 = vadd.f32 %v2863, %v2864
    %v2866 = vsel %vm2652, %v2503, 0.0
    %v2867 = vadd.f32 %v2865, %v2866
    %v2868 = vsel %vm2652, %v2504, 0.0
    %v2869 = vadd.f32 %v2867, %v2868
    %v2870 = vsel %vm2652, %v2505, 0.0
    %v2871 = vadd.f32 %v2869, %v2870
    %v2872 = vsel %vm2652, %v2506, 0.0
    %v2873 = vadd.f32 %v2871, %v2872
    %v2874 = vsel %vm2652, %v2507, 0.0
    %v2875 = vadd.f32 %v2873, %v2874
    %v2876 = vsel %vm2652, %v2508, 0.0
    %v2877 = vadd.f32 %v2875, %v2876
    %v2878 = vsel %vm2652, %v2509, 0.0
    %v2879 = vadd.f32 %v2877, %v2878
    %v2880 = vsel %vm2652, %v2510, 0.0
    %v2881 = vadd.f32 %v2879, %v2880
    %v2882 = vsel %vm2652, %v2511, 0.0
    %v2883 = vadd.f32 %v2881, %v2882
    %v2884 = vsel %vm2652, %v2512, 0.0
    %v2885 = vadd.f32 %v2883, %v2884
    %v2886 = vsel %vm2652, %v2513, 0.0
    %v2887 = vadd.f32 %v2885, %v2886
    %v2888 = vsel %vm2652, %v2514, 0.0
    %v2889 = vadd.f32 %v2887, %v2888
    %v2890 = vsel %vm2652, %v2515, 0.0
    %v2891 = vadd.f32 %v2889, %v2890
    %v2892 = vsel %vm2652, %v2516, 0.0
    %v2893 = vadd.f32 %v2891, %v2892
    %v2894 = vsel %vm2652, %v2517, 0.0
    %v2895 = vadd.f32 %v2893, %v2894
    %v2896 = vsel %vm2652, %v2518, 0.0
    %v2897 = vadd.f32 %v2895, %v2896
    %v2898 = vsel %vm2652, %v2519, 0.0
    %v2899 = vadd.f32 %v2897, %v2898
    %v2900 = vsel %vm2652, %v2520, 0.0
    %v2901 = vadd.f32 %v2899, %v2900
    %v2902 = vsel %vm2652, %v2521, 0.0
    %v2903 = vadd.f32 %v2901, %v2902
    %v2904 = vsel %vm2652, %v2522, 0.0
    %v2905 = vadd.f32 %v2903, %v2904
    %v2906 = vsel %vm2652, %v2523, 0.0
    %v2907 = vadd.f32 %v2905, %v2906
    %v2908 = vrot.slane %v2907, 4
    %v2909 = vadd.f32 %v2907, %v2908
    %v2910 = vrot.slane %v2909, 2
    %v2911 = vadd.f32 %v2909, %v2910
    %v2912 = vrot.slane %v2911, 1
    %v2913 = vadd.f32 %v2911, %v2912
    %v2914 = vsel %vm2652, %v2524, 0.0
    %v2915 = vsel %vm2652, %v2525, 0.0
    %v2916 = vadd.f32 %v2914, %v2915
    %v2917 = vsel %vm2652, %v2526, 0.0
    %v2918 = vadd.f32 %v2916, %v2917
    %v2919 = vsel %vm2652, %v2527, 0.0
    %v2920 = vadd.f32 %v2918, %v2919
    %v2921 = vsel %vm2652, %v2528, 0.0
    %v2922 = vadd.f32 %v2920, %v2921
    %v2923 = vsel %vm2652, %v2529, 0.0
    %v2924 = vadd.f32 %v2922, %v2923
    %v2925 = vsel %vm2652, %v2530, 0.0
    %v2926 = vadd.f32 %v2924, %v2925
    %v2927 = vsel %vm2652, %v2531, 0.0
    %v2928 = vadd.f32 %v2926, %v2927
    %v2929 = vsel %vm2652, %v2532, 0.0
    %v2930 = vadd.f32 %v2928, %v2929
    %v2931 = vsel %vm2652, %v2533, 0.0
    %v2932 = vadd.f32 %v2930, %v2931
    %v2933 = vsel %vm2652, %v2534, 0.0
    %v2934 = vadd.f32 %v2932, %v2933
    %v2935 = vsel %vm2652, %v2535, 0.0
    %v2936 = vadd.f32 %v2934, %v2935
    %v2937 = vsel %vm2652, %v2536, 0.0
    %v2938 = vadd.f32 %v2936, %v2937
    %v2939 = vsel %vm2652, %v2537, 0.0
    %v2940 = vadd.f32 %v2938, %v2939
    %v2941 = vsel %vm2652, %v2538, 0.0
    %v2942 = vadd.f32 %v2940, %v2941
    %v2943 = vsel %vm2652, %v2539, 0.0
    %v2944 = vadd.f32 %v2942, %v2943
    %v2945 = vsel %vm2652, %v2540, 0.0
    %v2946 = vadd.f32 %v2944, %v2945
    %v2947 = vsel %vm2652, %v2541, 0.0
    %v2948 = vadd.f32 %v2946, %v2947
    %v2949 = vsel %vm2652, %v2542, 0.0
    %v2950 = vadd.f32 %v2948, %v2949
    %v2951 = vsel %vm2652, %v2543, 0.0
    %v2952 = vadd.f32 %v2950, %v2951
    %v2953 = vsel %vm2652, %v2544, 0.0
    %v2954 = vadd.f32 %v2952, %v2953
    %v2955 = vsel %vm2652, %v2545, 0.0
    %v2956 = vadd.f32 %v2954, %v2955
    %v2957 = vsel %vm2652, %v2546, 0.0
    %v2958 = vadd.f32 %v2956, %v2957
    %v2959 = vsel %vm2652, %v2547, 0.0
    %v2960 = vadd.f32 %v2958, %v2959
    %v2961 = vsel %vm2652, %v2548, 0.0
    %v2962 = vadd.f32 %v2960, %v2961
    %v2963 = vsel %vm2652, %v2549, 0.0
    %v2964 = vadd.f32 %v2962, %v2963
    %v2965 = vsel %vm2652, %v2550, 0.0
    %v2966 = vadd.f32 %v2964, %v2965
    %v2967 = vsel %vm2652, %v2551, 0.0
    %v2968 = vadd.f32 %v2966, %v2967
    %v2969 = vsel %vm2652, %v2552, 0.0
    %v2970 = vadd.f32 %v2968, %v2969
    %v2971 = vsel %vm2652, %v2553, 0.0
    %v2972 = vadd.f32 %v2970, %v2971
    %v2973 = vsel %vm2652, %v2554, 0.0
    %v2974 = vadd.f32 %v2972, %v2973
    %v2975 = vsel %vm2652, %v2555, 0.0
    %v2976 = vadd.f32 %v2974, %v2975
    %v2977 = vsel %vm2652, %v2556, 0.0
    %v2978 = vadd.f32 %v2976, %v2977
    %v2979 = vsel %vm2652, %v2557, 0.0
    %v2980 = vadd.f32 %v2978, %v2979
    %v2981 = vsel %vm2652, %v2558, 0.0
    %v2982 = vadd.f32 %v2980, %v2981
    %v2983 = vsel %vm2652, %v2559, 0.0
    %v2984 = vadd.f32 %v2982, %v2983
    %v2985 = vsel %vm2652, %v2560, 0.0
    %v2986 = vadd.f32 %v2984, %v2985
    %v2987 = vsel %vm2652, %v2561, 0.0
    %v2988 = vadd.f32 %v2986, %v2987
    %v2989 = vsel %vm2652, %v2562, 0.0
    %v2990 = vadd.f32 %v2988, %v2989
    %v2991 = vsel %vm2652, %v2563, 0.0
    %v2992 = vadd.f32 %v2990, %v2991
    %v2993 = vsel %vm2652, %v2564, 0.0
    %v2994 = vadd.f32 %v2992, %v2993
    %v2995 = vsel %vm2652, %v2565, 0.0
    %v2996 = vadd.f32 %v2994, %v2995
    %v2997 = vsel %vm2652, %v2566, 0.0
    %v2998 = vadd.f32 %v2996, %v2997
    %v2999 = vsel %vm2652, %v2567, 0.0
    %v3000 = vadd.f32 %v2998, %v2999
    %v3001 = vsel %vm2652, %v2568, 0.0
    %v3002 = vadd.f32 %v3000, %v3001
    %v3003 = vsel %vm2652, %v2569, 0.0
    %v3004 = vadd.f32 %v3002, %v3003
    %v3005 = vsel %vm2652, %v2570, 0.0
    %v3006 = vadd.f32 %v3004, %v3005
    %v3007 = vsel %vm2652, %v2571, 0.0
    %v3008 = vadd.f32 %v3006, %v3007
    %v3009 = vsel %vm2652, %v2572, 0.0
    %v3010 = vadd.f32 %v3008, %v3009
    %v3011 = vsel %vm2652, %v2573, 0.0
    %v3012 = vadd.f32 %v3010, %v3011
    %v3013 = vsel %vm2652, %v2574, 0.0
    %v3014 = vadd.f32 %v3012, %v3013
    %v3015 = vsel %vm2652, %v2575, 0.0
    %v3016 = vadd.f32 %v3014, %v3015
    %v3017 = vsel %vm2652, %v2576, 0.0
    %v3018 = vadd.f32 %v3016, %v3017
    %v3019 = vsel %vm2652, %v2577, 0.0
    %v3020 = vadd.f32 %v3018, %v3019
    %v3021 = vsel %vm2652, %v2578, 0.0
    %v3022 = vadd.f32 %v3020, %v3021
    %v3023 = vsel %vm2652, %v2579, 0.0
    %v3024 = vadd.f32 %v3022, %v3023
    %v3025 = vsel %vm2652, %v2580, 0.0
    %v3026 = vadd.f32 %v3024, %v3025
    %v3027 = vsel %vm2652, %v2581, 0.0
    %v3028 = vadd.f32 %v3026, %v3027
    %v3029 = vsel %vm2652, %v2582, 0.0
    %v3030 = vadd.f32 %v3028, %v3029
    %v3031 = vsel %vm2652, %v2583, 0.0
    %v3032 = vadd.f32 %v3030, %v3031
    %v3033 = vsel %vm2652, %v2584, 0.0
    %v3034 = vadd.f32 %v3032, %v3033
    %v3035 = vsel %vm2652, %v2585, 0.0
    %v3036 = vadd.f32 %v3034, %v3035
    %v3037 = vsel %vm2652, %v2586, 0.0
    %v3038 = vadd.f32 %v3036, %v3037
    %v3039 = vsel %vm2652, %v2587, 0.0
    %v3040 = vadd.f32 %v3038, %v3039
    %v3041 = vsel %vm2652, %v2588, 0.0
    %v3042 = vadd.f32 %v3040, %v3041
    %v3043 = vsel %vm2652, %v2589, 0.0
    %v3044 = vadd.f32 %v3042, %v3043
    %v3045 = vsel %vm2652, %v2590, 0.0
    %v3046 = vadd.f32 %v3044, %v3045
    %v3047 = vsel %vm2652, %v2591, 0.0
    %v3048 = vadd.f32 %v3046, %v3047
    %v3049 = vsel %vm2652, %v2592, 0.0
    %v3050 = vadd.f32 %v3048, %v3049
    %v3051 = vsel %vm2652, %v2593, 0.0
    %v3052 = vadd.f32 %v3050, %v3051
    %v3053 = vsel %vm2652, %v2594, 0.0
    %v3054 = vadd.f32 %v3052, %v3053
    %v3055 = vsel %vm2652, %v2595, 0.0
    %v3056 = vadd.f32 %v3054, %v3055
    %v3057 = vsel %vm2652, %v2596, 0.0
    %v3058 = vadd.f32 %v3056, %v3057
    %v3059 = vsel %vm2652, %v2597, 0.0
    %v3060 = vadd.f32 %v3058, %v3059
    %v3061 = vsel %vm2652, %v2598, 0.0
    %v3062 = vadd.f32 %v3060, %v3061
    %v3063 = vsel %vm2652, %v2599, 0.0
    %v3064 = vadd.f32 %v3062, %v3063
    %v3065 = vsel %vm2652, %v2600, 0.0
    %v3066 = vadd.f32 %v3064, %v3065
    %v3067 = vsel %vm2652, %v2601, 0.0
    %v3068 = vadd.f32 %v3066, %v3067
    %v3069 = vsel %vm2652, %v2602, 0.0
    %v3070 = vadd.f32 %v3068, %v3069
    %v3071 = vsel %vm2652, %v2603, 0.0
    %v3072 = vadd.f32 %v3070, %v3071
    %v3073 = vsel %vm2652, %v2604, 0.0
    %v3074 = vadd.f32 %v3072, %v3073
    %v3075 = vsel %vm2652, %v2605, 0.0
    %v3076 = vadd.f32 %v3074, %v3075
    %v3077 = vsel %vm2652, %v2606, 0.0
    %v3078 = vadd.f32 %v3076, %v3077
    %v3079 = vsel %vm2652, %v2607, 0.0
    %v3080 = vadd.f32 %v3078, %v3079
    %v3081 = vsel %vm2652, %v2608, 0.0
    %v3082 = vadd.f32 %v3080, %v3081
    %v3083 = vsel %vm2652, %v2609, 0.0
    %v3084 = vadd.f32 %v3082, %v3083
    %v3085 = vsel %vm2652, %v2610, 0.0
    %v3086 = vadd.f32 %v3084, %v3085
    %v3087 = vsel %vm2652, %v2611, 0.0
    %v3088 = vadd.f32 %v3086, %v3087
    %v3089 = vsel %vm2652, %v2612, 0.0
    %v3090 = vadd.f32 %v3088, %v3089
    %v3091 = vsel %vm2652, %v2613, 0.0
    %v3092 = vadd.f32 %v3090, %v3091
    %v3093 = vsel %vm2652, %v2614, 0.0
    %v3094 = vadd.f32 %v3092, %v3093
    %v3095 = vsel %vm2652, %v2615, 0.0
    %v3096 = vadd.f32 %v3094, %v3095
    %v3097 = vsel %vm2652, %v2616, 0.0
    %v3098 = vadd.f32 %v3096, %v3097
    %v3099 = vsel %vm2652, %v2617, 0.0
    %v3100 = vadd.f32 %v3098, %v3099
    %v3101 = vsel %vm2652, %v2618, 0.0
    %v3102 = vadd.f32 %v3100, %v3101
    %v3103 = vsel %vm2652, %v2619, 0.0
    %v3104 = vadd.f32 %v3102, %v3103
    %v3105 = vsel %vm2652, %v2620, 0.0
    %v3106 = vadd.f32 %v3104, %v3105
    %v3107 = vsel %vm2652, %v2621, 0.0
    %v3108 = vadd.f32 %v3106, %v3107
    %v3109 = vsel %vm2652, %v2622, 0.0
    %v3110 = vadd.f32 %v3108, %v3109
    %v3111 = vsel %vm2652, %v2623, 0.0
    %v3112 = vadd.f32 %v3110, %v3111
    %v3113 = vsel %vm2652, %v2624, 0.0
    %v3114 = vadd.f32 %v3112, %v3113
    %v3115 = vsel %vm2652, %v2625, 0.0
    %v3116 = vadd.f32 %v3114, %v3115
    %v3117 = vsel %vm2652, %v2626, 0.0
    %v3118 = vadd.f32 %v3116, %v3117
    %v3119 = vsel %vm2652, %v2627, 0.0
    %v3120 = vadd.f32 %v3118, %v3119
    %v3121 = vsel %vm2652, %v2628, 0.0
    %v3122 = vadd.f32 %v3120, %v3121
    %v3123 = vsel %vm2652, %v2629, 0.0
    %v3124 = vadd.f32 %v3122, %v3123
    %v3125 = vsel %vm2652, %v2630, 0.0
    %v3126 = vadd.f32 %v3124, %v3125
    %v3127 = vsel %vm2652, %v2631, 0.0
    %v3128 = vadd.f32 %v3126, %v3127
    %v3129 = vsel %vm2652, %v2632, 0.0
    %v3130 = vadd.f32 %v3128, %v3129
    %v3131 = vsel %vm2652, %v2633, 0.0
    %v3132 = vadd.f32 %v3130, %v3131
    %v3133 = vsel %vm2652, %v2634, 0.0
    %v3134 = vadd.f32 %v3132, %v3133
    %v3135 = vsel %vm2652, %v2635, 0.0
    %v3136 = vadd.f32 %v3134, %v3135
    %v3137 = vsel %vm2652, %v2636, 0.0
    %v3138 = vadd.f32 %v3136, %v3137
    %v3139 = vsel %vm2652, %v2637, 0.0
    %v3140 = vadd.f32 %v3138, %v3139
    %v3141 = vsel %vm2652, %v2638, 0.0
    %v3142 = vadd.f32 %v3140, %v3141
    %v3143 = vsel %vm2652, %v2639, 0.0
    %v3144 = vadd.f32 %v3142, %v3143
    %v3145 = vsel %vm2652, %v2640, 0.0
    %v3146 = vadd.f32 %v3144, %v3145
    %v3147 = vsel %vm2652, %v2641, 0.0
    %v3148 = vadd.f32 %v3146, %v3147
    %v3149 = vsel %vm2652, %v2642, 0.0
    %v3150 = vadd.f32 %v3148, %v3149
    %v3151 = vsel %vm2652, %v2643, 0.0
    %v3152 = vadd.f32 %v3150, %v3151
    %v3153 = vsel %vm2652, %v2644, 0.0
    %v3154 = vadd.f32 %v3152, %v3153
    %v3155 = vsel %vm2652, %v2645, 0.0
    %v3156 = vadd.f32 %v3154, %v3155
    %v3157 = vsel %vm2652, %v2646, 0.0
    %v3158 = vadd.f32 %v3156, %v3157
    %v3159 = vsel %vm2652, %v2647, 0.0
    %v3160 = vadd.f32 %v3158, %v3159
    %v3161 = vsel %vm2652, %v2648, 0.0
    %v3162 = vadd.f32 %v3160, %v3161
    %v3163 = vsel %vm2652, %v2649, 0.0
    %v3164 = vadd.f32 %v3162, %v3163
    %v3165 = vsel %vm2652, %v2650, 0.0
    %v3166 = vadd.f32 %v3164, %v3165
    %v3167 = vsel %vm2652, %v2651, 0.0
    %v3168 = vadd.f32 %v3166, %v3167
    %v3169 = vrot.slane %v3168, 4
    %v3170 = vadd.f32 %v3168, %v3169
    %v3171 = vrot.slane %v3170, 2
    %v3172 = vadd.f32 %v3170, %v3171
    %v3173 = vrot.slane %v3172, 1
    %v3174 = vadd.f32 %v3172, %v3173
    %v3175 = vrcp.pop 1024.0
    %v3176 = vmul.f32 %v2913, %v3175
    %v3177 = vmul.f32 %v3174, %v3175
    %v3178 = vld [vmem:[%s4] sm:$0xff]
    %v3179 = vld [vmem:[%s4 + $0x8] sm:$0xff]
    %v3180 = vld [vmem:[%s5] sm:$0x1]
    %v3182 = vlaneseq
    %v3183 = vshrl.u32 %v3182, 7
    %v3184 = vsub.s32 0, %v3183
    %v3185 = vrot.slane %v3180, %v3184
    %vm3189 = vcmask 1041409
    %v3190 = vsel %vm3189, %v3177, %v3176
    %v3191 = vsel %vm2652, %v3190, 0
    %3193 = vmatprep.subr.mxu0 0.0
    %3194 = vmatpush1.msra.mxu0 %v3178
    %3195 = vmatprep.subr.mxu0 0.0
    %3196 = vmatpush1.msra.mxu0 %v3179
    %3197 = vmatprep.subr.mxu0 0.0
    %3198 = vmatpush1.msra.mxu0 0.0
    %3199 = vmatprep.subr.mxu0 0.0
    %3200 = vmatpush1.msra.mxu0 0.0
    %3201 = vmatprep.subr.mxu0 0.0
    %3202 = vmatpush1.msra.mxu0 0.0
    %3203 = vmatprep.subr.mxu0 0.0
    %3204 = vmatpush1.msra.mxu0 0.0
    %3205 = vmatprep.subr.mxu0 0.0
    %3206 = vmatpush1.msra.mxu0 0.0
    %3207 = vmatprep.subr.mxu0 0.0
    %3208 = vmatpush1.msra.mxu0 0.0
    %3209 = vmatprep.subr.mxu0 0.0
    %3210 = vmatpush1.msra.mxu0 0.0
    %3211 = vmatprep.subr.mxu0 0.0
    %3212 = vmatpush1.msra.mxu0 0.0
    %3213 = vmatprep.subr.mxu0 0.0
    %3214 = vmatpush1.msra.mxu0 0.0
    %3215 = vmatprep.subr.mxu0 0.0
    %3216 = vmatpush1.msra.mxu0 0.0
    %3217 = vmatprep.subr.mxu0 0.0
    %3218 = vmatpush1.msra.mxu0 0.0
    %3219 = vmatprep.subr.mxu0 0.0
    %3220 = vmatpush1.msra.mxu0 0.0
    %3221 = vmatprep.subr.mxu0 0.0
    %3222 = vmatpush1.msra.mxu0 0.0
    %3223 = vmatprep.subr.mxu0 0.0
    %3224 = vmatpush1.msra.mxu0 0.0
    %3225 = vmatprep.subr.mxu0 0.0
    %3226 = vmatpush1.msra.mxu0 0.0
    %3227 = vmatprep.subr.mxu0 0.0
    %3228 = vmatpush1.msra.mxu0 0.0
    %3229 = vmatprep.subr.mxu0 0.0
    %3230 = vmatpush1.msra.mxu0 0.0
    %3231 = vmatprep.subr.mxu0 0.0
    %3232 = vmatpush1.msra.mxu0 0.0
    %3233 = vmatprep.subr.mxu0 0.0
    %3234 = vmatpush1.msra.mxu0 0.0
    %3235 = vmatprep.subr.mxu0 0.0
    %3236 = vmatpush1.msra.mxu0 0.0
    %3237 = vmatprep.subr.mxu0 0.0
    %3238 = vmatpush1.msra.mxu0 0.0
    %3239 = vmatprep.subr.mxu0 0.0
    %3240 = vmatpush1.msra.mxu0 0.0
    %3241 = vmatprep.subr.mxu0 0.0
    %3242 = vmatpush1.msra.mxu0 0.0
    %3243 = vmatprep.subr.mxu0 0.0
    %3244 = vmatpush1.msra.mxu0 0.0
    %3245 = vmatprep.subr.mxu0 0.0
    %3246 = vmatpush1.msra.mxu0 0.0
    %3247 = vmatprep.subr.mxu0 0.0
    %3248 = vmatpush1.msra.mxu0 0.0
    %3249 = vmatprep.subr.mxu0 0.0
    %3250 = vmatpush1.msra.mxu0 0.0
    %3251 = vmatprep.subr.mxu0 0.0
    %3252 = vmatpush1.msra.mxu0 0.0
    %3253 = vmatprep.subr.mxu0 0.0
    %3254 = vmatpush1.msra.mxu0 0.0
    %3255 = vmatprep.subr.mxu0 0.0
    %3256 = vmatpush1.msra.mxu0 0.0
    %3257 = vmatprep.mubr.f32.mxu0 0.0
    %3258 = vmatmul.mubr.f32.gmra.mrb[0].mxu0 %v3191
    %v3259 = vpop.f32.mrb[0].mxu0
    %v3260 = vadd.f32 %v3185, %v3259
    %v3261 = vpop.f32.mrb[0].mxu0
    %3262 = vdwg.mxu0
    %s3263 = sld [smem:[#allocation2]]
    %v3264 = vld [vmem:[%s6] sm:$0x3]
    %v3265 = vstv %s3263
    %v3266 = vmul.f32 %v3265, %v3264
    %s3267 = ssub.f32 1.0, %s3263
    %v3268 = vstv %s3267
    %v3269 = vmul.f32 %v3268, %v3260
    %v3270 = vadd.f32 %v3266, %v3269
    %3271 = vst [vmem:[#allocation3] sm:$0x3] %v3270
    // Predicated region
    $region30: #{moe_forward.3} parent=1 // pred_check
      _
    $region31: #{moe_forward.3} parent=1 // pred_check_branch
      %3273 = sbr.rel (0) target = $region33
    $region32: #{moe_forward.3} parent=1 // pred_region
      %s3275 = ssub.s32 32, 32
      %3276 = vsyncadd [#allocation4], %s3275
      %s3278 = sshll.u32 [#allocation3], 4
      %s3279 = int_to_ptr.vmem [resolvable:$true] %s3278
      %3281 = dma.vmem_to_hbm [thread:$0]  %s3279, 32, %s7, [#allocation4]
    $region33: #{moe_forward.3} parent=1 // pred_fallthru
      _
    // Predicated region
    $region34: #{moe_forward.3} parent=1 // pred_check
      _
    $region35: #{moe_forward.3} parent=1 // pred_check_branch
      %3283 = sbr.rel (0) target = $region37
    $region36: #{moe_forward.3} parent=1 // pred_region
      %3284 = dma.done [#allocation4], 32
    $region37: #{moe_forward.3} parent=1 // pred_fallthru
      _
    %3285 = vsyncpa [#allocation4], 1

</llo_original>
